<compile_context>
chip_gen: v5e
topology: v5e:2x2
jax: 0.10.0
libtpu: 0.0.40
codegen_flags: <defaults>
</compile_context>

<pallas_src>
import functools

import jax
import jax.numpy as jnp
from jax.experimental import pallas as pl
from jax.experimental.pallas import tpu as pltpu


def _round_up(x, m):
    return (x + m - 1) // m * m


def _vmem_limit_bytes():
    # Leave headroom on v7x (64 MiB physical VMEM); up to 64 MiB on v5e/v6e.
    try:
        cap = pltpu.get_tpu_info().vmem_capacity_bytes
    except Exception:
        cap = 128 * 1024 * 1024
    return int(min(64 * 1024 * 1024, cap * 3 // 4))


_COMPILER_PARAMS = pltpu.CompilerParams(
    dimension_semantics=("parallel", "parallel", "arbitrary"),
    vmem_limit_bytes=_vmem_limit_bytes(),
)


# --------------------------------------------------------------------------
# Fused (matmul + BN scale/shift [+ residual] [+ ReLU]) Pallas kernels
# --------------------------------------------------------------------------

def _mm_bn_kernel(a_ref, b_ref, s_ref, t_ref, o_ref, acc_ref, *, relu):
    k = pl.program_id(2)

    @pl.when(k == 0)
    def _():
        acc_ref[...] = jnp.zeros_like(acc_ref)

    acc_ref[...] += jnp.dot(a_ref[...], b_ref[...],
                            preferred_element_type=jnp.float32)

    @pl.when(k == pl.num_programs(2) - 1)
    def _():
        y = acc_ref[...] * s_ref[...] + t_ref[...]
        if relu:
            y = jnp.maximum(y, 0.0)
        o_ref[...] = y.astype(o_ref.dtype)


def _mm_bn_res_kernel(a_ref, b_ref, s_ref, t_ref, r_ref, o_ref, acc_ref, *, relu):
    k = pl.program_id(2)

    @pl.when(k == 0)
    def _():
        acc_ref[...] = jnp.zeros_like(acc_ref)

    acc_ref[...] += jnp.dot(a_ref[...], b_ref[...],
                            preferred_element_type=jnp.float32)

    @pl.when(k == pl.num_programs(2) - 1)
    def _():
        y = acc_ref[...] * s_ref[...] + t_ref[...] + r_ref[...]
        if relu:
            y = jnp.maximum(y, 0.0)
        o_ref[...] = y.astype(o_ref.dtype)


def fused_matmul_bn(a, b, scale, shift, residual=None, relu=False,
                    out_dtype=jnp.float32):
    """relu?( (a @ b) * scale + shift (+ residual) ) with bf16 MXU, f32 accum.

    a: (M, K), b: (K, N), scale/shift: (N,), residual: (M, N) f32 or None.
    K and N are expected to already be multiples of 128 (padded-channel
    layout); padding here is a no-op fallback for the general case.
    """
    M, K = a.shape
    N = b.shape[1]

    Mp = _round_up(M, 128)
    Kp = _round_up(K, 128)
    Np = _round_up(N, 128)                 # lane-dense output stores
    tm = 256 if Mp % 256 == 0 else 128
    tk = 512 if Kp % 512 == 0 else (256 if Kp % 256 == 0 else 128)
    tn = 256 if Np % 256 == 0 else 128

    a_p = a.astype(jnp.bfloat16)
    if (Mp, Kp) != (M, K):
        a_p = jnp.pad(a_p, ((0, Mp - M), (0, Kp - K)))
    b_p = b.astype(jnp.bfloat16)
    if (Kp, Np) != (K, N):
        b_p = jnp.pad(b_p, ((0, Kp - K), (0, Np - N)))
    s_p = scale.astype(jnp.float32)
    t_p = shift.astype(jnp.float32)
    if Np != N:
        s_p = jnp.pad(s_p, (0, Np - N))
        t_p = jnp.pad(t_p, (0, Np - N))
    s_p = s_p.reshape(1, Np)
    t_p = t_p.reshape(1, Np)

    grid = (Mp // tm, Np // tn, Kp // tk)
    in_specs = [
        pl.BlockSpec((tm, tk), lambda i, j, k: (i, k)),
        pl.BlockSpec((tk, tn), lambda i, j, k: (k, j)),
        pl.BlockSpec((1, tn), lambda i, j, k: (0, j)),
        pl.BlockSpec((1, tn), lambda i, j, k: (0, j)),
    ]
    operands = [a_p, b_p, s_p, t_p]

    if residual is not None:
        r_p = residual.astype(jnp.float32)
        if (Mp, Np) != residual.shape:
            r_p = jnp.pad(r_p, ((0, Mp - residual.shape[0]),
                                (0, Np - residual.shape[1])))
        in_specs.append(pl.BlockSpec((tm, tn), lambda i, j, k: (i, j)))
        operands.append(r_p)
        kernel = functools.partial(_mm_bn_res_kernel, relu=relu)
    else:
        kernel = functools.partial(_mm_bn_kernel, relu=relu)

    out = pl.pallas_call(
        kernel,
        out_shape=jax.ShapeDtypeStruct((Mp, Np), out_dtype),
        grid=grid,
        in_specs=in_specs,
        out_specs=pl.BlockSpec((tm, tn), lambda i, j, k: (i, j)),
        scratch_shapes=[pltpu.VMEM((tm, tn), jnp.float32)],
        compiler_params=_COMPILER_PARAMS,
    )(*operands)
    if Mp != M:
        out = out[:M]
    # N stays padded: callers keep the lane-dense padded-channel layout.
    return out


# --------------------------------------------------------------------------
# Conv + BN (+ residual / ReLU) wrappers, padded-channel NHWC layout
# --------------------------------------------------------------------------

def _bn_scale_shift(bn, cout_p, eps=1e-5):
    scale = bn['gamma'] / jnp.sqrt(bn['var'] + eps)
    shift = bn['beta'] - bn['mean'] * scale
    c = scale.shape[0]
    if cout_p != c:
        scale = jnp.pad(scale, (0, cout_p - c))
        shift = jnp.pad(shift, (0, cout_p - c))   # padded channels stay 0
    return scale, shift


def _pad_w_1x1(w, cin_p, cout_p):
    # w: (Cout, Cin, 1, 1) PyTorch layout -> (Cin_p, Cout_p) matmul weight.
    cout, cin = w.shape[0], w.shape[1]
    wm = jnp.transpose(w.reshape(cout, cin))
    if (cin_p, cout_p) != (cin, cout):
        wm = jnp.pad(wm, ((0, cin_p - cin), (0, cout_p - cout)))
    return wm


def _pad_w_3x3(w, cin_p, cout_p):
    # w: (Cout, Cin, kh, kw) -> (kh*kw*Cin_p, Cout_p), tap-major rows matching
    # the im2col channel concatenation order.
    cout, cin, kh, kw = w.shape
    wt = jnp.transpose(w, (2, 3, 1, 0))            # (kh, kw, Cin, Cout)
    if (cin_p, cout_p) != (cin, cout):
        wt = jnp.pad(wt, ((0, 0), (0, 0), (0, cin_p - cin), (0, cout_p - cout)))
    return wt.reshape(kh * kw * cin_p, cout_p)


def conv1x1_bn_act(x, w, bn, stride=1, residual=None, relu=False,
                   out_dtype=jnp.float32):
    """x: (N, H, W, Cin_p) padded-channel NHWC; w: (Cout, Cin, 1, 1)."""
    if stride > 1:
        x = x[:, ::stride, ::stride, :]
    n, h, wd, cp = x.shape
    cout_p = _round_up(w.shape[0], 128)
    a = x.reshape(n * h * wd, cp)
    bm = _pad_w_1x1(w, cp, cout_p)
    scale, shift = _bn_scale_shift(bn, cout_p)
    r = None if residual is None else residual.reshape(n * h * wd, cout_p)
    y = fused_matmul_bn(a, bm, scale, shift, r, relu, out_dtype)
    return y.reshape(n, h, wd, cout_p)


def conv3x3_bn_act(x, w, bn, stride=1, dilation=1, padding=None, relu=False,
                   out_dtype=jnp.float32):
    """x: (N, H, W, Cin_p) padded-channel NHWC; w: (Cout, Cin, 3, 3)."""
    # TODO(synk): the 3x3 tap extraction (im2col) still runs as XLA slicing
    # before the Pallas matmul; a halo-block direct-conv kernel would remove
    # the kh*kw activation inflation entirely.
    n, h, wd, cp = x.shape
    cout, cin, kh, kw = w.shape
    cout_p = _round_up(cout, 128)
    if padding is None:
        padding = dilation
    xp = jnp.pad(x, ((0, 0), (padding, padding), (padding, padding), (0, 0)))
    ho = (h + 2 * padding - dilation * (kh - 1) - 1) // stride + 1
    wo = (wd + 2 * padding - dilation * (kw - 1) - 1) // stride + 1
    cols = []
    for i in range(kh):
        for j in range(kw):
            sl = xp[:, i * dilation:i * dilation + (ho - 1) * stride + 1:stride,
                       j * dilation:j * dilation + (wo - 1) * stride + 1:stride, :]
            cols.append(sl)
    a = jnp.concatenate(cols, axis=-1).reshape(n * ho * wo, kh * kw * cp)
    bm = _pad_w_3x3(w, cp, cout_p)
    scale, shift = _bn_scale_shift(bn, cout_p)
    y = fused_matmul_bn(a, bm, scale, shift, None, relu, out_dtype)
    return y.reshape(n, ho, wo, cout_p)


# --------------------------------------------------------------------------
# Bottleneck1 parameters and forward (expansion == 1)
# --------------------------------------------------------------------------

def _kaiming(key, shape, fan_in):
    return jax.random.normal(key, shape, jnp.float32) * jnp.sqrt(2.0 / fan_in)


def _bn_params(c):
    return {'gamma': jnp.ones((c,), jnp.float32),
            'beta': jnp.zeros((c,), jnp.float32),
            'mean': jnp.zeros((c,), jnp.float32),
            'var': jnp.ones((c,), jnp.float32)}


def make_bottleneck1_params(key, inplanes, planes, stride=1, dilation=1, multi_grid=1):
    k1, k2, k3, k4 = jax.random.split(key, 4)
    p = {
        'conv1': {'w': _kaiming(k1, (planes, inplanes, 1, 1), inplanes)},
        'bn1': _bn_params(planes),
        'conv2': {'w': _kaiming(k2, (planes, planes, 3, 3), planes * 9)},
        'bn2': _bn_params(planes),
        'conv3': {'w': _kaiming(k3, (planes, planes, 1, 1), planes)},   # expansion = 1
        'bn3': _bn_params(planes),
        'stride': stride,
        'dilation': dilation,
        'multi_grid': multi_grid,
        'downsample': None,
    }
    if stride != 1 or inplanes != planes:
        p['downsample'] = {'w': _kaiming(k4, (planes, inplanes, 1, 1), inplanes)}
        p['downsample_bn'] = _bn_params(planes)
    return p


def bottleneck1_forward(p, x_nchw):
    n, c, h, w = x_nchw.shape
    cp = _round_up(c, 128)
    x = jnp.transpose(x_nchw, (0, 2, 3, 1)).astype(jnp.float32)       # NHWC
    if cp != c:                       # pad channels once, lane-dense thereafter
        x = jnp.pad(x, ((0, 0), (0, 0), (0, 0), (0, cp - c)))

    # conv1 -> bn1 -> relu   (BN + ReLU fused in the matmul epilogue, bf16 out)
    out = conv1x1_bn_act(x, p['conv1']['w'], p['bn1'], relu=True,
                         out_dtype=jnp.bfloat16)

    # conv2 -> bn2 -> relu   (bf16 intermediate)
    d = p['dilation'] * p['multi_grid']
    out = conv3x3_bn_act(out, p['conv2']['w'], p['bn2'],
                         stride=p['stride'], dilation=d, padding=d, relu=True,
                         out_dtype=jnp.bfloat16)

    # residual branch (kept in f32 for the final add)
    if p['downsample'] is not None:
        residual = conv1x1_bn_act(x, p['downsample']['w'], p['downsample_bn'],
                                  stride=p['stride'], relu=False,
                                  out_dtype=jnp.float32)
    else:
        residual = x

    # conv3 -> bn3 -> (+ residual) -> relu, all fused in one kernel pass
    out = conv1x1_bn_act(out, p['conv3']['w'], p['bn3'],
                         residual=residual, relu=True, out_dtype=jnp.float32)

    planes = p['conv3']['w'].shape[0]
    out = out[..., :planes]                                            # drop channel pad
    return jnp.transpose(out, (0, 3, 1, 2))                            # NCHW


# --------------------------------------------------------------------------

if __name__ == "__main__":
    key = jax.random.PRNGKey(0)
    kp1, kp2, kx = jax.random.split(key, 3)

    # One block exercising the downsample + stride path, one identity block
    # exercising dilation with residual = x.
    params1 = make_bottleneck1_params(kp1, inplanes=32, planes=64, stride=2, dilation=1)
    params2 = make_bottleneck1_params(kp2, inplanes=64, planes=64, stride=1, dilation=2)

    x = jax.random.normal(kx, (2, 32, 16, 16), jnp.float32)

    fwd = jax.jit(lambda a: bottleneck1_forward(params2, bottleneck1_forward(params1, a)))
    out = jax.block_until_ready(fwd(x))

    assert out.shape == (2, 64, 8, 8), out.shape
    assert bool(jnp.all(jnp.isfinite(out)))
    print("KERNEL_OK")
</pallas_src>

<mosaic_0001>
module attributes {stable_mosaic.version = 11 : i64} {
  func.func @_mm_bn_kernel(%arg0: i32, %arg1: i32, %arg2: i32, %arg3: memref<128x128xbf16, #tpu.memory_space<vmem>>, %arg4: memref<128x128xbf16, #tpu.memory_space<vmem>>, %arg5: memref<1x128xf32, #tpu.memory_space<vmem>>, %arg6: memref<1x128xf32, #tpu.memory_space<vmem>>, %arg7: memref<128x128xf32, #tpu.memory_space<vmem>>, %arg8: memref<128x128xf32, #tpu.memory_space<vmem>>) attributes {dimension_semantics = [#tpu.dimension_semantics<parallel>, #tpu.dimension_semantics<parallel>, #tpu.dimension_semantics<arbitrary>], iteration_bounds = array<i64: 1, 1, 1>, scalar_prefetch = 0 : i64, scratch_operands = 1 : i64, tpu.core_type = #tpu.core_type<tc>, window_params = [{transform_indices = @transform_0, window_bounds = array<i64: 128, 128>}, {transform_indices = @transform_1, window_bounds = array<i64: 128, 128>}, {transform_indices = @transform_2, window_bounds = array<i64: 1, 128>}, {transform_indices = @transform_3, window_bounds = array<i64: 1, 128>}, {transform_indices = @transform_4, window_bounds = array<i64: 128, 128>}]} {
    %c0_i32 = arith.constant 0 : i32
    %0 = arith.cmpi eq, %arg2, %c0_i32 : i32
    %1 = arith.extui %0 : i1 to i32
    %c0_i32_0 = arith.constant 0 : i32
    %2 = arith.cmpi ne, %1, %c0_i32_0 : i32
    scf.if %2 {
      %cst_10 = arith.constant 0.000000e+00 : f32
      %12 = vector.broadcast %cst_10 : f32 to vector<128x128xf32>
      %c0_11 = arith.constant 0 : index
      %c0_12 = arith.constant 0 : index
      %13 = vector.load %arg8[%c0_11, %c0_12] : memref<128x128xf32, #tpu.memory_space<vmem>>, vector<128x128xf32>
      tpu.vector_store %arg8[%c0_11, %c0_12], %12 {strides = array<i32>} : memref<128x128xf32, #tpu.memory_space<vmem>>, vector<128x128xf32>,
    } else {
    }
    %c0 = arith.constant 0 : index
    %c0_1 = arith.constant 0 : index
    %3 = vector.load %arg8[%c0, %c0_1] : memref<128x128xf32, #tpu.memory_space<vmem>>, vector<128x128xf32>
    %c0_2 = arith.constant 0 : index
    %c0_3 = arith.constant 0 : index
    %4 = vector.load %arg3[%c0_2, %c0_3] : memref<128x128xbf16, #tpu.memory_space<vmem>>, vector<128x128xbf16>
    %c0_4 = arith.constant 0 : index
    %c0_5 = arith.constant 0 : index
    %5 = vector.load %arg4[%c0_4, %c0_5] : memref<128x128xbf16, #tpu.memory_space<vmem>>, vector<128x128xbf16>
    %cst = arith.constant dense<0.000000e+00> : vector<128x128xf32>
    %6 = tpu.matmul %4, %5, %cst {dimension_numbers = #tpu.dot_dimension_numbers<[1], [0], [0], [1], [0, 0, 1, 1], [], []>} : vector<128x128xbf16>, vector<128x128xbf16>, vector<128x128xf32> -> vector<128x128xf32>
    %7 = arith.addf %3, %6 : vector<128x128xf32>
    %c0_6 = arith.constant 0 : index
    %c0_7 = arith.constant 0 : index
    %8 = vector.load %arg8[%c0_6, %c0_7] : memref<128x128xf32, #tpu.memory_space<vmem>>, vector<128x128xf32>
    tpu.vector_store %arg8[%c0_6, %c0_7], %7 {strides = array<i32>} : memref<128x128xf32, #tpu.memory_space<vmem>>, vector<128x128xf32>,
    %c0_i32_8 = arith.constant 0 : i32
    %9 = arith.cmpi eq, %arg2, %c0_i32_8 : i32
    %10 = arith.extui %9 : i1 to i32
    %c0_i32_9 = arith.constant 0 : i32
    %11 = arith.cmpi ne, %10, %c0_i32_9 : i32
    scf.if %11 {
      %c0_10 = arith.constant 0 : index
      %c0_11 = arith.constant 0 : index
      %12 = vector.load %arg8[%c0_10, %c0_11] : memref<128x128xf32, #tpu.memory_space<vmem>>, vector<128x128xf32>
      %c0_12 = arith.constant 0 : index
      %c0_13 = arith.constant 0 : index
      %13 = vector.load %arg5[%c0_12, %c0_13] : memref<1x128xf32, #tpu.memory_space<vmem>>, vector<1x128xf32>
      %14 = vector.broadcast %13 : vector<1x128xf32> to vector<128x128xf32>
      %15 = arith.mulf %12, %14 : vector<128x128xf32>
      %c0_14 = arith.constant 0 : index
      %c0_15 = arith.constant 0 : index
      %16 = vector.load %arg6[%c0_14, %c0_15] : memref<1x128xf32, #tpu.memory_space<vmem>>, vector<1x128xf32>
      %17 = vector.broadcast %16 : vector<1x128xf32> to vector<128x128xf32>
      %18 = arith.addf %15, %17 : vector<128x128xf32>
      %c0_16 = arith.constant 0 : index
      %c0_17 = arith.constant 0 : index
      %19 = vector.load %arg7[%c0_16, %c0_17] : memref<128x128xf32, #tpu.memory_space<vmem>>, vector<128x128xf32>
      tpu.vector_store %arg7[%c0_16, %c0_17], %18 {strides = array<i32>} : memref<128x128xf32, #tpu.memory_space<vmem>>, vector<128x128xf32>,
    } else {
    }
    return
  }
  func.func @transform_0(%arg0: i32, %arg1: i32, %arg2: i32) -> (i32, i32) {
    %c0_i32 = arith.constant 0 : i32
    return %arg0, %arg2 : i32, i32
  }
  func.func @transform_1(%arg0: i32, %arg1: i32, %arg2: i32) -> (i32, i32) {
    %c0_i32 = arith.constant 0 : i32
    return %arg2, %arg1 : i32, i32
  }
  func.func @transform_2(%arg0: i32, %arg1: i32, %arg2: i32) -> (i32, i32) {
    %c0_i32 = arith.constant 0 : i32
    %c0_i32_0 = arith.constant 0 : i32
    return %c0_i32, %arg1 : i32, i32
  }
  func.func @transform_3(%arg0: i32, %arg1: i32, %arg2: i32) -> (i32, i32) {
    %c0_i32 = arith.constant 0 : i32
    %c0_i32_0 = arith.constant 0 : i32
    return %c0_i32, %arg1 : i32, i32
  }
  func.func @transform_4(%arg0: i32, %arg1: i32, %arg2: i32) -> (i32, i32) {
    %c0_i32 = arith.constant 0 : i32
    return %arg0, %arg1 : i32, i32
  }
}

module attributes {stable_mosaic.version = 11 : i64} {
  func.func @_mm_bn_kernel(%arg0: i32, %arg1: i32, %arg2: i32, %arg3: memref<256x128xbf16, #tpu.memory_space<vmem>>, %arg4: memref<128x128xbf16, #tpu.memory_space<vmem>>, %arg5: memref<1x128xf32, #tpu.memory_space<vmem>>, %arg6: memref<1x128xf32, #tpu.memory_space<vmem>>, %arg7: memref<256x128xbf16, #tpu.memory_space<vmem>>, %arg8: memref<256x128xf32, #tpu.memory_space<vmem>>) attributes {dimension_semantics = [#tpu.dimension_semantics<parallel>, #tpu.dimension_semantics<parallel>, #tpu.dimension_semantics<arbitrary>], iteration_bounds = array<i64: 2, 1, 1>, scalar_prefetch = 0 : i64, scratch_operands = 1 : i64, tpu.core_type = #tpu.core_type<tc>, window_params = [{transform_indices = @transform_0, window_bounds = array<i64: 256, 128>}, {transform_indices = @transform_1, window_bounds = array<i64: 128, 128>}, {transform_indices = @transform_2, window_bounds = array<i64: 1, 128>}, {transform_indices = @transform_3, window_bounds = array<i64: 1, 128>}, {transform_indices = @transform_4, window_bounds = array<i64: 256, 128>}]} {
    %c0_i32 = arith.constant 0 : i32
    %0 = arith.cmpi eq, %arg2, %c0_i32 : i32
    %1 = arith.extui %0 : i1 to i32
    %c0_i32_0 = arith.constant 0 : i32
    %2 = arith.cmpi ne, %1, %c0_i32_0 : i32
    scf.if %2 {
      %cst_10 = arith.constant 0.000000e+00 : f32
      %12 = vector.broadcast %cst_10 : f32 to vector<256x128xf32>
      %c0_11 = arith.constant 0 : index
      %c0_12 = arith.constant 0 : index
      %13 = vector.load %arg8[%c0_11, %c0_12] : memref<256x128xf32, #tpu.memory_space<vmem>>, vector<256x128xf32>
      tpu.vector_store %arg8[%c0_11, %c0_12], %12 {strides = array<i32>} : memref<256x128xf32, #tpu.memory_space<vmem>>, vector<256x128xf32>,
    } else {
    }
    %c0 = arith.constant 0 : index
    %c0_1 = arith.constant 0 : index
    %3 = vector.load %arg8[%c0, %c0_1] : memref<256x128xf32, #tpu.memory_space<vmem>>, vector<256x128xf32>
    %c0_2 = arith.constant 0 : index
    %c0_3 = arith.constant 0 : index
    %4 = vector.load %arg3[%c0_2, %c0_3] : memref<256x128xbf16, #tpu.memory_space<vmem>>, vector<256x128xbf16>
    %c0_4 = arith.constant 0 : index
    %c0_5 = arith.constant 0 : index
    %5 = vector.load %arg4[%c0_4, %c0_5] : memref<128x128xbf16, #tpu.memory_space<vmem>>, vector<128x128xbf16>
    %cst = arith.constant dense<0.000000e+00> : vector<256x128xf32>
    %6 = tpu.matmul %4, %5, %cst {dimension_numbers = #tpu.dot_dimension_numbers<[1], [0], [0], [1], [0, 0, 1, 1], [], []>} : vector<256x128xbf16>, vector<128x128xbf16>, vector<256x128xf32> -> vector<256x128xf32>
    %7 = arith.addf %3, %6 : vector<256x128xf32>
    %c0_6 = arith.constant 0 : index
    %c0_7 = arith.constant 0 : index
    %8 = vector.load %arg8[%c0_6, %c0_7] : memref<256x128xf32, #tpu.memory_space<vmem>>, vector<256x128xf32>
    tpu.vector_store %arg8[%c0_6, %c0_7], %7 {strides = array<i32>} : memref<256x128xf32, #tpu.memory_space<vmem>>, vector<256x128xf32>,
    %c0_i32_8 = arith.constant 0 : i32
    %9 = arith.cmpi eq, %arg2, %c0_i32_8 : i32
    %10 = arith.extui %9 : i1 to i32
    %c0_i32_9 = arith.constant 0 : i32
    %11 = arith.cmpi ne, %10, %c0_i32_9 : i32
    scf.if %11 {
      %c0_10 = arith.constant 0 : index
      %c0_11 = arith.constant 0 : index
      %12 = vector.load %arg8[%c0_10, %c0_11] : memref<256x128xf32, #tpu.memory_space<vmem>>, vector<256x128xf32>
      %c0_12 = arith.constant 0 : index
      %c0_13 = arith.constant 0 : index
      %13 = vector.load %arg5[%c0_12, %c0_13] : memref<1x128xf32, #tpu.memory_space<vmem>>, vector<1x128xf32>
      %14 = vector.broadcast %13 : vector<1x128xf32> to vector<256x128xf32>
      %15 = arith.mulf %12, %14 : vector<256x128xf32>
      %c0_14 = arith.constant 0 : index
      %c0_15 = arith.constant 0 : index
      %16 = vector.load %arg6[%c0_14, %c0_15] : memref<1x128xf32, #tpu.memory_space<vmem>>, vector<1x128xf32>
      %17 = vector.broadcast %16 : vector<1x128xf32> to vector<256x128xf32>
      %18 = arith.addf %15, %17 : vector<256x128xf32>
      %cst_16 = arith.constant 0.000000e+00 : f32
      %19 = vector.broadcast %cst_16 : f32 to vector<256x128xf32>
      %20 = arith.maximumf %18, %19 : vector<256x128xf32>
      %21 = arith.truncf %20 : vector<256x128xf32> to vector<256x128xbf16>
      %c0_17 = arith.constant 0 : index
      %c0_18 = arith.constant 0 : index
      %22 = vector.load %arg7[%c0_17, %c0_18] : memref<256x128xbf16, #tpu.memory_space<vmem>>, vector<256x128xbf16>
      tpu.vector_store %arg7[%c0_17, %c0_18], %21 {strides = array<i32>} : memref<256x128xbf16, #tpu.memory_space<vmem>>, vector<256x128xbf16>,
    } else {
    }
    return
  }
  func.func @transform_0(%arg0: i32, %arg1: i32, %arg2: i32) -> (i32, i32) {
    %c0_i32 = arith.constant 0 : i32
    return %arg0, %arg2 : i32, i32
  }
  func.func @transform_1(%arg0: i32, %arg1: i32, %arg2: i32) -> (i32, i32) {
    %c0_i32 = arith.constant 0 : i32
    return %arg2, %arg1 : i32, i32
  }
  func.func @transform_2(%arg0: i32, %arg1: i32, %arg2: i32) -> (i32, i32) {
    %c0_i32 = arith.constant 0 : i32
    %c0_i32_0 = arith.constant 0 : i32
    return %c0_i32, %arg1 : i32, i32
  }
  func.func @transform_3(%arg0: i32, %arg1: i32, %arg2: i32) -> (i32, i32) {
    %c0_i32 = arith.constant 0 : i32
    %c0_i32_0 = arith.constant 0 : i32
    return %c0_i32, %arg1 : i32, i32
  }
  func.func @transform_4(%arg0: i32, %arg1: i32, %arg2: i32) -> (i32, i32) {
    %c0_i32 = arith.constant 0 : i32
    return %arg0, %arg1 : i32, i32
  }
}

module attributes {stable_mosaic.version = 11 : i64} {
  func.func @_mm_bn_kernel(%arg0: i32, %arg1: i32, %arg2: i32, %arg3: memref<128x128xbf16, #tpu.memory_space<vmem>>, %arg4: memref<128x128xbf16, #tpu.memory_space<vmem>>, %arg5: memref<1x128xf32, #tpu.memory_space<vmem>>, %arg6: memref<1x128xf32, #tpu.memory_space<vmem>>, %arg7: memref<128x128xbf16, #tpu.memory_space<vmem>>, %arg8: memref<128x128xf32, #tpu.memory_space<vmem>>) attributes {dimension_semantics = [#tpu.dimension_semantics<parallel>, #tpu.dimension_semantics<parallel>, #tpu.dimension_semantics<arbitrary>], iteration_bounds = array<i64: 1, 1, 9>, scalar_prefetch = 0 : i64, scratch_operands = 1 : i64, tpu.core_type = #tpu.core_type<tc>, window_params = [{transform_indices = @transform_0, window_bounds = array<i64: 128, 128>}, {transform_indices = @transform_1, window_bounds = array<i64: 128, 128>}, {transform_indices = @transform_2, window_bounds = array<i64: 1, 128>}, {transform_indices = @transform_3, window_bounds = array<i64: 1, 128>}, {transform_indices = @transform_4, window_bounds = array<i64: 128, 128>}]} {
    %c0_i32 = arith.constant 0 : i32
    %0 = arith.cmpi eq, %arg2, %c0_i32 : i32
    %1 = arith.extui %0 : i1 to i32
    %c0_i32_0 = arith.constant 0 : i32
    %2 = arith.cmpi ne, %1, %c0_i32_0 : i32
    scf.if %2 {
      %cst_9 = arith.constant 0.000000e+00 : f32
      %12 = vector.broadcast %cst_9 : f32 to vector<128x128xf32>
      %c0_10 = arith.constant 0 : index
      %c0_11 = arith.constant 0 : index
      %13 = vector.load %arg8[%c0_10, %c0_11] : memref<128x128xf32, #tpu.memory_space<vmem>>, vector<128x128xf32>
      tpu.vector_store %arg8[%c0_10, %c0_11], %12 {strides = array<i32>} : memref<128x128xf32, #tpu.memory_space<vmem>>, vector<128x128xf32>,
    } else {
    }
    %c0 = arith.constant 0 : index
    %c0_1 = arith.constant 0 : index
    %3 = vector.load %arg8[%c0, %c0_1] : memref<128x128xf32, #tpu.memory_space<vmem>>, vector<128x128xf32>
    %c0_2 = arith.constant 0 : index
    %c0_3 = arith.constant 0 : index
    %4 = vector.load %arg3[%c0_2, %c0_3] : memref<128x128xbf16, #tpu.memory_space<vmem>>, vector<128x128xbf16>
    %c0_4 = arith.constant 0 : index
    %c0_5 = arith.constant 0 : index
    %5 = vector.load %arg4[%c0_4, %c0_5] : memref<128x128xbf16, #tpu.memory_space<vmem>>, vector<128x128xbf16>
    %cst = arith.constant dense<0.000000e+00> : vector<128x128xf32>
    %6 = tpu.matmul %4, %5, %cst {dimension_numbers = #tpu.dot_dimension_numbers<[1], [0], [0], [1], [0, 0, 1, 1], [], []>} : vector<128x128xbf16>, vector<128x128xbf16>, vector<128x128xf32> -> vector<128x128xf32>
    %7 = arith.addf %3, %6 : vector<128x128xf32>
    %c0_6 = arith.constant 0 : index
    %c0_7 = arith.constant 0 : index
    %8 = vector.load %arg8[%c0_6, %c0_7] : memref<128x128xf32, #tpu.memory_space<vmem>>, vector<128x128xf32>
    tpu.vector_store %arg8[%c0_6, %c0_7], %7 {strides = array<i32>} : memref<128x128xf32, #tpu.memory_space<vmem>>, vector<128x128xf32>,
    %c8_i32 = arith.constant 8 : i32
    %9 = arith.cmpi eq, %arg2, %c8_i32 : i32
    %10 = arith.extui %9 : i1 to i32
    %c0_i32_8 = arith.constant 0 : i32
    %11 = arith.cmpi ne, %10, %c0_i32_8 : i32
    scf.if %11 {
      %c0_9 = arith.constant 0 : index
      %c0_10 = arith.constant 0 : index
      %12 = vector.load %arg8[%c0_9, %c0_10] : memref<128x128xf32, #tpu.memory_space<vmem>>, vector<128x128xf32>
      %c0_11 = arith.constant 0 : index
      %c0_12 = arith.constant 0 : index
      %13 = vector.load %arg5[%c0_11, %c0_12] : memref<1x128xf32, #tpu.memory_space<vmem>>, vector<1x128xf32>
      %14 = vector.broadcast %13 : vector<1x128xf32> to vector<128x128xf32>
      %15 = arith.mulf %12, %14 : vector<128x128xf32>
      %c0_13 = arith.constant 0 : index
      %c0_14 = arith.constant 0 : index
      %16 = vector.load %arg6[%c0_13, %c0_14] : memref<1x128xf32, #tpu.memory_space<vmem>>, vector<1x128xf32>
      %17 = vector.broadcast %16 : vector<1x128xf32> to vector<128x128xf32>
      %18 = arith.addf %15, %17 : vector<128x128xf32>
      %cst_15 = arith.constant 0.000000e+00 : f32
      %19 = vector.broadcast %cst_15 : f32 to vector<128x128xf32>
      %20 = arith.maximumf %18, %19 : vector<128x128xf32>
      %21 = arith.truncf %20 : vector<128x128xf32> to vector<128x128xbf16>
      %c0_16 = arith.constant 0 : index
      %c0_17 = arith.constant 0 : index
      %22 = vector.load %arg7[%c0_16, %c0_17] : memref<128x128xbf16, #tpu.memory_space<vmem>>, vector<128x128xbf16>
      tpu.vector_store %arg7[%c0_16, %c0_17], %21 {strides = array<i32>} : memref<128x128xbf16, #tpu.memory_space<vmem>>, vector<128x128xbf16>,
    } else {
    }
    return
  }
  func.func @transform_0(%arg0: i32, %arg1: i32, %arg2: i32) -> (i32, i32) {
    %c0_i32 = arith.constant 0 : i32
    return %arg0, %arg2 : i32, i32
  }
  func.func @transform_1(%arg0: i32, %arg1: i32, %arg2: i32) -> (i32, i32) {
    %c0_i32 = arith.constant 0 : i32
    return %arg2, %arg1 : i32, i32
  }
  func.func @transform_2(%arg0: i32, %arg1: i32, %arg2: i32) -> (i32, i32) {
    %c0_i32 = arith.constant 0 : i32
    %c0_i32_0 = arith.constant 0 : i32
    return %c0_i32, %arg1 : i32, i32
  }
  func.func @transform_3(%arg0: i32, %arg1: i32, %arg2: i32) -> (i32, i32) {
    %c0_i32 = arith.constant 0 : i32
    %c0_i32_0 = arith.constant 0 : i32
    return %c0_i32, %arg1 : i32, i32
  }
  func.func @transform_4(%arg0: i32, %arg1: i32, %arg2: i32) -> (i32, i32) {
    %c0_i32 = arith.constant 0 : i32
    return %arg0, %arg1 : i32, i32
  }
}

module attributes {stable_mosaic.version = 11 : i64} {
  func.func @_mm_bn_kernel(%arg0: i32, %arg1: i32, %arg2: i32, %arg3: memref<128x128xbf16, #tpu.memory_space<vmem>>, %arg4: memref<128x128xbf16, #tpu.memory_space<vmem>>, %arg5: memref<1x128xf32, #tpu.memory_space<vmem>>, %arg6: memref<1x128xf32, #tpu.memory_space<vmem>>, %arg7: memref<128x128xbf16, #tpu.memory_space<vmem>>, %arg8: memref<128x128xf32, #tpu.memory_space<vmem>>) attributes {dimension_semantics = [#tpu.dimension_semantics<parallel>, #tpu.dimension_semantics<parallel>, #tpu.dimension_semantics<arbitrary>], iteration_bounds = array<i64: 1, 1, 1>, scalar_prefetch = 0 : i64, scratch_operands = 1 : i64, tpu.core_type = #tpu.core_type<tc>, window_params = [{transform_indices = @transform_0, window_bounds = array<i64: 128, 128>}, {transform_indices = @transform_1, window_bounds = array<i64: 128, 128>}, {transform_indices = @transform_2, window_bounds = array<i64: 1, 128>}, {transform_indices = @transform_3, window_bounds = array<i64: 1, 128>}, {transform_indices = @transform_4, window_bounds = array<i64: 128, 128>}]} {
    %c0_i32 = arith.constant 0 : i32
    %0 = arith.cmpi eq, %arg2, %c0_i32 : i32
    %1 = arith.extui %0 : i1 to i32
    %c0_i32_0 = arith.constant 0 : i32
    %2 = arith.cmpi ne, %1, %c0_i32_0 : i32
    scf.if %2 {
      %cst_10 = arith.constant 0.000000e+00 : f32
      %12 = vector.broadcast %cst_10 : f32 to vector<128x128xf32>
      %c0_11 = arith.constant 0 : index
      %c0_12 = arith.constant 0 : index
      %13 = vector.load %arg8[%c0_11, %c0_12] : memref<128x128xf32, #tpu.memory_space<vmem>>, vector<128x128xf32>
      tpu.vector_store %arg8[%c0_11, %c0_12], %12 {strides = array<i32>} : memref<128x128xf32, #tpu.memory_space<vmem>>, vector<128x128xf32>,
    } else {
    }
    %c0 = arith.constant 0 : index
    %c0_1 = arith.constant 0 : index
    %3 = vector.load %arg8[%c0, %c0_1] : memref<128x128xf32, #tpu.memory_space<vmem>>, vector<128x128xf32>
    %c0_2 = arith.constant 0 : index
    %c0_3 = arith.constant 0 : index
    %4 = vector.load %arg3[%c0_2, %c0_3] : memref<128x128xbf16, #tpu.memory_space<vmem>>, vector<128x128xbf16>
    %c0_4 = arith.constant 0 : index
    %c0_5 = arith.constant 0 : index
    %5 = vector.load %arg4[%c0_4, %c0_5] : memref<128x128xbf16, #tpu.memory_space<vmem>>, vector<128x128xbf16>
    %cst = arith.constant dense<0.000000e+00> : vector<128x128xf32>
    %6 = tpu.matmul %4, %5, %cst {dimension_numbers = #tpu.dot_dimension_numbers<[1], [0], [0], [1], [0, 0, 1, 1], [], []>} : vector<128x128xbf16>, vector<128x128xbf16>, vector<128x128xf32> -> vector<128x128xf32>
    %7 = arith.addf %3, %6 : vector<128x128xf32>
    %c0_6 = arith.constant 0 : index
    %c0_7 = arith.constant 0 : index
    %8 = vector.load %arg8[%c0_6, %c0_7] : memref<128x128xf32, #tpu.memory_space<vmem>>, vector<128x128xf32>
    tpu.vector_store %arg8[%c0_6, %c0_7], %7 {strides = array<i32>} : memref<128x128xf32, #tpu.memory_space<vmem>>, vector<128x128xf32>,
    %c0_i32_8 = arith.constant 0 : i32
    %9 = arith.cmpi eq, %arg2, %c0_i32_8 : i32
    %10 = arith.extui %9 : i1 to i32
    %c0_i32_9 = arith.constant 0 : i32
    %11 = arith.cmpi ne, %10, %c0_i32_9 : i32
    scf.if %11 {
      %c0_10 = arith.constant 0 : index
      %c0_11 = arith.constant 0 : index
      %12 = vector.load %arg8[%c0_10, %c0_11] : memref<128x128xf32, #tpu.memory_space<vmem>>, vector<128x128xf32>
      %c0_12 = arith.constant 0 : index
      %c0_13 = arith.constant 0 : index
      %13 = vector.load %arg5[%c0_12, %c0_13] : memref<1x128xf32, #tpu.memory_space<vmem>>, vector<1x128xf32>
      %14 = vector.broadcast %13 : vector<1x128xf32> to vector<128x128xf32>
      %15 = arith.mulf %12, %14 : vector<128x128xf32>
      %c0_14 = arith.constant 0 : index
      %c0_15 = arith.constant 0 : index
      %16 = vector.load %arg6[%c0_14, %c0_15] : memref<1x128xf32, #tpu.memory_space<vmem>>, vector<1x128xf32>
      %17 = vector.broadcast %16 : vector<1x128xf32> to vector<128x128xf32>
      %18 = arith.addf %15, %17 : vector<128x128xf32>
      %cst_16 = arith.constant 0.000000e+00 : f32
      %19 = vector.broadcast %cst_16 : f32 to vector<128x128xf32>
      %20 = arith.maximumf %18, %19 : vector<128x128xf32>
      %21 = arith.truncf %20 : vector<128x128xf32> to vector<128x128xbf16>
      %c0_17 = arith.constant 0 : index
      %c0_18 = arith.constant 0 : index
      %22 = vector.load %arg7[%c0_17, %c0_18] : memref<128x128xbf16, #tpu.memory_space<vmem>>, vector<128x128xbf16>
      tpu.vector_store %arg7[%c0_17, %c0_18], %21 {strides = array<i32>} : memref<128x128xbf16, #tpu.memory_space<vmem>>, vector<128x128xbf16>,
    } else {
    }
    return
  }
  func.func @transform_0(%arg0: i32, %arg1: i32, %arg2: i32) -> (i32, i32) {
    %c0_i32 = arith.constant 0 : i32
    return %arg0, %arg2 : i32, i32
  }
  func.func @transform_1(%arg0: i32, %arg1: i32, %arg2: i32) -> (i32, i32) {
    %c0_i32 = arith.constant 0 : i32
    return %arg2, %arg1 : i32, i32
  }
  func.func @transform_2(%arg0: i32, %arg1: i32, %arg2: i32) -> (i32, i32) {
    %c0_i32 = arith.constant 0 : i32
    %c0_i32_0 = arith.constant 0 : i32
    return %c0_i32, %arg1 : i32, i32
  }
  func.func @transform_3(%arg0: i32, %arg1: i32, %arg2: i32) -> (i32, i32) {
    %c0_i32 = arith.constant 0 : i32
    %c0_i32_0 = arith.constant 0 : i32
    return %c0_i32, %arg1 : i32, i32
  }
  func.func @transform_4(%arg0: i32, %arg1: i32, %arg2: i32) -> (i32, i32) {
    %c0_i32 = arith.constant 0 : i32
    return %arg0, %arg1 : i32, i32
  }
}

module attributes {stable_mosaic.version = 11 : i64} {
  func.func @_mm_bn_res_kernel(%arg0: i32, %arg1: i32, %arg2: i32, %arg3: memref<128x128xbf16, #tpu.memory_space<vmem>>, %arg4: memref<128x128xbf16, #tpu.memory_space<vmem>>, %arg5: memref<1x128xf32, #tpu.memory_space<vmem>>, %arg6: memref<1x128xf32, #tpu.memory_space<vmem>>, %arg7: memref<128x128xf32, #tpu.memory_space<vmem>>, %arg8: memref<128x128xf32, #tpu.memory_space<vmem>>, %arg9: memref<128x128xf32, #tpu.memory_space<vmem>>) attributes {dimension_semantics = [#tpu.dimension_semantics<parallel>, #tpu.dimension_semantics<parallel>, #tpu.dimension_semantics<arbitrary>], iteration_bounds = array<i64: 1, 1, 1>, scalar_prefetch = 0 : i64, scratch_operands = 1 : i64, tpu.core_type = #tpu.core_type<tc>, window_params = [{transform_indices = @transform_0, window_bounds = array<i64: 128, 128>}, {transform_indices = @transform_1, window_bounds = array<i64: 128, 128>}, {transform_indices = @transform_2, window_bounds = array<i64: 1, 128>}, {transform_indices = @transform_3, window_bounds = array<i64: 1, 128>}, {transform_indices = @transform_4, window_bounds = array<i64: 128, 128>}, {transform_indices = @transform_5, window_bounds = array<i64: 128, 128>}]} {
    %c0_i32 = arith.constant 0 : i32
    %0 = arith.cmpi eq, %arg2, %c0_i32 : i32
    %1 = arith.extui %0 : i1 to i32
    %c0_i32_0 = arith.constant 0 : i32
    %2 = arith.cmpi ne, %1, %c0_i32_0 : i32
    scf.if %2 {
      %cst_10 = arith.constant 0.000000e+00 : f32
      %12 = vector.broadcast %cst_10 : f32 to vector<128x128xf32>
      %c0_11 = arith.constant 0 : index
      %c0_12 = arith.constant 0 : index
      %13 = vector.load %arg9[%c0_11, %c0_12] : memref<128x128xf32, #tpu.memory_space<vmem>>, vector<128x128xf32>
      tpu.vector_store %arg9[%c0_11, %c0_12], %12 {strides = array<i32>} : memref<128x128xf32, #tpu.memory_space<vmem>>, vector<128x128xf32>,
    } else {
    }
    %c0 = arith.constant 0 : index
    %c0_1 = arith.constant 0 : index
    %3 = vector.load %arg9[%c0, %c0_1] : memref<128x128xf32, #tpu.memory_space<vmem>>, vector<128x128xf32>
    %c0_2 = arith.constant 0 : index
    %c0_3 = arith.constant 0 : index
    %4 = vector.load %arg3[%c0_2, %c0_3] : memref<128x128xbf16, #tpu.memory_space<vmem>>, vector<128x128xbf16>
    %c0_4 = arith.constant 0 : index
    %c0_5 = arith.constant 0 : index
    %5 = vector.load %arg4[%c0_4, %c0_5] : memref<128x128xbf16, #tpu.memory_space<vmem>>, vector<128x128xbf16>
    %cst = arith.constant dense<0.000000e+00> : vector<128x128xf32>
    %6 = tpu.matmul %4, %5, %cst {dimension_numbers = #tpu.dot_dimension_numbers<[1], [0], [0], [1], [0, 0, 1, 1], [], []>} : vector<128x128xbf16>, vector<128x128xbf16>, vector<128x128xf32> -> vector<128x128xf32>
    %7 = arith.addf %3, %6 : vector<128x128xf32>
    %c0_6 = arith.constant 0 : index
    %c0_7 = arith.constant 0 : index
    %8 = vector.load %arg9[%c0_6, %c0_7] : memref<128x128xf32, #tpu.memory_space<vmem>>, vector<128x128xf32>
    tpu.vector_store %arg9[%c0_6, %c0_7], %7 {strides = array<i32>} : memref<128x128xf32, #tpu.memory_space<vmem>>, vector<128x128xf32>,
    %c0_i32_8 = arith.constant 0 : i32
    %9 = arith.cmpi eq, %arg2, %c0_i32_8 : i32
    %10 = arith.extui %9 : i1 to i32
    %c0_i32_9 = arith.constant 0 : i32
    %11 = arith.cmpi ne, %10, %c0_i32_9 : i32
    scf.if %11 {
      %c0_10 = arith.constant 0 : index
      %c0_11 = arith.constant 0 : index
      %12 = vector.load %arg9[%c0_10, %c0_11] : memref<128x128xf32, #tpu.memory_space<vmem>>, vector<128x128xf32>
      %c0_12 = arith.constant 0 : index
      %c0_13 = arith.constant 0 : index
      %13 = vector.load %arg5[%c0_12, %c0_13] : memref<1x128xf32, #tpu.memory_space<vmem>>, vector<1x128xf32>
      %14 = vector.broadcast %13 : vector<1x128xf32> to vector<128x128xf32>
      %15 = arith.mulf %12, %14 : vector<128x128xf32>
      %c0_14 = arith.constant 0 : index
      %c0_15 = arith.constant 0 : index
      %16 = vector.load %arg6[%c0_14, %c0_15] : memref<1x128xf32, #tpu.memory_space<vmem>>, vector<1x128xf32>
      %17 = vector.broadcast %16 : vector<1x128xf32> to vector<128x128xf32>
      %18 = arith.addf %15, %17 : vector<128x128xf32>
      %c0_16 = arith.constant 0 : index
      %c0_17 = arith.constant 0 : index
      %19 = vector.load %arg7[%c0_16, %c0_17] : memref<128x128xf32, #tpu.memory_space<vmem>>, vector<128x128xf32>
      %20 = arith.addf %18, %19 : vector<128x128xf32>
      %cst_18 = arith.constant 0.000000e+00 : f32
      %21 = vector.broadcast %cst_18 : f32 to vector<128x128xf32>
      %22 = arith.maximumf %20, %21 : vector<128x128xf32>
      %c0_19 = arith.constant 0 : index
      %c0_20 = arith.constant 0 : index
      %23 = vector.load %arg8[%c0_19, %c0_20] : memref<128x128xf32, #tpu.memory_space<vmem>>, vector<128x128xf32>
      tpu.vector_store %arg8[%c0_19, %c0_20], %22 {strides = array<i32>} : memref<128x128xf32, #tpu.memory_space<vmem>>, vector<128x128xf32>,
    } else {
    }
    return
  }
  func.func @transform_0(%arg0: i32, %arg1: i32, %arg2: i32) -> (i32, i32) {
    %c0_i32 = arith.constant 0 : i32
    return %arg0, %arg2 : i32, i32
  }
  func.func @transform_1(%arg0: i32, %arg1: i32, %arg2: i32) -> (i32, i32) {
    %c0_i32 = arith.constant 0 : i32
    return %arg2, %arg1 : i32, i32
  }
  func.func @transform_2(%arg0: i32, %arg1: i32, %arg2: i32) -> (i32, i32) {
    %c0_i32 = arith.constant 0 : i32
    %c0_i32_0 = arith.constant 0 : i32
    return %c0_i32, %arg1 : i32, i32
  }
  func.func @transform_3(%arg0: i32, %arg1: i32, %arg2: i32) -> (i32, i32) {
    %c0_i32 = arith.constant 0 : i32
    %c0_i32_0 = arith.constant 0 : i32
    return %c0_i32, %arg1 : i32, i32
  }
  func.func @transform_4(%arg0: i32, %arg1: i32, %arg2: i32) -> (i32, i32) {
    %c0_i32 = arith.constant 0 : i32
    return %arg0, %arg1 : i32, i32
  }
  func.func @transform_5(%arg0: i32, %arg1: i32, %arg2: i32) -> (i32, i32) {
    %c0_i32 = arith.constant 0 : i32
    return %arg0, %arg1 : i32, i32
  }
}

</mosaic_0001>

<llo_original>
// kernel: _lambda_.9
$region0: #{_lambda_.9}
  #allocation0 [shape = 'u32[]', space=smem, size = 0x4, offset = 0x4, fixed_abs, tag = 'smem constant byte address 0x4 - core index']
  #allocation1 [shape = 'u32[72,128]{1,0:T(1,128)}', space=vmem, size = 0x9000, scoped, tag = 'internal scratch']
  #allocation2 [shape = 'f32[128,128]{1,0:T(8,128)}', space=vmem, size = 0x10000, scoped, tag = 'scratch operand']
  %s0 = inlined_call_operand.vmem [shape: bf16[128,128], index: 0, kind: input, shape index: {}]
  %s1 = inlined_call_operand.vmem [shape: bf16[128,128], index: 1, kind: input, shape index: {}]
  %s2 = inlined_call_operand.vmem [shape: f32[1,128], index: 2, kind: input, shape index: {}]
  %s3 = inlined_call_operand.vmem [shape: f32[1,128], index: 3, kind: input, shape index: {}]
  %s4 = inlined_call_operand.vmem [shape: f32[128,128], index: 4, kind: output, shape index: {}]
  %s5 = sld [smem:[#allocation0]]
  $region34: #{_lambda_.9} parent=0
    _
  %s7 = ssub.s32 1, %s5
  %s8 = scalar_select 0, %s7, %s5
  // Predicated region
  $region2: #{_lambda_.9} parent=0 // pred_check
    _
  $region3: #{_lambda_.9} parent=0 // pred_check_branch
    %10 = sbr.rel (0) target = $region5
  $region4: #{_lambda_.9} parent=0 // pred_region
    _
  $region5: #{_lambda_.9} parent=0 // pred_fallthru
    _
  // Predicated region
  $region6: #{_lambda_.9} parent=0 // pred_check
    _
  $region7: #{_lambda_.9} parent=0 // pred_check_branch
    %12 = sbr.rel (0) target = $region9
  $region8: #{_lambda_.9} parent=0 // pred_region
    _
  $region9: #{_lambda_.9} parent=0 // pred_fallthru
    _
  // Predicated region
  $region10: #{_lambda_.9} parent=0 // pred_check
    _
  $region11: #{_lambda_.9} parent=0 // pred_check_branch
    %14 = sbr.rel (0) target = $region13
  $region12: #{_lambda_.9} parent=0 // pred_region
    _
  $region13: #{_lambda_.9} parent=0 // pred_fallthru
    _
  // Predicated region
  $region14: #{_lambda_.9} parent=0 // pred_check
    _
  $region15: #{_lambda_.9} parent=0 // pred_check_branch
    %16 = sbr.rel (0) target = $region17
  $region16: #{_lambda_.9} parent=0 // pred_region
    _
  $region17: #{_lambda_.9} parent=0 // pred_fallthru
    _
  %p17 = scmp.eq.s32.totalorder 0, 0
  // Predicated region
  $region18: #{_lambda_.9} parent=0 // pred_check
    %p18 = pneg %p17
  $region19: #{_lambda_.9} parent=0 // pred_check_branch
    %20 = sbr.rel (%p18) target = $region21
  $region20: #{_lambda_.9} parent=0 // pred_region
    %21 = vst [vmem:[#allocation2] sm:$0xff] 0.0
    %22 = vst [vmem:[#allocation2 + $0x8] sm:$0xff] 0.0
    %23 = vst [vmem:[#allocation2 + $0x10] sm:$0xff] 0.0
    %24 = vst [vmem:[#allocation2 + $0x18] sm:$0xff] 0.0
    %25 = vst [vmem:[#allocation2 + $0x20] sm:$0xff] 0.0
    %26 = vst [vmem:[#allocation2 + $0x28] sm:$0xff] 0.0
    %27 = vst [vmem:[#allocation2 + $0x30] sm:$0xff] 0.0
    %28 = vst [vmem:[#allocation2 + $0x38] sm:$0xff] 0.0
    %29 = vst [vmem:[#allocation2 + $0x40] sm:$0xff] 0.0
    %30 = vst [vmem:[#allocation2 + $0x48] sm:$0xff] 0.0
    %31 = vst [vmem:[#allocation2 + $0x50] sm:$0xff] 0.0
    %32 = vst [vmem:[#allocation2 + $0x58] sm:$0xff] 0.0
    %33 = vst [vmem:[#allocation2 + $0x60] sm:$0xff] 0.0
    %34 = vst [vmem:[#allocation2 + $0x68] sm:$0xff] 0.0
    %35 = vst [vmem:[#allocation2 + $0x70] sm:$0xff] 0.0
    %36 = vst [vmem:[#allocation2 + $0x78] sm:$0xff] 0.0
  $region21: #{_lambda_.9} parent=0 // pred_fallthru
    _
  %v37 = vld [vmem:[#allocation2] sm:$0xff]
  %v38 = vld [vmem:[#allocation2 + $0x8] sm:$0xff]
  %v39 = vld [vmem:[#allocation2 + $0x10] sm:$0xff]
  %v40 = vld [vmem:[#allocation2 + $0x18] sm:$0xff]
  %v41 = vld [vmem:[#allocation2 + $0x20] sm:$0xff]
  %v42 = vld [vmem:[#allocation2 + $0x28] sm:$0xff]
  %v43 = vld [vmem:[#allocation2 + $0x30] sm:$0xff]
  %v44 = vld [vmem:[#allocation2 + $0x38] sm:$0xff]
  %v45 = vld [vmem:[#allocation2 + $0x40] sm:$0xff]
  %v46 = vld [vmem:[#allocation2 + $0x48] sm:$0xff]
  %v47 = vld [vmem:[#allocation2 + $0x50] sm:$0xff]
  %v48 = vld [vmem:[#allocation2 + $0x58] sm:$0xff]
  %v49 = vld [vmem:[#allocation2 + $0x60] sm:$0xff]
  %v50 = vld [vmem:[#allocation2 + $0x68] sm:$0xff]
  %v51 = vld [vmem:[#allocation2 + $0x70] sm:$0xff]
  %v52 = vld [vmem:[#allocation2 + $0x78] sm:$0xff]
  %v53 = vld [vmem:[%s0] sm:$0xf]
  %v54 = vld [vmem:[%s0 + $0x4] sm:$0xf]
  %v55 = vld [vmem:[%s0 + $0x8] sm:$0xf]
  %v56 = vld [vmem:[%s0 + $0xc] sm:$0xf]
  %v57 = vld [vmem:[%s0 + $0x10] sm:$0xf]
  %v58 = vld [vmem:[%s0 + $0x14] sm:$0xf]
  %v59 = vld [vmem:[%s0 + $0x18] sm:$0xf]
  %v60 = vld [vmem:[%s0 + $0x1c] sm:$0xf]
  %v61 = vld [vmem:[%s0 + $0x20] sm:$0xf]
  %v62 = vld [vmem:[%s0 + $0x24] sm:$0xf]
  %v63 = vld [vmem:[%s0 + $0x28] sm:$0xf]
  %v64 = vld [vmem:[%s0 + $0x2c] sm:$0xf]
  %v65 = vld [vmem:[%s0 + $0x30] sm:$0xf]
  %v66 = vld [vmem:[%s0 + $0x34] sm:$0xf]
  %v67 = vld [vmem:[%s0 + $0x38] sm:$0xf]
  %v68 = vld [vmem:[%s0 + $0x3c] sm:$0xf]
  %v69 = vld [vmem:[%s1] sm:$0xf]
  %v70 = vld [vmem:[%s1 + $0x4] sm:$0xf]
  %v71 = vld [vmem:[%s1 + $0x8] sm:$0xf]
  %v72 = vld [vmem:[%s1 + $0xc] sm:$0xf]
  %v73 = vld [vmem:[%s1 + $0x10] sm:$0xf]
  %v74 = vld [vmem:[%s1 + $0x14] sm:$0xf]
  %v75 = vld [vmem:[%s1 + $0x18] sm:$0xf]
  %v76 = vld [vmem:[%s1 + $0x1c] sm:$0xf]
  %v77 = vld [vmem:[%s1 + $0x20] sm:$0xf]
  %v78 = vld [vmem:[%s1 + $0x24] sm:$0xf]
  %v79 = vld [vmem:[%s1 + $0x28] sm:$0xf]
  %v80 = vld [vmem:[%s1 + $0x2c] sm:$0xf]
  %v81 = vld [vmem:[%s1 + $0x30] sm:$0xf]
  %v82 = vld [vmem:[%s1 + $0x34] sm:$0xf]
  %v83 = vld [vmem:[%s1 + $0x38] sm:$0xf]
  %v84 = vld [vmem:[%s1 + $0x3c] sm:$0xf]
  %v101 = vunpack.c.l.b16 %v53
  %v102 = vunpack.c.l.b16 %v54
  %v103 = vunpack.c.l.b16 %v55
  %v104 = vunpack.c.l.b16 %v56
  %v105 = vunpack.c.l.b16 %v57
  %v106 = vunpack.c.l.b16 %v58
  %v107 = vunpack.c.l.b16 %v59
  %v108 = vunpack.c.l.b16 %v60
  %v109 = vunpack.c.l.b16 %v61
  %v110 = vunpack.c.l.b16 %v62
  %v111 = vunpack.c.l.b16 %v63
  %v112 = vunpack.c.l.b16 %v64
  %v113 = vunpack.c.l.b16 %v65
  %v114 = vunpack.c.l.b16 %v66
  %v115 = vunpack.c.l.b16 %v67
  %v116 = vunpack.c.l.b16 %v68
  %v117 = vpack.c.b16 %v102, %v101
  %v118 = vpack.c.b16 %v104, %v103
  %v119 = vpack.c.b16 %v106, %v105
  %v120 = vpack.c.b16 %v108, %v107
  %v121 = vpack.c.b16 %v110, %v109
  %v122 = vpack.c.b16 %v112, %v111
  %v123 = vpack.c.b16 %v114, %v113
  %v124 = vpack.c.b16 %v116, %v115
  %v149 = vunpack.c.l.b16 %v69
  %v150 = vunpack.c.l.b16 %v70
  %v151 = vunpack.c.l.b16 %v71
  %v152 = vunpack.c.l.b16 %v72
  %v153 = vunpack.c.l.b16 %v73
  %v154 = vunpack.c.l.b16 %v74
  %v155 = vunpack.c.l.b16 %v75
  %v156 = vunpack.c.l.b16 %v76
  %v157 = vunpack.c.l.b16 %v77
  %v158 = vunpack.c.l.b16 %v78
  %v159 = vunpack.c.l.b16 %v79
  %v160 = vunpack.c.l.b16 %v80
  %v161 = vunpack.c.l.b16 %v81
  %v162 = vunpack.c.l.b16 %v82
  %v163 = vunpack.c.l.b16 %v83
  %v164 = vunpack.c.l.b16 %v84
  %v165 = vpack.c.b16 %v150, %v149
  %v166 = vpack.c.b16 %v152, %v151
  %v167 = vpack.c.b16 %v154, %v153
  %v168 = vpack.c.b16 %v156, %v155
  %v169 = vpack.c.b16 %v158, %v157
  %v170 = vpack.c.b16 %v160, %v159
  %v171 = vpack.c.b16 %v162, %v161
  %v172 = vpack.c.b16 %v164, %v163
  %181 = vmatpush.bf16.msra.mxu0 %v172
  %182 = vmatpush.bf16.msra.mxu0 %v171
  %183 = vmatpush.bf16.msra.mxu0 %v170
  %184 = vmatpush.bf16.msra.mxu0 %v169
  %185 = vmatpush.bf16.msra.mxu0 %v168
  %186 = vmatpush.bf16.msra.mxu0 %v167
  %187 = vmatpush.bf16.msra.mxu0 %v166
  %188 = vmatpush.bf16.msra.mxu0 %v165
  %189 = vmatmul.bf16.gmra.mxu0 %v117
  %v190 = vpop.f32.mrf.mxu0
  %v191 = vadd.f32 0.0, %v190
  %v192 = vpop.f32.mrf.mxu0
  %v193 = vadd.f32 0.0, %v192
  %194 = vmatmul.bf16.gmra.mxu0 %v118
  %v195 = vpop.f32.mrf.mxu0
  %v196 = vadd.f32 0.0, %v195
  %v197 = vpop.f32.mrf.mxu0
  %v198 = vadd.f32 0.0, %v197
  %199 = vmatmul.bf16.gmra.mxu0 %v119
  %v200 = vpop.f32.mrf.mxu0
  %v201 = vadd.f32 0.0, %v200
  %v202 = vpop.f32.mrf.mxu0
  %v203 = vadd.f32 0.0, %v202
  %204 = vmatmul.bf16.gmra.mxu0 %v120
  %v205 = vpop.f32.mrf.mxu0
  %v206 = vadd.f32 0.0, %v205
  %v207 = vpop.f32.mrf.mxu0
  %v208 = vadd.f32 0.0, %v207
  %209 = vmatmul.bf16.gmra.mxu0 %v121
  %v210 = vpop.f32.mrf.mxu0
  %v211 = vadd.f32 0.0, %v210
  %v212 = vpop.f32.mrf.mxu0
  %v213 = vadd.f32 0.0, %v212
  %214 = vmatmul.bf16.gmra.mxu0 %v122
  %v215 = vpop.f32.mrf.mxu0
  %v216 = vadd.f32 0.0, %v215
  %v217 = vpop.f32.mrf.mxu0
  %v218 = vadd.f32 0.0, %v217
  %219 = vmatmul.bf16.gmra.mxu0 %v123
  %v220 = vpop.f32.mrf.mxu0
  %v221 = vadd.f32 0.0, %v220
  %v222 = vpop.f32.mrf.mxu0
  %v223 = vadd.f32 0.0, %v222
  %224 = vmatmul.bf16.gmra.mxu0 %v124
  %v225 = vpop.f32.mrf.mxu0
  %v226 = vadd.f32 0.0, %v225
  %v227 = vpop.f32.mrf.mxu0
  %v228 = vadd.f32 0.0, %v227
  %229 = vdwg.mxu0
  %v230 = vadd.f32 %v37, %v191
  %v231 = vadd.f32 %v38, %v193
  %v232 = vadd.f32 %v39, %v196
  %v233 = vadd.f32 %v40, %v198
  %v234 = vadd.f32 %v41, %v201
  %v235 = vadd.f32 %v42, %v203
  %v236 = vadd.f32 %v43, %v206
  %v237 = vadd.f32 %v44, %v208
  %v238 = vadd.f32 %v45, %v211
  %v239 = vadd.f32 %v46, %v213
  %v240 = vadd.f32 %v47, %v216
  %v241 = vadd.f32 %v48, %v218
  %v242 = vadd.f32 %v49, %v221
  %v243 = vadd.f32 %v50, %v223
  %v244 = vadd.f32 %v51, %v226
  %v245 = vadd.f32 %v52, %v228
  %246 = vst [vmem:[#allocation2] sm:$0xff] %v230
  %247 = vst [vmem:[#allocation2 + $0x8] sm:$0xff] %v231
  %248 = vst [vmem:[#allocation2 + $0x10] sm:$0xff] %v232
  %249 = vst [vmem:[#allocation2 + $0x18] sm:$0xff] %v233
  %250 = vst [vmem:[#allocation2 + $0x20] sm:$0xff] %v234
  %251 = vst [vmem:[#allocation2 + $0x28] sm:$0xff] %v235
  %252 = vst [vmem:[#allocation2 + $0x30] sm:$0xff] %v236
  %253 = vst [vmem:[#allocation2 + $0x38] sm:$0xff] %v237
  %254 = vst [vmem:[#allocation2 + $0x40] sm:$0xff] %v238
  %255 = vst [vmem:[#allocation2 + $0x48] sm:$0xff] %v239
  %256 = vst [vmem:[#allocation2 + $0x50] sm:$0xff] %v240
  %257 = vst [vmem:[#allocation2 + $0x58] sm:$0xff] %v241
  %258 = vst [vmem:[#allocation2 + $0x60] sm:$0xff] %v242
  %259 = vst [vmem:[#allocation2 + $0x68] sm:$0xff] %v243
  %260 = vst [vmem:[#allocation2 + $0x70] sm:$0xff] %v244
  %261 = vst [vmem:[#allocation2 + $0x78] sm:$0xff] %v245
  // Predicated region
  $region22: #{_lambda_.9} parent=0 // pred_check
    %p262 = pneg %p17
  $region23: #{_lambda_.9} parent=0 // pred_check_branch
    %264 = sbr.rel (%p262) target = $region25
  $region24: #{_lambda_.9} parent=0 // pred_region
    %v265 = vld [vmem:[#allocation2] sm:$0xff]
    %v266 = vld [vmem:[#allocation2 + $0x8] sm:$0xff]
    %v267 = vld [vmem:[#allocation2 + $0x10] sm:$0xff]
    %v268 = vld [vmem:[#allocation2 + $0x18] sm:$0xff]
    %v269 = vld [vmem:[#allocation2 + $0x20] sm:$0xff]
    %v270 = vld [vmem:[#allocation2 + $0x28] sm:$0xff]
    %v271 = vld [vmem:[#allocation2 + $0x30] sm:$0xff]
    %v272 = vld [vmem:[#allocation2 + $0x38] sm:$0xff]
    %v273 = vld [vmem:[#allocation2 + $0x40] sm:$0xff]
    %v274 = vld [vmem:[#allocation2 + $0x48] sm:$0xff]
    %v275 = vld [vmem:[#allocation2 + $0x50] sm:$0xff]
    %v276 = vld [vmem:[#allocation2 + $0x58] sm:$0xff]
    %v277 = vld [vmem:[#allocation2 + $0x60] sm:$0xff]
    %v278 = vld [vmem:[#allocation2 + $0x68] sm:$0xff]
    %v279 = vld [vmem:[#allocation2 + $0x70] sm:$0xff]
    %v280 = vld [vmem:[#allocation2 + $0x78] sm:$0xff]
    %v281 = vld [vmem:[%s2] sm:$0x1]
    %v283 = vperm.slane %v281, 0
    %v285 = vmul.f32 %v265, %v283
    %v286 = vmul.f32 %v266, %v283
    %v287 = vmul.f32 %v267, %v283
    %v288 = vmul.f32 %v268, %v283
    %v289 = vmul.f32 %v269, %v283
    %v290 = vmul.f32 %v270, %v283
    %v291 = vmul.f32 %v271, %v283
    %v292 = vmul.f32 %v272, %v283
    %v293 = vmul.f32 %v273, %v283
    %v294 = vmul.f32 %v274, %v283
    %v295 = vmul.f32 %v275, %v283
    %v296 = vmul.f32 %v276, %v283
    %v297 = vmul.f32 %v277, %v283
    %v298 = vmul.f32 %v278, %v283
    %v299 = vmul.f32 %v279, %v283
    %v300 = vmul.f32 %v280, %v283
    %v301 = vld [vmem:[%s3] sm:$0x1]
    %v303 = vperm.slane %v301, 0
    %v305 = vadd.f32 %v285, %v303
    %v306 = vadd.f32 %v286, %v303
    %v307 = vadd.f32 %v287, %v303
    %v308 = vadd.f32 %v288, %v303
    %v309 = vadd.f32 %v289, %v303
    %v310 = vadd.f32 %v290, %v303
    %v311 = vadd.f32 %v291, %v303
    %v312 = vadd.f32 %v292, %v303
    %v313 = vadd.f32 %v293, %v303
    %v314 = vadd.f32 %v294, %v303
    %v315 = vadd.f32 %v295, %v303
    %v316 = vadd.f32 %v296, %v303
    %v317 = vadd.f32 %v297, %v303
    %v318 = vadd.f32 %v298, %v303
    %v319 = vadd.f32 %v299, %v303
    %v320 = vadd.f32 %v300, %v303
    %321 = vst [vmem:[%s4] sm:$0xff] %v305
    %322 = vst [vmem:[%s4 + $0x8] sm:$0xff] %v306
    %323 = vst [vmem:[%s4 + $0x10] sm:$0xff] %v307
    %324 = vst [vmem:[%s4 + $0x18] sm:$0xff] %v308
    %325 = vst [vmem:[%s4 + $0x20] sm:$0xff] %v309
    %326 = vst [vmem:[%s4 + $0x28] sm:$0xff] %v310
    %327 = vst [vmem:[%s4 + $0x30] sm:$0xff] %v311
    %328 = vst [vmem:[%s4 + $0x38] sm:$0xff] %v312
    %329 = vst [vmem:[%s4 + $0x40] sm:$0xff] %v313
    %330 = vst [vmem:[%s4 + $0x48] sm:$0xff] %v314
    %331 = vst [vmem:[%s4 + $0x50] sm:$0xff] %v315
    %332 = vst [vmem:[%s4 + $0x58] sm:$0xff] %v316
    %333 = vst [vmem:[%s4 + $0x60] sm:$0xff] %v317
    %334 = vst [vmem:[%s4 + $0x68] sm:$0xff] %v318
    %335 = vst [vmem:[%s4 + $0x70] sm:$0xff] %v319
    %336 = vst [vmem:[%s4 + $0x78] sm:$0xff] %v320
  $region25: #{_lambda_.9} parent=0 // pred_fallthru
    _
  // Predicated region
  $region26: #{_lambda_.9} parent=0 // pred_check
    _
  $region27: #{_lambda_.9} parent=0 // pred_check_branch
    %338 = sbr.rel (0) target = $region29
  $region28: #{_lambda_.9} parent=0 // pred_region
    _
  $region29: #{_lambda_.9} parent=0 // pred_fallthru
    _
  // Predicated region
  $region30: #{_lambda_.9} parent=0 // pred_check
    _
  $region31: #{_lambda_.9} parent=0 // pred_check_branch
    %340 = sbr.rel (0) target = $region33
  $region32: #{_lambda_.9} parent=0 // pred_region
    _
  $region33: #{_lambda_.9} parent=0 // pred_fallthru
    _

// kernel: _lambda_.7
$region0: #{_lambda_.7}
  #allocation0 [shape = 'u32[]', space=smem, size = 0x4, offset = 0x4, fixed_abs, tag = 'smem constant byte address 0x4 - core index']
  #allocation1 [shape = 'u32[72,128]{1,0:T(1,128)}', space=vmem, size = 0x9000, scoped, tag = 'internal scratch']
  #allocation2 [shape = 'f32[256,128]{1,0:T(8,128)}', space=vmem, size = 0x20000, scoped, tag = 'scratch operand']
  %s0 = inlined_call_operand.vmem [shape: bf16[512,128], index: 0, kind: input, shape index: {}]
  %s1 = inlined_call_operand.vmem [shape: bf16[128,128], index: 1, kind: input, shape index: {}]
  %s2 = inlined_call_operand.vmem [shape: f32[1,128], index: 2, kind: input, shape index: {}]
  %s3 = inlined_call_operand.vmem [shape: f32[1,128], index: 3, kind: input, shape index: {}]
  %s4 = inlined_call_operand.vmem [shape: bf16[512,128], index: 4, kind: output, shape index: {}]
  %s5 = sld [smem:[#allocation0]]
  $region57: #{_lambda_.7} parent=0
    _
  %s7 = ssub.s32 1, %s5
  %s8 = scalar_select 0, %s7, %s5
  loop: start=0, step=1, limit=4
  $region2: #{_lambda_.7} parent=0 // loop_pre_header
    _
  $region3: #{_lambda_.7} parent=0 // loop_header
    %s10 = sphi 0, %s14
    %p11 = scmp.ge.s32.totalorder %s10, 4
    %s17 = sphi 0, %s36
    %s18 = sphi 0, %s32
    %s19 = sphi 0, %s28
    %s20 = sphi 0, %s17
    %s21 = sphi 0, %s18
    %s22 = sphi 0, %s19
    %s23 = sphi 0, %s20
    %s24 = sphi 0, %s21
    %s25 = sphi 0, %s22
    %s41 = sphi 0, %s43
    %s44 = sphi 0, %s41
    %s45 = sphi 0, %s44
    %s61 = sphi 0, %s45
    %s69 = sphi 0, %s71
    %s72 = sphi 0, %s69
    %s73 = sphi 0, %s72
    %s89 = sphi 0, %s73
    %s95 = sphi 0, %s97
    %s98 = sphi 0, %s95
    %s99 = sphi 0, %s98
    %s115 = sphi 0, %s99
    %s121 = sphi 0, %s123
    %s124 = sphi 0, %s121
    %s125 = sphi 0, %s124
    %s141 = sphi 0, %s125
    %s149 = sphi 0, %s151
    %s152 = sphi 0, %s149
    %s153 = sphi 0, %s152
    %s169 = sphi 0, %s153
  $region4: #{_lambda_.7} parent=0 // loop_header_branch
    %13 = sbr.rel (%p11) target = $region8
  $region5: #{_lambda_.7} parent=0 // loop_body
    %s15 = ssub.s32 %s10, 1
    %s16 = ssub.s32 %s10, 2
    %s26 = sadd.s32 1, %s19
    %p27 = scmp.ge.s32.totalorder %s26, 1
    %s28 = scalar_select %p27, 0, %s26
    %s29 = sadd.s32 1, %s18
    %s30 = scalar_select %p27, %s29, %s18
    %p31 = scmp.ge.s32.totalorder %s30, 1
    %s32 = scalar_select %p31, 0, %s30
    %s33 = sadd.s32 1, %s17
    %s34 = scalar_select %p31, %s33, %s17
    %p35 = scmp.ge.s32.totalorder %s34, 2
    %s36 = scalar_select %p35, 0, %s34
    %s37 = ssub.s32 %s17, %s36
    %s38 = ssub.s32 %s19, %s28
    %s39 = sor.u32 %s37, %s38
    %p40 = scmp.eq.s32.totalorder %s39, 0
    %s42 = sadd.s32 %s41, 1
    %s43 = scalar_select %p40, %s41, %s42
    %p46 = pneg %p40
    %p47 = scmp.eq.s32.totalorder %s10, 1
    %p48 = por %p46, %p47
    %p49 = scmp.ne.s32.totalorder %s41, %s44
    %p50 = scmp.eq.s32.totalorder %s10, 0
    %p51 = por %p49, %p50
    %p52 = scmp.ne.s32.totalorder %s41, %s44
    %p53 = scmp.eq.s32.totalorder %s15, 1
    %p54 = por %p52, %p53
    %p55 = scmp.ne.s32.totalorder %s44, %s45
    %p56 = scmp.eq.s32.totalorder %s15, 0
    %p57 = por %p55, %p56
    %p58 = scmp.ne.s32.totalorder %s44, %s45
    %p59 = scmp.eq.s32.totalorder %s16, 1
    %p60 = por %p58, %p59
    %p62 = scmp.ne.s32.totalorder %s45, %s61
    %p63 = scmp.eq.s32.totalorder %s16, 0
    %p64 = por %p62, %p63
    %s65 = ssub.s32 %s19, %s28
    %s66 = ssub.s32 %s18, %s32
    %s67 = sor.u32 %s65, %s66
    %p68 = scmp.eq.s32.totalorder %s67, 0
    %s70 = sadd.s32 %s69, 1
    %s71 = scalar_select %p68, %s69, %s70
    %p74 = pneg %p68
    %p75 = scmp.eq.s32.totalorder %s10, 1
    %p76 = por %p74, %p75
    %p77 = scmp.ne.s32.totalorder %s69, %s72
    %p78 = scmp.eq.s32.totalorder %s10, 0
    %p79 = por %p77, %p78
    %p80 = scmp.ne.s32.totalorder %s69, %s72
    %p81 = scmp.eq.s32.totalorder %s15, 1
    %p82 = por %p80, %p81
    %p83 = scmp.ne.s32.totalorder %s72, %s73
    %p84 = scmp.eq.s32.totalorder %s15, 0
    %p85 = por %p83, %p84
    %p86 = scmp.ne.s32.totalorder %s72, %s73
    %p87 = scmp.eq.s32.totalorder %s16, 1
    %p88 = por %p86, %p87
    %p90 = scmp.ne.s32.totalorder %s73, %s89
    %p91 = scmp.eq.s32.totalorder %s16, 0
    %p92 = por %p90, %p91
    %s93 = ssub.s32 %s18, %s32
    %p94 = scmp.eq.s32.totalorder %s93, 0
    %s96 = sadd.s32 %s95, 1
    %s97 = scalar_select %p94, %s95, %s96
    %p100 = pneg %p94
    %p101 = scmp.eq.s32.totalorder %s10, 1
    %p102 = por %p100, %p101
    %p103 = scmp.ne.s32.totalorder %s95, %s98
    %p104 = scmp.eq.s32.totalorder %s10, 0
    %p105 = por %p103, %p104
    %p106 = scmp.ne.s32.totalorder %s95, %s98
    %p107 = scmp.eq.s32.totalorder %s15, 1
    %p108 = por %p106, %p107
    %p109 = scmp.ne.s32.totalorder %s98, %s99
    %p110 = scmp.eq.s32.totalorder %s15, 0
    %p111 = por %p109, %p110
    %p112 = scmp.ne.s32.totalorder %s98, %s99
    %p113 = scmp.eq.s32.totalorder %s16, 1
    %p114 = por %p112, %p113
    %p116 = scmp.ne.s32.totalorder %s99, %s115
    %p117 = scmp.eq.s32.totalorder %s16, 0
    %p118 = por %p116, %p117
    %s119 = ssub.s32 %s18, %s32
    %p120 = scmp.eq.s32.totalorder %s119, 0
    %s122 = sadd.s32 %s121, 1
    %s123 = scalar_select %p120, %s121, %s122
    %p126 = pneg %p120
    %p127 = scmp.eq.s32.totalorder %s10, 1
    %p128 = por %p126, %p127
    %p129 = scmp.ne.s32.totalorder %s121, %s124
    %p130 = scmp.eq.s32.totalorder %s10, 0
    %p131 = por %p129, %p130
    %p132 = scmp.ne.s32.totalorder %s121, %s124
    %p133 = scmp.eq.s32.totalorder %s15, 1
    %p134 = por %p132, %p133
    %p135 = scmp.ne.s32.totalorder %s124, %s125
    %p136 = scmp.eq.s32.totalorder %s15, 0
    %p137 = por %p135, %p136
    %p138 = scmp.ne.s32.totalorder %s124, %s125
    %p139 = scmp.eq.s32.totalorder %s16, 1
    %p140 = por %p138, %p139
    %p142 = scmp.ne.s32.totalorder %s125, %s141
    %p143 = scmp.eq.s32.totalorder %s16, 0
    %p144 = por %p142, %p143
    %s145 = ssub.s32 %s17, %s36
    %s146 = ssub.s32 %s18, %s32
    %s147 = sor.u32 %s145, %s146
    %p148 = scmp.eq.s32.totalorder %s147, 0
    %s150 = sadd.s32 %s149, 1
    %s151 = scalar_select %p148, %s149, %s150
    %p154 = pneg %p148
    %p155 = scmp.eq.s32.totalorder %s10, 1
    %p156 = por %p154, %p155
    %p157 = scmp.ne.s32.totalorder %s149, %s152
    %p158 = scmp.eq.s32.totalorder %s10, 0
    %p159 = por %p157, %p158
    %p160 = scmp.ne.s32.totalorder %s149, %s152
    %p161 = scmp.eq.s32.totalorder %s15, 1
    %p162 = por %p160, %p161
    %p163 = scmp.ne.s32.totalorder %s152, %s153
    %p164 = scmp.eq.s32.totalorder %s15, 0
    %p165 = por %p163, %p164
    %p166 = scmp.ne.s32.totalorder %s152, %s153
    %p167 = scmp.eq.s32.totalorder %s16, 1
    %p168 = por %p166, %p167
    %p170 = scmp.ne.s32.totalorder %s153, %s169
    %p171 = scmp.eq.s32.totalorder %s16, 0
    %p172 = por %p170, %p171
    %p173 = scmp.le.s32.totalorder 1, %s10
    %p174 = scmp.lt.s32.totalorder %s10, 3
    %p175 = pnand %p173, %p174
    %p176 = pneg %p175
    // Predicated region
    $region9: #{_lambda_.7} parent=5 // pred_check
      _
    $region10: #{_lambda_.7} parent=5 // pred_check_branch
      %178 = sbr.rel (%p175) target = $region12
    $region11: #{_lambda_.7} parent=5 // pred_region
      %s179 = ssub.s32 %s10, 1
      // Predicated region
      $region13: #{_lambda_.7} parent=11 // pred_check
        %p180 = pneg %p85
      $region14: #{_lambda_.7} parent=11 // pred_check_branch
        %182 = sbr.rel (%p180) target = $region16
      $region15: #{_lambda_.7} parent=11 // pred_region
        %s183 = smul.u32 16, %s22
        %p184 = scmp.lt.s32.totalorder %s183, 15
        %s185 = scalar_select %p184, %s183, 15
        %p186 = scmp.lt.s32.totalorder %s21, 0
        %s187 = scalar_select %p186, %s21, 0
        %s188 = sadd.s32 %s187, %s185
        %s189 = smul.addr %s188, 4
        %s190 = scalar_lea.vmem %s1, %s189
        %s191 = smul.u32 16, %s22
      $region16: #{_lambda_.7} parent=11 // pred_fallthru
        _
      // Predicated region
      $region17: #{_lambda_.7} parent=11 // pred_check
        %p192 = pneg %p111
      $region18: #{_lambda_.7} parent=11 // pred_check_branch
        %194 = sbr.rel (%p192) target = $region20
      $region19: #{_lambda_.7} parent=11 // pred_region
        %p195 = scmp.lt.s32.totalorder %s21, 0
        %s196 = scalar_select %p195, %s21, 0
        %s197 = scalar_lea.vmem %s2, %s196
      $region20: #{_lambda_.7} parent=11 // pred_fallthru
        _
      // Predicated region
      $region21: #{_lambda_.7} parent=11 // pred_check
        %p198 = pneg %p137
      $region22: #{_lambda_.7} parent=11 // pred_check_branch
        %200 = sbr.rel (%p198) target = $region24
      $region23: #{_lambda_.7} parent=11 // pred_region
        %p201 = scmp.lt.s32.totalorder %s21, 0
        %s202 = scalar_select %p201, %s21, 0
        %s203 = scalar_lea.vmem %s3, %s202
      $region24: #{_lambda_.7} parent=11 // pred_fallthru
        _
    $region12: #{_lambda_.7} parent=5 // pred_fallthru
      _
    %p204 = scmp.lt.s32.totalorder %s10, 2
    // Predicated region
    $region25: #{_lambda_.7} parent=5 // pred_check
      %p205 = pneg %p204
    $region26: #{_lambda_.7} parent=5 // pred_check_branch
      %207 = sbr.rel (%p205) target = $region28
    $region27: #{_lambda_.7} parent=5 // pred_region
      // Predicated region
      $region29: #{_lambda_.7} parent=27 // pred_check
        %p208 = pneg %p51
      $region30: #{_lambda_.7} parent=27 // pred_check_branch
        %210 = sbr.rel (%p208) target = $region32
      $region31: #{_lambda_.7} parent=27 // pred_region
        %s211 = smul.u32 32, %s17
        %p212 = scmp.lt.s32.totalorder %s211, 63
        %s213 = scalar_select %p212, %s211, 63
        %p214 = scmp.lt.s32.totalorder %s19, 0
        %s215 = scalar_select %p214, %s19, 0
        %s216 = sadd.s32 %s215, %s213
        %s217 = smul.addr %s216, 4
        %s218 = scalar_lea.vmem %s0, %s217
        %s219 = smul.u32 32, %s17
      $region32: #{_lambda_.7} parent=27 // pred_fallthru
        _
    $region28: #{_lambda_.7} parent=5 // pred_fallthru
      _
    %p220 = scmp.le.s32.totalorder 1, %s10
    %p221 = scmp.lt.s32.totalorder %s10, 3
    %p222 = pnand %p220, %p221
    %p223 = pneg %p222
    // Predicated region
    $region33: #{_lambda_.7} parent=5 // pred_check
      _
    $region34: #{_lambda_.7} parent=5 // pred_check_branch
      %225 = sbr.rel (%p222) target = $region36
    $region35: #{_lambda_.7} parent=5 // pred_region
      %s226 = ssub.s32 %s10, 1
      %s227 = smul.u32 32, %s20
      %p228 = scmp.lt.s32.totalorder %s227, 63
      %s229 = scalar_select %p228, %s227, 63
      %p230 = scmp.lt.s32.totalorder %s22, 0
      %s231 = scalar_select %p230, %s22, 0
      %s232 = sadd.s32 %s231, %s229
      %s233 = smul.addr %s232, 4
      %s234 = scalar_lea.vmem %s0, %s233
      %p235 = pneg %p57
      %p236 = pneg %p54
      %s237 = smul.u32 16, %s22
      %p238 = scmp.lt.s32.totalorder %s237, 15
      %s239 = scalar_select %p238, %s237, 15
      %p240 = scmp.lt.s32.totalorder %s21, 0
      %s241 = scalar_select %p240, %s21, 0
      %s242 = sadd.s32 %s241, %s239
      %s243 = smul.addr %s242, 4
      %s244 = scalar_lea.vmem %s1, %s243
      %p245 = pneg %p85
      %p246 = pneg %p82
      %p247 = scmp.lt.s32.totalorder %s21, 0
      %s248 = scalar_select %p247, %s21, 0
      %s249 = scalar_lea.vmem %s2, %s248
      %p250 = pneg %p111
      %p251 = pneg %p108
      %p252 = scmp.lt.s32.totalorder %s21, 0
      %s253 = scalar_select %p252, %s21, 0
      %s254 = scalar_lea.vmem %s3, %s253
      %p255 = pneg %p137
      %p256 = pneg %p134
      %p257 = pneg %p165
      %p258 = pneg %p162
      %s259 = smul.u32 32, %s20
      %p260 = scmp.lt.s32.totalorder %s259, 63
      %s261 = scalar_select %p260, %s259, 63
      %p262 = scmp.lt.s32.totalorder %s21, 0
      %s263 = scalar_select %p262, %s21, 0
      %s264 = sadd.s32 %s263, %s261
      %s265 = smul.addr %s264, 4
      %s266 = scalar_lea.vmem %s4, %s265
      %s267 = smul.u32 32, %s20
      %p268 = scmp.lt.s32.totalorder %s267, 63
      %s269 = scalar_select %p268, %s267, 63
      %p270 = scmp.lt.s32.totalorder %s22, 0
      %s271 = scalar_select %p270, %s22, 0
      %s272 = sadd.s32 %s271, %s269
      %s273 = smul.addr %s272, 4
      %s274 = scalar_lea.vmem %s0, %s273
      %s275 = smul.u32 32, %s20
      %s276 = smul.u32 16, %s22
      %p277 = scmp.lt.s32.totalorder %s276, 15
      %s278 = scalar_select %p277, %s276, 15
      %p279 = scmp.lt.s32.totalorder %s21, 0
      %s280 = scalar_select %p279, %s21, 0
      %s281 = sadd.s32 %s280, %s278
      %s282 = smul.addr %s281, 4
      %s283 = scalar_lea.vmem %s1, %s282
      %s284 = smul.u32 16, %s22
      %p285 = scmp.lt.s32.totalorder %s21, 0
      %s286 = scalar_select %p285, %s21, 0
      %s287 = scalar_lea.vmem %s2, %s286
      %p288 = scmp.lt.s32.totalorder %s21, 0
      %s289 = scalar_select %p288, %s21, 0
      %s290 = scalar_lea.vmem %s3, %s289
      %s291 = smul.u32 32, %s20
      %p292 = scmp.lt.s32.totalorder %s291, 63
      %s293 = scalar_select %p292, %s291, 63
      %p294 = scmp.lt.s32.totalorder %s21, 0
      %s295 = scalar_select %p294, %s21, 0
      %s296 = sadd.s32 %s295, %s293
      %s297 = smul.addr %s296, 4
      %s298 = scalar_lea.vmem %s4, %s297
      %s299 = smul.u32 32, %s20
      %p300 = scmp.eq.s32.totalorder %s22, 0
      // Predicated region
      $region37: #{_lambda_.7} parent=35 // pred_check
        %p301 = pneg %p300
      $region38: #{_lambda_.7} parent=35 // pred_check_branch
        %303 = sbr.rel (%p301) target = $region40
      $region39: #{_lambda_.7} parent=35 // pred_region
        %304 = vst [vmem:[#allocation2] sm:$0xff] 0.0
        %305 = vst [vmem:[#allocation2 + $0x8] sm:$0xff] 0.0
        %306 = vst [vmem:[#allocation2 + $0x10] sm:$0xff] 0.0
        %307 = vst [vmem:[#allocation2 + $0x18] sm:$0xff] 0.0
        %308 = vst [vmem:[#allocation2 + $0x20] sm:$0xff] 0.0
        %309 = vst [vmem:[#allocation2 + $0x28] sm:$0xff] 0.0
        %310 = vst [vmem:[#allocation2 + $0x30] sm:$0xff] 0.0
        %311 = vst [vmem:[#allocation2 + $0x38] sm:$0xff] 0.0
        %312 = vst [vmem:[#allocation2 + $0x40] sm:$0xff] 0.0
        %313 = vst [vmem:[#allocation2 + $0x48] sm:$0xff] 0.0
        %314 = vst [vmem:[#allocation2 + $0x50] sm:$0xff] 0.0
        %315 = vst [vmem:[#allocation2 + $0x58] sm:$0xff] 0.0
        %316 = vst [vmem:[#allocation2 + $0x60] sm:$0xff] 0.0
        %317 = vst [vmem:[#allocation2 + $0x68] sm:$0xff] 0.0
        %318 = vst [vmem:[#allocation2 + $0x70] sm:$0xff] 0.0
        %319 = vst [vmem:[#allocation2 + $0x78] sm:$0xff] 0.0
        %320 = vst [vmem:[#allocation2 + $0x80] sm:$0xff] 0.0
        %321 = vst [vmem:[#allocation2 + $0x88] sm:$0xff] 0.0
        %322 = vst [vmem:[#allocation2 + $0x90] sm:$0xff] 0.0
        %323 = vst [vmem:[#allocation2 + $0x98] sm:$0xff] 0.0
        %324 = vst [vmem:[#allocation2 + $0xa0] sm:$0xff] 0.0
        %325 = vst [vmem:[#allocation2 + $0xa8] sm:$0xff] 0.0
        %326 = vst [vmem:[#allocation2 + $0xb0] sm:$0xff] 0.0
        %327 = vst [vmem:[#allocation2 + $0xb8] sm:$0xff] 0.0
        %328 = vst [vmem:[#allocation2 + $0xc0] sm:$0xff] 0.0
        %329 = vst [vmem:[#allocation2 + $0xc8] sm:$0xff] 0.0
        %330 = vst [vmem:[#allocation2 + $0xd0] sm:$0xff] 0.0
        %331 = vst [vmem:[#allocation2 + $0xd8] sm:$0xff] 0.0
        %332 = vst [vmem:[#allocation2 + $0xe0] sm:$0xff] 0.0
        %333 = vst [vmem:[#allocation2 + $0xe8] sm:$0xff] 0.0
        %334 = vst [vmem:[#allocation2 + $0xf0] sm:$0xff] 0.0
        %335 = vst [vmem:[#allocation2 + $0xf8] sm:$0xff] 0.0
      $region40: #{_lambda_.7} parent=35 // pred_fallthru
        _
      %v336 = vld [vmem:[#allocation2] sm:$0xff]
      %v337 = vld [vmem:[#allocation2 + $0x8] sm:$0xff]
      %v338 = vld [vmem:[#allocation2 + $0x10] sm:$0xff]
      %v339 = vld [vmem:[#allocation2 + $0x18] sm:$0xff]
      %v340 = vld [vmem:[#allocation2 + $0x20] sm:$0xff]
      %v341 = vld [vmem:[#allocation2 + $0x28] sm:$0xff]
      %v342 = vld [vmem:[#allocation2 + $0x30] sm:$0xff]
      %v343 = vld [vmem:[#allocation2 + $0x38] sm:$0xff]
      %v344 = vld [vmem:[#allocation2 + $0x40] sm:$0xff]
      %v345 = vld [vmem:[#allocation2 + $0x48] sm:$0xff]
      %v346 = vld [vmem:[#allocation2 + $0x50] sm:$0xff]
      %v347 = vld [vmem:[#allocation2 + $0x58] sm:$0xff]
      %v348 = vld [vmem:[#allocation2 + $0x60] sm:$0xff]
      %v349 = vld [vmem:[#allocation2 + $0x68] sm:$0xff]
      %v350 = vld [vmem:[#allocation2 + $0x70] sm:$0xff]
      %v351 = vld [vmem:[#allocation2 + $0x78] sm:$0xff]
      %v352 = vld [vmem:[#allocation2 + $0x80] sm:$0xff]
      %v353 = vld [vmem:[#allocation2 + $0x88] sm:$0xff]
      %v354 = vld [vmem:[#allocation2 + $0x90] sm:$0xff]
      %v355 = vld [vmem:[#allocation2 + $0x98] sm:$0xff]
      %v356 = vld [vmem:[#allocation2 + $0xa0] sm:$0xff]
      %v357 = vld [vmem:[#allocation2 + $0xa8] sm:$0xff]
      %v358 = vld [vmem:[#allocation2 + $0xb0] sm:$0xff]
      %v359 = vld [vmem:[#allocation2 + $0xb8] sm:$0xff]
      %v360 = vld [vmem:[#allocation2 + $0xc0] sm:$0xff]
      %v361 = vld [vmem:[#allocation2 + $0xc8] sm:$0xff]
      %v362 = vld [vmem:[#allocation2 + $0xd0] sm:$0xff]
      %v363 = vld [vmem:[#allocation2 + $0xd8] sm:$0xff]
      %v364 = vld [vmem:[#allocation2 + $0xe0] sm:$0xff]
      %v365 = vld [vmem:[#allocation2 + $0xe8] sm:$0xff]
      %v366 = vld [vmem:[#allocation2 + $0xf0] sm:$0xff]
      %v367 = vld [vmem:[#allocation2 + $0xf8] sm:$0xff]
      %v368 = vld [vmem:[%s274] sm:$0xf]
      %v369 = vld [vmem:[%s274 + $0x4] sm:$0xf]
      %v370 = vld [vmem:[%s274 + $0x8] sm:$0xf]
      %v371 = vld [vmem:[%s274 + $0xc] sm:$0xf]
      %v372 = vld [vmem:[%s274 + $0x10] sm:$0xf]
      %v373 = vld [vmem:[%s274 + $0x14] sm:$0xf]
      %v374 = vld [vmem:[%s274 + $0x18] sm:$0xf]
      %v375 = vld [vmem:[%s274 + $0x1c] sm:$0xf]
      %v376 = vld [vmem:[%s274 + $0x20] sm:$0xf]
      %v377 = vld [vmem:[%s274 + $0x24] sm:$0xf]
      %v378 = vld [vmem:[%s274 + $0x28] sm:$0xf]
      %v379 = vld [vmem:[%s274 + $0x2c] sm:$0xf]
      %v380 = vld [vmem:[%s274 + $0x30] sm:$0xf]
      %v381 = vld [vmem:[%s274 + $0x34] sm:$0xf]
      %v382 = vld [vmem:[%s274 + $0x38] sm:$0xf]
      %v383 = vld [vmem:[%s274 + $0x3c] sm:$0xf]
      %v384 = vld [vmem:[%s274 + $0x40] sm:$0xf]
      %v385 = vld [vmem:[%s274 + $0x44] sm:$0xf]
      %v386 = vld [vmem:[%s274 + $0x48] sm:$0xf]
      %v387 = vld [vmem:[%s274 + $0x4c] sm:$0xf]
      %v388 = vld [vmem:[%s274 + $0x50] sm:$0xf]
      %v389 = vld [vmem:[%s274 + $0x54] sm:$0xf]
      %v390 = vld [vmem:[%s274 + $0x58] sm:$0xf]
      %v391 = vld [vmem:[%s274 + $0x5c] sm:$0xf]
      %v392 = vld [vmem:[%s274 + $0x60] sm:$0xf]
      %v393 = vld [vmem:[%s274 + $0x64] sm:$0xf]
      %v394 = vld [vmem:[%s274 + $0x68] sm:$0xf]
      %v395 = vld [vmem:[%s274 + $0x6c] sm:$0xf]
      %v396 = vld [vmem:[%s274 + $0x70] sm:$0xf]
      %v397 = vld [vmem:[%s274 + $0x74] sm:$0xf]
      %v398 = vld [vmem:[%s274 + $0x78] sm:$0xf]
      %v399 = vld [vmem:[%s274 + $0x7c] sm:$0xf]
      %v400 = vld [vmem:[%s283] sm:$0xf]
      %v401 = vld [vmem:[%s283 + $0x4] sm:$0xf]
      %v402 = vld [vmem:[%s283 + $0x8] sm:$0xf]
      %v403 = vld [vmem:[%s283 + $0xc] sm:$0xf]
      %v404 = vld [vmem:[%s283 + $0x10] sm:$0xf]
      %v405 = vld [vmem:[%s283 + $0x14] sm:$0xf]
      %v406 = vld [vmem:[%s283 + $0x18] sm:$0xf]
      %v407 = vld [vmem:[%s283 + $0x1c] sm:$0xf]
      %v408 = vld [vmem:[%s283 + $0x20] sm:$0xf]
      %v409 = vld [vmem:[%s283 + $0x24] sm:$0xf]
      %v410 = vld [vmem:[%s283 + $0x28] sm:$0xf]
      %v411 = vld [vmem:[%s283 + $0x2c] sm:$0xf]
      %v412 = vld [vmem:[%s283 + $0x30] sm:$0xf]
      %v413 = vld [vmem:[%s283 + $0x34] sm:$0xf]
      %v414 = vld [vmem:[%s283 + $0x38] sm:$0xf]
      %v415 = vld [vmem:[%s283 + $0x3c] sm:$0xf]
      %v448 = vunpack.c.l.b16 %v368
      %v449 = vunpack.c.l.b16 %v369
      %v450 = vunpack.c.l.b16 %v370
      %v451 = vunpack.c.l.b16 %v371
      %v452 = vunpack.c.l.b16 %v372
      %v453 = vunpack.c.l.b16 %v373
      %v454 = vunpack.c.l.b16 %v374
      %v455 = vunpack.c.l.b16 %v375
      %v456 = vunpack.c.l.b16 %v376
      %v457 = vunpack.c.l.b16 %v377
      %v458 = vunpack.c.l.b16 %v378
      %v459 = vunpack.c.l.b16 %v379
      %v460 = vunpack.c.l.b16 %v380
      %v461 = vunpack.c.l.b16 %v381
      %v462 = vunpack.c.l.b16 %v382
      %v463 = vunpack.c.l.b16 %v383
      %v464 = vunpack.c.l.b16 %v384
      %v465 = vunpack.c.l.b16 %v385
      %v466 = vunpack.c.l.b16 %v386
      %v467 = vunpack.c.l.b16 %v387
      %v468 = vunpack.c.l.b16 %v388
      %v469 = vunpack.c.l.b16 %v389
      %v470 = vunpack.c.l.b16 %v390
      %v471 = vunpack.c.l.b16 %v391
      %v472 = vunpack.c.l.b16 %v392
      %v473 = vunpack.c.l.b16 %v393
      %v474 = vunpack.c.l.b16 %v394
      %v475 = vunpack.c.l.b16 %v395
      %v476 = vunpack.c.l.b16 %v396
      %v477 = vunpack.c.l.b16 %v397
      %v478 = vunpack.c.l.b16 %v398
      %v479 = vunpack.c.l.b16 %v399
      %v480 = vpack.c.b16 %v449, %v448
      %v481 = vpack.c.b16 %v451, %v450
      %v482 = vpack.c.b16 %v453, %v452
      %v483 = vpack.c.b16 %v455, %v454
      %v484 = vpack.c.b16 %v457, %v456
      %v485 = vpack.c.b16 %v459, %v458
      %v486 = vpack.c.b16 %v461, %v460
      %v487 = vpack.c.b16 %v463, %v462
      %v488 = vpack.c.b16 %v465, %v464
      %v489 = vpack.c.b16 %v467, %v466
      %v490 = vpack.c.b16 %v469, %v468
      %v491 = vpack.c.b16 %v471, %v470
      %v492 = vpack.c.b16 %v473, %v472
      %v493 = vpack.c.b16 %v475, %v474
      %v494 = vpack.c.b16 %v477, %v476
      %v495 = vpack.c.b16 %v479, %v478
      %v528 = vunpack.c.l.b16 %v400
      %v529 = vunpack.c.l.b16 %v401
      %v530 = vunpack.c.l.b16 %v402
      %v531 = vunpack.c.l.b16 %v403
      %v532 = vunpack.c.l.b16 %v404
      %v533 = vunpack.c.l.b16 %v405
      %v534 = vunpack.c.l.b16 %v406
      %v535 = vunpack.c.l.b16 %v407
      %v536 = vunpack.c.l.b16 %v408
      %v537 = vunpack.c.l.b16 %v409
      %v538 = vunpack.c.l.b16 %v410
      %v539 = vunpack.c.l.b16 %v411
      %v540 = vunpack.c.l.b16 %v412
      %v541 = vunpack.c.l.b16 %v413
      %v542 = vunpack.c.l.b16 %v414
      %v543 = vunpack.c.l.b16 %v415
      %v544 = vpack.c.b16 %v529, %v528
      %v545 = vpack.c.b16 %v531, %v530
      %v546 = vpack.c.b16 %v533, %v532
      %v547 = vpack.c.b16 %v535, %v534
      %v548 = vpack.c.b16 %v537, %v536
      %v549 = vpack.c.b16 %v539, %v538
      %v550 = vpack.c.b16 %v541, %v540
      %v551 = vpack.c.b16 %v543, %v542
      %560 = vmatpush.bf16.msra.mxu0 %v551
      %561 = vmatpush.bf16.msra.mxu0 %v550
      %562 = vmatpush.bf16.msra.mxu0 %v549
      %563 = vmatpush.bf16.msra.mxu0 %v548
      %564 = vmatpush.bf16.msra.mxu0 %v547
      %565 = vmatpush.bf16.msra.mxu0 %v546
      %566 = vmatpush.bf16.msra.mxu0 %v545
      %567 = vmatpush.bf16.msra.mxu0 %v544
      %568 = vmatmul.bf16.gmra.mxu0 %v480
      %v569 = vpop.f32.mrf.mxu0
      %v570 = vadd.f32 0.0, %v569
      %v571 = vpop.f32.mrf.mxu0
      %v572 = vadd.f32 0.0, %v571
      %573 = vmatmul.bf16.gmra.mxu0 %v481
      %v574 = vpop.f32.mrf.mxu0
      %v575 = vadd.f32 0.0, %v574
      %v576 = vpop.f32.mrf.mxu0
      %v577 = vadd.f32 0.0, %v576
      %578 = vmatmul.bf16.gmra.mxu0 %v482
      %v579 = vpop.f32.mrf.mxu0
      %v580 = vadd.f32 0.0, %v579
      %v581 = vpop.f32.mrf.mxu0
      %v582 = vadd.f32 0.0, %v581
      %583 = vmatmul.bf16.gmra.mxu0 %v483
      %v584 = vpop.f32.mrf.mxu0
      %v585 = vadd.f32 0.0, %v584
      %v586 = vpop.f32.mrf.mxu0
      %v587 = vadd.f32 0.0, %v586
      %588 = vmatmul.bf16.gmra.mxu0 %v484
      %v589 = vpop.f32.mrf.mxu0
      %v590 = vadd.f32 0.0, %v589
      %v591 = vpop.f32.mrf.mxu0
      %v592 = vadd.f32 0.0, %v591
      %593 = vmatmul.bf16.gmra.mxu0 %v485
      %v594 = vpop.f32.mrf.mxu0
      %v595 = vadd.f32 0.0, %v594
      %v596 = vpop.f32.mrf.mxu0
      %v597 = vadd.f32 0.0, %v596
      %598 = vmatmul.bf16.gmra.mxu0 %v486
      %v599 = vpop.f32.mrf.mxu0
      %v600 = vadd.f32 0.0, %v599
      %v601 = vpop.f32.mrf.mxu0
      %v602 = vadd.f32 0.0, %v601
      %603 = vmatmul.bf16.gmra.mxu0 %v487
      %v604 = vpop.f32.mrf.mxu0
      %v605 = vadd.f32 0.0, %v604
      %v606 = vpop.f32.mrf.mxu0
      %v607 = vadd.f32 0.0, %v606
      %608 = vmatmul.bf16.gmra.mxu0 %v488
      %v609 = vpop.f32.mrf.mxu0
      %v610 = vadd.f32 0.0, %v609
      %v611 = vpop.f32.mrf.mxu0
      %v612 = vadd.f32 0.0, %v611
      %613 = vmatmul.bf16.gmra.mxu0 %v489
      %v614 = vpop.f32.mrf.mxu0
      %v615 = vadd.f32 0.0, %v614
      %v616 = vpop.f32.mrf.mxu0
      %v617 = vadd.f32 0.0, %v616
      %618 = vmatmul.bf16.gmra.mxu0 %v490
      %v619 = vpop.f32.mrf.mxu0
      %v620 = vadd.f32 0.0, %v619
      %v621 = vpop.f32.mrf.mxu0
      %v622 = vadd.f32 0.0, %v621
      %623 = vmatmul.bf16.gmra.mxu0 %v491
      %v624 = vpop.f32.mrf.mxu0
      %v625 = vadd.f32 0.0, %v624
      %v626 = vpop.f32.mrf.mxu0
      %v627 = vadd.f32 0.0, %v626
      %628 = vmatmul.bf16.gmra.mxu0 %v492
      %v629 = vpop.f32.mrf.mxu0
      %v630 = vadd.f32 0.0, %v629
      %v631 = vpop.f32.mrf.mxu0
      %v632 = vadd.f32 0.0, %v631
      %633 = vmatmul.bf16.gmra.mxu0 %v493
      %v634 = vpop.f32.mrf.mxu0
      %v635 = vadd.f32 0.0, %v634
      %v636 = vpop.f32.mrf.mxu0
      %v637 = vadd.f32 0.0, %v636
      %638 = vmatmul.bf16.gmra.mxu0 %v494
      %v639 = vpop.f32.mrf.mxu0
      %v640 = vadd.f32 0.0, %v639
      %v641 = vpop.f32.mrf.mxu0
      %v642 = vadd.f32 0.0, %v641
      %643 = vmatmul.bf16.gmra.mxu0 %v495
      %v644 = vpop.f32.mrf.mxu0
      %v645 = vadd.f32 0.0, %v644
      %v646 = vpop.f32.mrf.mxu0
      %v647 = vadd.f32 0.0, %v646
      %648 = vdwg.mxu0
      %v649 = vadd.f32 %v336, %v570
      %v650 = vadd.f32 %v337, %v572
      %v651 = vadd.f32 %v338, %v575
      %v652 = vadd.f32 %v339, %v577
      %v653 = vadd.f32 %v340, %v580
      %v654 = vadd.f32 %v341, %v582
      %v655 = vadd.f32 %v342, %v585
      %v656 = vadd.f32 %v343, %v587
      %v657 = vadd.f32 %v344, %v590
      %v658 = vadd.f32 %v345, %v592
      %v659 = vadd.f32 %v346, %v595
      %v660 = vadd.f32 %v347, %v597
      %v661 = vadd.f32 %v348, %v600
      %v662 = vadd.f32 %v349, %v602
      %v663 = vadd.f32 %v350, %v605
      %v664 = vadd.f32 %v351, %v607
      %v665 = vadd.f32 %v352, %v610
      %v666 = vadd.f32 %v353, %v612
      %v667 = vadd.f32 %v354, %v615
      %v668 = vadd.f32 %v355, %v617
      %v669 = vadd.f32 %v356, %v620
      %v670 = vadd.f32 %v357, %v622
      %v671 = vadd.f32 %v358, %v625
      %v672 = vadd.f32 %v359, %v627
      %v673 = vadd.f32 %v360, %v630
      %v674 = vadd.f32 %v361, %v632
      %v675 = vadd.f32 %v362, %v635
      %v676 = vadd.f32 %v363, %v637
      %v677 = vadd.f32 %v364, %v640
      %v678 = vadd.f32 %v365, %v642
      %v679 = vadd.f32 %v366, %v645
      %v680 = vadd.f32 %v367, %v647
      %681 = vst [vmem:[#allocation2] sm:$0xff] %v649
      %682 = vst [vmem:[#allocation2 + $0x8] sm:$0xff] %v650
      %683 = vst [vmem:[#allocation2 + $0x10] sm:$0xff] %v651
      %684 = vst [vmem:[#allocation2 + $0x18] sm:$0xff] %v652
      %685 = vst [vmem:[#allocation2 + $0x20] sm:$0xff] %v653
      %686 = vst [vmem:[#allocation2 + $0x28] sm:$0xff] %v654
      %687 = vst [vmem:[#allocation2 + $0x30] sm:$0xff] %v655
      %688 = vst [vmem:[#allocation2 + $0x38] sm:$0xff] %v656
      %689 = vst [vmem:[#allocation2 + $0x40] sm:$0xff] %v657
      %690 = vst [vmem:[#allocation2 + $0x48] sm:$0xff] %v658
      %691 = vst [vmem:[#allocation2 + $0x50] sm:$0xff] %v659
      %692 = vst [vmem:[#allocation2 + $0x58] sm:$0xff] %v660
      %693 = vst [vmem:[#allocation2 + $0x60] sm:$0xff] %v661
      %694 = vst [vmem:[#allocation2 + $0x68] sm:$0xff] %v662
      %695 = vst [vmem:[#allocation2 + $0x70] sm:$0xff] %v663
      %696 = vst [vmem:[#allocation2 + $0x78] sm:$0xff] %v664
      %697 = vst [vmem:[#allocation2 + $0x80] sm:$0xff] %v665
      %698 = vst [vmem:[#allocation2 + $0x88] sm:$0xff] %v666
      %699 = vst [vmem:[#allocation2 + $0x90] sm:$0xff] %v667
      %700 = vst [vmem:[#allocation2 + $0x98] sm:$0xff] %v668
      %701 = vst [vmem:[#allocation2 + $0xa0] sm:$0xff] %v669
      %702 = vst [vmem:[#allocation2 + $0xa8] sm:$0xff] %v670
      %703 = vst [vmem:[#allocation2 + $0xb0] sm:$0xff] %v671
      %704 = vst [vmem:[#allocation2 + $0xb8] sm:$0xff] %v672
      %705 = vst [vmem:[#allocation2 + $0xc0] sm:$0xff] %v673
      %706 = vst [vmem:[#allocation2 + $0xc8] sm:$0xff] %v674
      %707 = vst [vmem:[#allocation2 + $0xd0] sm:$0xff] %v675
      %708 = vst [vmem:[#allocation2 + $0xd8] sm:$0xff] %v676
      %709 = vst [vmem:[#allocation2 + $0xe0] sm:$0xff] %v677
      %710 = vst [vmem:[#allocation2 + $0xe8] sm:$0xff] %v678
      %711 = vst [vmem:[#allocation2 + $0xf0] sm:$0xff] %v679
      %712 = vst [vmem:[#allocation2 + $0xf8] sm:$0xff] %v680
      // Predicated region
      $region41: #{_lambda_.7} parent=35 // pred_check
        %p713 = pneg %p300
      $region42: #{_lambda_.7} parent=35 // pred_check_branch
        %715 = sbr.rel (%p713) target = $region44
      $region43: #{_lambda_.7} parent=35 // pred_region
        %v716 = vld [vmem:[#allocation2] sm:$0xff]
        %v717 = vld [vmem:[#allocation2 + $0x8] sm:$0xff]
        %v718 = vld [vmem:[#allocation2 + $0x10] sm:$0xff]
        %v719 = vld [vmem:[#allocation2 + $0x18] sm:$0xff]
        %v720 = vld [vmem:[#allocation2 + $0x20] sm:$0xff]
        %v721 = vld [vmem:[#allocation2 + $0x28] sm:$0xff]
        %v722 = vld [vmem:[#allocation2 + $0x30] sm:$0xff]
        %v723 = vld [vmem:[#allocation2 + $0x38] sm:$0xff]
        %v724 = vld [vmem:[#allocation2 + $0x40] sm:$0xff]
        %v725 = vld [vmem:[#allocation2 + $0x48] sm:$0xff]
        %v726 = vld [vmem:[#allocation2 + $0x50] sm:$0xff]
        %v727 = vld [vmem:[#allocation2 + $0x58] sm:$0xff]
        %v728 = vld [vmem:[#allocation2 + $0x60] sm:$0xff]
        %v729 = vld [vmem:[#allocation2 + $0x68] sm:$0xff]
        %v730 = vld [vmem:[#allocation2 + $0x70] sm:$0xff]
        %v731 = vld [vmem:[#allocation2 + $0x78] sm:$0xff]
        %v732 = vld [vmem:[#allocation2 + $0x80] sm:$0xff]
        %v733 = vld [vmem:[#allocation2 + $0x88] sm:$0xff]
        %v734 = vld [vmem:[#allocation2 + $0x90] sm:$0xff]
        %v735 = vld [vmem:[#allocation2 + $0x98] sm:$0xff]
        %v736 = vld [vmem:[#allocation2 + $0xa0] sm:$0xff]
        %v737 = vld [vmem:[#allocation2 + $0xa8] sm:$0xff]
        %v738 = vld [vmem:[#allocation2 + $0xb0] sm:$0xff]
        %v739 = vld [vmem:[#allocation2 + $0xb8] sm:$0xff]
        %v740 = vld [vmem:[#allocation2 + $0xc0] sm:$0xff]
        %v741 = vld [vmem:[#allocation2 + $0xc8] sm:$0xff]
        %v742 = vld [vmem:[#allocation2 + $0xd0] sm:$0xff]
        %v743 = vld [vmem:[#allocation2 + $0xd8] sm:$0xff]
        %v744 = vld [vmem:[#allocation2 + $0xe0] sm:$0xff]
        %v745 = vld [vmem:[#allocation2 + $0xe8] sm:$0xff]
        %v746 = vld [vmem:[#allocation2 + $0xf0] sm:$0xff]
        %v747 = vld [vmem:[#allocation2 + $0xf8] sm:$0xff]
        %v748 = vld [vmem:[%s287] sm:$0x1]
        %v750 = vperm.slane %v748, 0
        %v752 = vmul.f32 %v716, %v750
        %v753 = vmul.f32 %v717, %v750
        %v754 = vmul.f32 %v718, %v750
        %v755 = vmul.f32 %v719, %v750
        %v756 = vmul.f32 %v720, %v750
        %v757 = vmul.f32 %v721, %v750
        %v758 = vmul.f32 %v722, %v750
        %v759 = vmul.f32 %v723, %v750
        %v760 = vmul.f32 %v724, %v750
        %v761 = vmul.f32 %v725, %v750
        %v762 = vmul.f32 %v726, %v750
        %v763 = vmul.f32 %v727, %v750
        %v764 = vmul.f32 %v728, %v750
        %v765 = vmul.f32 %v729, %v750
        %v766 = vmul.f32 %v730, %v750
        %v767 = vmul.f32 %v731, %v750
        %v768 = vmul.f32 %v732, %v750
        %v769 = vmul.f32 %v733, %v750
        %v770 = vmul.f32 %v734, %v750
        %v771 = vmul.f32 %v735, %v750
        %v772 = vmul.f32 %v736, %v750
        %v773 = vmul.f32 %v737, %v750
        %v774 = vmul.f32 %v738, %v750
        %v775 = vmul.f32 %v739, %v750
        %v776 = vmul.f32 %v740, %v750
        %v777 = vmul.f32 %v741, %v750
        %v778 = vmul.f32 %v742, %v750
        %v779 = vmul.f32 %v743, %v750
        %v780 = vmul.f32 %v744, %v750
        %v781 = vmul.f32 %v745, %v750
        %v782 = vmul.f32 %v746, %v750
        %v783 = vmul.f32 %v747, %v750
        %v784 = vld [vmem:[%s290] sm:$0x1]
        %v786 = vperm.slane %v784, 0
        %v788 = vadd.f32 %v752, %v786
        %v789 = vadd.f32 %v753, %v786
        %v790 = vadd.f32 %v754, %v786
        %v791 = vadd.f32 %v755, %v786
        %v792 = vadd.f32 %v756, %v786
        %v793 = vadd.f32 %v757, %v786
        %v794 = vadd.f32 %v758, %v786
        %v795 = vadd.f32 %v759, %v786
        %v796 = vadd.f32 %v760, %v786
        %v797 = vadd.f32 %v761, %v786
        %v798 = vadd.f32 %v762, %v786
        %v799 = vadd.f32 %v763, %v786
        %v800 = vadd.f32 %v764, %v786
        %v801 = vadd.f32 %v765, %v786
        %v802 = vadd.f32 %v766, %v786
        %v803 = vadd.f32 %v767, %v786
        %v804 = vadd.f32 %v768, %v786
        %v805 = vadd.f32 %v769, %v786
        %v806 = vadd.f32 %v770, %v786
        %v807 = vadd.f32 %v771, %v786
        %v808 = vadd.f32 %v772, %v786
        %v809 = vadd.f32 %v773, %v786
        %v810 = vadd.f32 %v774, %v786
        %v811 = vadd.f32 %v775, %v786
        %v812 = vadd.f32 %v776, %v786
        %v813 = vadd.f32 %v777, %v786
        %v814 = vadd.f32 %v778, %v786
        %v815 = vadd.f32 %v779, %v786
        %v816 = vadd.f32 %v780, %v786
        %v817 = vadd.f32 %v781, %v786
        %v818 = vadd.f32 %v782, %v786
        %v819 = vadd.f32 %v783, %v786
        %v820 = vmax.f32 %v788, 0.0
        %v821 = vmax.f32 %v789, 0.0
        %v822 = vmax.f32 %v790, 0.0
        %v823 = vmax.f32 %v791, 0.0
        %v824 = vmax.f32 %v792, 0.0
        %v825 = vmax.f32 %v793, 0.0
        %v826 = vmax.f32 %v794, 0.0
        %v827 = vmax.f32 %v795, 0.0
        %v828 = vmax.f32 %v796, 0.0
        %v829 = vmax.f32 %v797, 0.0
        %v830 = vmax.f32 %v798, 0.0
        %v831 = vmax.f32 %v799, 0.0
        %v832 = vmax.f32 %v800, 0.0
        %v833 = vmax.f32 %v801, 0.0
        %v834 = vmax.f32 %v802, 0.0
        %v835 = vmax.f32 %v803, 0.0
        %v836 = vmax.f32 %v804, 0.0
        %v837 = vmax.f32 %v805, 0.0
        %v838 = vmax.f32 %v806, 0.0
        %v839 = vmax.f32 %v807, 0.0
        %v840 = vmax.f32 %v808, 0.0
        %v841 = vmax.f32 %v809, 0.0
        %v842 = vmax.f32 %v810, 0.0
        %v843 = vmax.f32 %v811, 0.0
        %v844 = vmax.f32 %v812, 0.0
        %v845 = vmax.f32 %v813, 0.0
        %v846 = vmax.f32 %v814, 0.0
        %v847 = vmax.f32 %v815, 0.0
        %v848 = vmax.f32 %v816, 0.0
        %v849 = vmax.f32 %v817, 0.0
        %v850 = vmax.f32 %v818, 0.0
        %v851 = vmax.f32 %v819, 0.0
        %v852 = vpack.c.bf16 %v820, %v820
        %v853 = vpack.c.bf16 %v821, %v821
        %v854 = vpack.c.bf16 %v822, %v822
        %v855 = vpack.c.bf16 %v823, %v823
        %v856 = vpack.c.bf16 %v824, %v824
        %v857 = vpack.c.bf16 %v825, %v825
        %v858 = vpack.c.bf16 %v826, %v826
        %v859 = vpack.c.bf16 %v827, %v827
        %v860 = vpack.c.bf16 %v828, %v828
        %v861 = vpack.c.bf16 %v829, %v829
        %v862 = vpack.c.bf16 %v830, %v830
        %v863 = vpack.c.bf16 %v831, %v831
        %v864 = vpack.c.bf16 %v832, %v832
        %v865 = vpack.c.bf16 %v833, %v833
        %v866 = vpack.c.bf16 %v834, %v834
        %v867 = vpack.c.bf16 %v835, %v835
        %v868 = vpack.c.bf16 %v836, %v836
        %v869 = vpack.c.bf16 %v837, %v837
        %v870 = vpack.c.bf16 %v838, %v838
        %v871 = vpack.c.bf16 %v839, %v839
        %v872 = vpack.c.bf16 %v840, %v840
        %v873 = vpack.c.bf16 %v841, %v841
        %v874 = vpack.c.bf16 %v842, %v842
        %v875 = vpack.c.bf16 %v843, %v843
        %v876 = vpack.c.bf16 %v844, %v844
        %v877 = vpack.c.bf16 %v845, %v845
        %v878 = vpack.c.bf16 %v846, %v846
        %v879 = vpack.c.bf16 %v847, %v847
        %v880 = vpack.c.bf16 %v848, %v848
        %v881 = vpack.c.bf16 %v849, %v849
        %v882 = vpack.c.bf16 %v850, %v850
        %v883 = vpack.c.bf16 %v851, %v851
        %884 = vst [vmem:[%s298] sm:$0xf] %v852
        %885 = vst [vmem:[%s298 + $0x4] sm:$0xf] %v853
        %886 = vst [vmem:[%s298 + $0x8] sm:$0xf] %v854
        %887 = vst [vmem:[%s298 + $0xc] sm:$0xf] %v855
        %888 = vst [vmem:[%s298 + $0x10] sm:$0xf] %v856
        %889 = vst [vmem:[%s298 + $0x14] sm:$0xf] %v857
        %890 = vst [vmem:[%s298 + $0x18] sm:$0xf] %v858
        %891 = vst [vmem:[%s298 + $0x1c] sm:$0xf] %v859
        %892 = vst [vmem:[%s298 + $0x20] sm:$0xf] %v860
        %893 = vst [vmem:[%s298 + $0x24] sm:$0xf] %v861
        %894 = vst [vmem:[%s298 + $0x28] sm:$0xf] %v862
        %895 = vst [vmem:[%s298 + $0x2c] sm:$0xf] %v863
        %896 = vst [vmem:[%s298 + $0x30] sm:$0xf] %v864
        %897 = vst [vmem:[%s298 + $0x34] sm:$0xf] %v865
        %898 = vst [vmem:[%s298 + $0x38] sm:$0xf] %v866
        %899 = vst [vmem:[%s298 + $0x3c] sm:$0xf] %v867
        %900 = vst [vmem:[%s298 + $0x40] sm:$0xf] %v868
        %901 = vst [vmem:[%s298 + $0x44] sm:$0xf] %v869
        %902 = vst [vmem:[%s298 + $0x48] sm:$0xf] %v870
        %903 = vst [vmem:[%s298 + $0x4c] sm:$0xf] %v871
        %904 = vst [vmem:[%s298 + $0x50] sm:$0xf] %v872
        %905 = vst [vmem:[%s298 + $0x54] sm:$0xf] %v873
        %906 = vst [vmem:[%s298 + $0x58] sm:$0xf] %v874
        %907 = vst [vmem:[%s298 + $0x5c] sm:$0xf] %v875
        %908 = vst [vmem:[%s298 + $0x60] sm:$0xf] %v876
        %909 = vst [vmem:[%s298 + $0x64] sm:$0xf] %v877
        %910 = vst [vmem:[%s298 + $0x68] sm:$0xf] %v878
        %911 = vst [vmem:[%s298 + $0x6c] sm:$0xf] %v879
        %912 = vst [vmem:[%s298 + $0x70] sm:$0xf] %v880
        %913 = vst [vmem:[%s298 + $0x74] sm:$0xf] %v881
        %914 = vst [vmem:[%s298 + $0x78] sm:$0xf] %v882
        %915 = vst [vmem:[%s298 + $0x7c] sm:$0xf] %v883
      $region44: #{_lambda_.7} parent=35 // pred_fallthru
        _
      %s916 = smul.u32 32, %s20
      %p917 = scmp.lt.s32.totalorder %s916, 63
      %s918 = scalar_select %p917, %s916, 63
      %p919 = scmp.lt.s32.totalorder %s21, 0
      %s920 = scalar_select %p919, %s21, 0
      %s921 = sadd.s32 %s920, %s918
      %s922 = smul.addr %s921, 4
      %s923 = scalar_lea.vmem %s4, %s922
      // Predicated region
      $region45: #{_lambda_.7} parent=35 // pred_check
        %p924 = pneg %p162
      $region46: #{_lambda_.7} parent=35 // pred_check_branch
        %926 = sbr.rel (%p924) target = $region48
      $region47: #{_lambda_.7} parent=35 // pred_region
        %s927 = smul.u32 32, %s20
      $region48: #{_lambda_.7} parent=35 // pred_fallthru
        _
    $region36: #{_lambda_.7} parent=5 // pred_fallthru
      _
    %p928 = scmp.le.s32.totalorder 2, %s10
    // Predicated region
    $region49: #{_lambda_.7} parent=5 // pred_check
      %p929 = pneg %p928
    $region50: #{_lambda_.7} parent=5 // pred_check_branch
      %931 = sbr.rel (%p929) target = $region52
    $region51: #{_lambda_.7} parent=5 // pred_region
      %s932 = ssub.s32 %s10, 2
      // Predicated region
      $region53: #{_lambda_.7} parent=51 // pred_check
        %p933 = pneg %p168
      $region54: #{_lambda_.7} parent=51 // pred_check_branch
        %935 = sbr.rel (%p933) target = $region56
      $region55: #{_lambda_.7} parent=51 // pred_region
        %s936 = smul.u32 32, %s23
        %p937 = scmp.lt.s32.totalorder %s936, 63
        %s938 = scalar_select %p937, %s936, 63
        %p939 = scmp.lt.s32.totalorder %s24, 0
        %s940 = scalar_select %p939, %s24, 0
        %s941 = sadd.s32 %s940, %s938
        %s942 = smul.addr %s941, 4
        %s943 = scalar_lea.vmem %s4, %s942
      $region56: #{_lambda_.7} parent=51 // pred_fallthru
        _
    $region52: #{_lambda_.7} parent=5 // pred_fallthru
      _
  $region6: #{_lambda_.7} parent=0 // loop_footer
    %s14 = sadd.s32 1, %s10
  $region7: #{_lambda_.7} parent=0 // loop_footer_branch
    %9 = sbr.rel target = $region3
  $region8: #{_lambda_.7} parent=0 // loop_exit
    _

// kernel: _lambda_.8
$region0: #{_lambda_.8}
  #allocation0 [shape = 'u32[]', space=smem, size = 0x4, offset = 0x4, fixed_abs, tag = 'smem constant byte address 0x4 - core index']
  #allocation1 [shape = 'u32[72,128]{1,0:T(1,128)}', space=vmem, size = 0x9000, scoped, tag = 'internal scratch']
  #allocation2 [shape = 'f32[128,128]{1,0:T(8,128)}', space=vmem, size = 0x10000, scoped, tag = 'scratch operand']
  %s0 = inlined_call_operand.vmem [shape: bf16[128,1152], index: 0, kind: input, shape index: {}]
  %s1 = inlined_call_operand.vmem [shape: bf16[1152,128], index: 1, kind: input, shape index: {}]
  %s2 = inlined_call_operand.vmem [shape: f32[1,128], index: 2, kind: input, shape index: {}]
  %s3 = inlined_call_operand.vmem [shape: f32[1,128], index: 3, kind: input, shape index: {}]
  %s4 = inlined_call_operand.vmem [shape: bf16[128,128], index: 4, kind: output, shape index: {}]
  %s5 = sld [smem:[#allocation0]]
  $region98: #{_lambda_.8} parent=0
    _
  %s7 = ssub.s32 1, %s5
  %s8 = scalar_select 0, %s7, %s5
  $region1: #{_lambda_.8} parent=0
    #allocation3 [shape = 'u8[65536]{0}', space=vmem, size = 0x10000, scoped, tag = 'input window, operand 0']
    loop: start=0, step=1, limit=11
    $region2: #{_lambda_.8} parent=1 // loop_pre_header
      _
    $region3: #{_lambda_.8} parent=1 // loop_header
      %s10 = sphi 0, %s14
      %p11 = scmp.ge.s32.totalorder %s10, 11
      %s17 = sphi 0, %s36
      %s18 = sphi 0, %s32
      %s19 = sphi 0, %s28
      %s20 = sphi 0, %s17
      %s21 = sphi 0, %s18
      %s22 = sphi 0, %s19
      %s23 = sphi 0, %s20
      %s24 = sphi 0, %s21
      %s25 = sphi 0, %s22
      %s41 = sphi 0, %s43
      %s44 = sphi 0, %s41
      %s45 = sphi 0, %s44
      %s61 = sphi 0, %s45
      %s69 = sphi 0, %s71
      %s72 = sphi 0, %s69
      %s73 = sphi 0, %s72
      %s89 = sphi 0, %s73
      %s95 = sphi 0, %s97
      %s98 = sphi 0, %s95
      %s99 = sphi 0, %s98
      %s115 = sphi 0, %s99
      %s121 = sphi 0, %s123
      %s124 = sphi 0, %s121
      %s125 = sphi 0, %s124
      %s141 = sphi 0, %s125
      %s149 = sphi 0, %s151
      %s152 = sphi 0, %s149
      %s153 = sphi 0, %s152
      %s169 = sphi 0, %s153
    $region4: #{_lambda_.8} parent=1 // loop_header_branch
      %13 = sbr.rel (%p11) target = $region8
    $region5: #{_lambda_.8} parent=1 // loop_body
      %s15 = ssub.s32 %s10, 1
      %s16 = ssub.s32 %s10, 2
      %s26 = sadd.s32 1, %s19
      %p27 = scmp.ge.s32.totalorder %s26, 9
      %s28 = scalar_select %p27, 0, %s26
      %s29 = sadd.s32 1, %s18
      %s30 = scalar_select %p27, %s29, %s18
      %p31 = scmp.ge.s32.totalorder %s30, 1
      %s32 = scalar_select %p31, 0, %s30
      %s33 = sadd.s32 1, %s17
      %s34 = scalar_select %p31, %s33, %s17
      %p35 = scmp.ge.s32.totalorder %s34, 1
      %s36 = scalar_select %p35, 0, %s34
      %s37 = ssub.s32 %s17, %s36
      %s38 = ssub.s32 %s19, %s28
      %s39 = sor.u32 %s37, %s38
      %p40 = scmp.eq.s32.totalorder %s39, 0
      %s42 = sadd.s32 %s41, 1
      %s43 = scalar_select %p40, %s41, %s42
      %p46 = pneg %p40
      %p47 = scmp.eq.s32.totalorder %s10, 8
      %p48 = por %p46, %p47
      %p49 = scmp.ne.s32.totalorder %s41, %s44
      %p50 = scmp.eq.s32.totalorder %s10, 0
      %p51 = por %p49, %p50
      %p52 = scmp.ne.s32.totalorder %s41, %s44
      %p53 = scmp.eq.s32.totalorder %s15, 8
      %p54 = por %p52, %p53
      %p55 = scmp.ne.s32.totalorder %s44, %s45
      %p56 = scmp.eq.s32.totalorder %s15, 0
      %p57 = por %p55, %p56
      %p58 = scmp.ne.s32.totalorder %s44, %s45
      %p59 = scmp.eq.s32.totalorder %s16, 8
      %p60 = por %p58, %p59
      %p62 = scmp.ne.s32.totalorder %s45, %s61
      %p63 = scmp.eq.s32.totalorder %s16, 0
      %p64 = por %p62, %p63
      %s65 = ssub.s32 %s19, %s28
      %s66 = ssub.s32 %s18, %s32
      %s67 = sor.u32 %s65, %s66
      %p68 = scmp.eq.s32.totalorder %s67, 0
      %s70 = sadd.s32 %s69, 1
      %s71 = scalar_select %p68, %s69, %s70
      %p74 = pneg %p68
      %p75 = scmp.eq.s32.totalorder %s10, 8
      %p76 = por %p74, %p75
      %p77 = scmp.ne.s32.totalorder %s69, %s72
      %p78 = scmp.eq.s32.totalorder %s10, 0
      %p79 = por %p77, %p78
      %p80 = scmp.ne.s32.totalorder %s69, %s72
      %p81 = scmp.eq.s32.totalorder %s15, 8
      %p82 = por %p80, %p81
      %p83 = scmp.ne.s32.totalorder %s72, %s73
      %p84 = scmp.eq.s32.totalorder %s15, 0
      %p85 = por %p83, %p84
      %p86 = scmp.ne.s32.totalorder %s72, %s73
      %p87 = scmp.eq.s32.totalorder %s16, 8
      %p88 = por %p86, %p87
      %p90 = scmp.ne.s32.totalorder %s73, %s89
      %p91 = scmp.eq.s32.totalorder %s16, 0
      %p92 = por %p90, %p91
      %s93 = ssub.s32 %s18, %s32
      %p94 = scmp.eq.s32.totalorder %s93, 0
      %s96 = sadd.s32 %s95, 1
      %s97 = scalar_select %p94, %s95, %s96
      %p100 = pneg %p94
      %p101 = scmp.eq.s32.totalorder %s10, 8
      %p102 = por %p100, %p101
      %p103 = scmp.ne.s32.totalorder %s95, %s98
      %p104 = scmp.eq.s32.totalorder %s10, 0
      %p105 = por %p103, %p104
      %p106 = scmp.ne.s32.totalorder %s95, %s98
      %p107 = scmp.eq.s32.totalorder %s15, 8
      %p108 = por %p106, %p107
      %p109 = scmp.ne.s32.totalorder %s98, %s99
      %p110 = scmp.eq.s32.totalorder %s15, 0
      %p111 = por %p109, %p110
      %p112 = scmp.ne.s32.totalorder %s98, %s99
      %p113 = scmp.eq.s32.totalorder %s16, 8
      %p114 = por %p112, %p113
      %p116 = scmp.ne.s32.totalorder %s99, %s115
      %p117 = scmp.eq.s32.totalorder %s16, 0
      %p118 = por %p116, %p117
      %s119 = ssub.s32 %s18, %s32
      %p120 = scmp.eq.s32.totalorder %s119, 0
      %s122 = sadd.s32 %s121, 1
      %s123 = scalar_select %p120, %s121, %s122
      %p126 = pneg %p120
      %p127 = scmp.eq.s32.totalorder %s10, 8
      %p128 = por %p126, %p127
      %p129 = scmp.ne.s32.totalorder %s121, %s124
      %p130 = scmp.eq.s32.totalorder %s10, 0
      %p131 = por %p129, %p130
      %p132 = scmp.ne.s32.totalorder %s121, %s124
      %p133 = scmp.eq.s32.totalorder %s15, 8
      %p134 = por %p132, %p133
      %p135 = scmp.ne.s32.totalorder %s124, %s125
      %p136 = scmp.eq.s32.totalorder %s15, 0
      %p137 = por %p135, %p136
      %p138 = scmp.ne.s32.totalorder %s124, %s125
      %p139 = scmp.eq.s32.totalorder %s16, 8
      %p140 = por %p138, %p139
      %p142 = scmp.ne.s32.totalorder %s125, %s141
      %p143 = scmp.eq.s32.totalorder %s16, 0
      %p144 = por %p142, %p143
      %s145 = ssub.s32 %s17, %s36
      %s146 = ssub.s32 %s18, %s32
      %s147 = sor.u32 %s145, %s146
      %p148 = scmp.eq.s32.totalorder %s147, 0
      %s150 = sadd.s32 %s149, 1
      %s151 = scalar_select %p148, %s149, %s150
      %p154 = pneg %p148
      %p155 = scmp.eq.s32.totalorder %s10, 8
      %p156 = por %p154, %p155
      %p157 = scmp.ne.s32.totalorder %s149, %s152
      %p158 = scmp.eq.s32.totalorder %s10, 0
      %p159 = por %p157, %p158
      %p160 = scmp.ne.s32.totalorder %s149, %s152
      %p161 = scmp.eq.s32.totalorder %s15, 8
      %p162 = por %p160, %p161
      %p163 = scmp.ne.s32.totalorder %s152, %s153
      %p164 = scmp.eq.s32.totalorder %s15, 0
      %p165 = por %p163, %p164
      %p166 = scmp.ne.s32.totalorder %s152, %s153
      %p167 = scmp.eq.s32.totalorder %s16, 8
      %p168 = por %p166, %p167
      %p170 = scmp.ne.s32.totalorder %s153, %s169
      %p171 = scmp.eq.s32.totalorder %s16, 0
      %p172 = por %p170, %p171
      %p173 = scmp.le.s32.totalorder 1, %s10
      %p174 = scmp.lt.s32.totalorder %s10, 10
      %p175 = pnand %p173, %p174
      %p176 = pneg %p175
      // Predicated region
      $region9: #{_lambda_.8} parent=5 // pred_check
        _
      $region10: #{_lambda_.8} parent=5 // pred_check_branch
        %178 = sbr.rel (%p175) target = $region12
      $region11: #{_lambda_.8} parent=5 // pred_region
        %s179 = ssub.s32 %s10, 1
        // Predicated region
        $region13: #{_lambda_.8} parent=11 // pred_check
          %p180 = pneg %p111
        $region14: #{_lambda_.8} parent=11 // pred_check_branch
          %182 = sbr.rel (%p180) target = $region16
        $region15: #{_lambda_.8} parent=11 // pred_region
          %p183 = scmp.lt.s32.totalorder %s21, 0
          %s184 = scalar_select %p183, %s21, 0
          %s185 = scalar_lea.vmem %s2, %s184
        $region16: #{_lambda_.8} parent=11 // pred_fallthru
          _
        // Predicated region
        $region17: #{_lambda_.8} parent=11 // pred_check
          %p186 = pneg %p137
        $region18: #{_lambda_.8} parent=11 // pred_check_branch
          %188 = sbr.rel (%p186) target = $region20
        $region19: #{_lambda_.8} parent=11 // pred_region
          %p189 = scmp.lt.s32.totalorder %s21, 0
          %s190 = scalar_select %p189, %s21, 0
          %s191 = scalar_lea.vmem %s3, %s190
        $region20: #{_lambda_.8} parent=11 // pred_fallthru
          _
      $region12: #{_lambda_.8} parent=5 // pred_fallthru
        _
      %p192 = scmp.lt.s32.totalorder %s10, 9
      // Predicated region
      $region21: #{_lambda_.8} parent=5 // pred_check
        %p193 = pneg %p192
      $region22: #{_lambda_.8} parent=5 // pred_check_branch
        %195 = sbr.rel (%p193) target = $region24
      $region23: #{_lambda_.8} parent=5 // pred_region
        // Predicated region
        $region25: #{_lambda_.8} parent=23 // pred_check
          %p196 = pneg %p51
        $region26: #{_lambda_.8} parent=23 // pred_check_branch
          %198 = sbr.rel (%p196) target = $region28
        $region27: #{_lambda_.8} parent=23 // pred_region
          %s199 = sand.u32 %s41, 1
          %s200 = sand.u32 %s41, 1
          %s201 = smul.addr %s200, 64
          %s202 = scalar_lea.vmem [#allocation3], %s201
          %s203 = smul.u32 16, %s17
          %s204 = smul.addr %s203, 9
          %s205 = sadd.s32 %s19, %s204
          %s206 = smul.addr %s205, 4
          %s207 = scalar_lea.vmem %s0, %s206
          // Predicated region
          $region29: #{_lambda_.8} parent=27 // pred_check
            _
          $region30: #{_lambda_.8} parent=27 // pred_check_branch
            %209 = sbr.rel (0) target = $region32
          $region31: #{_lambda_.8} parent=27 // pred_region
            // Predicated region
            $region33: #{_lambda_.8} parent=31 // pred_check
              _
            $region34: #{_lambda_.8} parent=31 // pred_check_branch
              %211 = sbr.rel target = $region36
            $region35: #{_lambda_.8} parent=31 // pred_region
              // Predicated region
              $region48: #{_lambda_.8} parent=35 // pred_check
                _
              $region49: #{_lambda_.8} parent=35 // pred_check_branch
                %257 = sbr.rel (0) target = $region51
              $region50: #{_lambda_.8} parent=35 // pred_region
                loop: start=0, step=1, limit=1
                $region52: #{_lambda_.8} parent=50 // loop_pre_header
                  _
                $region53: #{_lambda_.8} parent=50 // loop_header
                  %s259 = sphi 0, %s263
                  %p260 = scmp.ge.s32.totalorder %s259, 1
                  %s264 = sphi %s207, %s207
                  %s265 = sphi %s202, %s202
                $region54: #{_lambda_.8} parent=50 // loop_header_branch
                  %262 = sbr.rel (%p260) target = $region58
                $region55: #{_lambda_.8} parent=50 // loop_body
                  _
                $region56: #{_lambda_.8} parent=50 // loop_footer
                  %s263 = sadd.s32 1, %s259
                $region57: #{_lambda_.8} parent=50 // loop_footer_branch
                  %258 = sbr.rel target = $region53
                $region58: #{_lambda_.8} parent=50 // loop_exit
                  _
                %s267 = ssub.s32 16, 1
                loop: start=0, step=1, limit=1
                $region59: #{_lambda_.8} parent=50 // loop_pre_header
                  _
                $region60: #{_lambda_.8} parent=50 // loop_header
                  %s269 = sphi 0, %s273
                  %p270 = scmp.ge.s32.totalorder %s269, 1
                  %s274 = sphi %s207, %s207
                  %s275 = sphi %s202, %s202
                $region61: #{_lambda_.8} parent=50 // loop_header_branch
                  %272 = sbr.rel (%p270) target = $region65
                $region62: #{_lambda_.8} parent=50 // loop_body
                  %v276 = vld [vmem:[%s274] sm:%s267]
                  %277 = vst [vmem:[%s275] sm:%s267] %v276
                  %v278 = vld [vmem:[%s274 + $0x24] sm:%s267]
                  %279 = vst [vmem:[%s275 + $0x4] sm:%s267] %v278
                  %v280 = vld [vmem:[%s274 + $0x48] sm:%s267]
                  %281 = vst [vmem:[%s275 + $0x8] sm:%s267] %v280
                  %v282 = vld [vmem:[%s274 + $0x6c] sm:%s267]
                  %283 = vst [vmem:[%s275 + $0xc] sm:%s267] %v282
                  %v284 = vld [vmem:[%s274 + $0x90] sm:%s267]
                  %285 = vst [vmem:[%s275 + $0x10] sm:%s267] %v284
                  %v286 = vld [vmem:[%s274 + $0xb4] sm:%s267]
                  %287 = vst [vmem:[%s275 + $0x14] sm:%s267] %v286
                  %v288 = vld [vmem:[%s274 + $0xd8] sm:%s267]
                  %289 = vst [vmem:[%s275 + $0x18] sm:%s267] %v288
                  %v290 = vld [vmem:[%s274 + $0xfc] sm:%s267]
                  %291 = vst [vmem:[%s275 + $0x1c] sm:%s267] %v290
                  %v292 = vld [vmem:[%s274 + $0x120] sm:%s267]
                  %293 = vst [vmem:[%s275 + $0x20] sm:%s267] %v292
                  %v294 = vld [vmem:[%s274 + $0x144] sm:%s267]
                  %295 = vst [vmem:[%s275 + $0x24] sm:%s267] %v294
                  %v296 = vld [vmem:[%s274 + $0x168] sm:%s267]
                  %297 = vst [vmem:[%s275 + $0x28] sm:%s267] %v296
                  %v298 = vld [vmem:[%s274 + $0x18c] sm:%s267]
                  %299 = vst [vmem:[%s275 + $0x2c] sm:%s267] %v298
                  %v300 = vld [vmem:[%s274 + $0x1b0] sm:%s267]
                  %301 = vst [vmem:[%s275 + $0x30] sm:%s267] %v300
                  %v302 = vld [vmem:[%s274 + $0x1d4] sm:%s267]
                  %303 = vst [vmem:[%s275 + $0x34] sm:%s267] %v302
                  %v304 = vld [vmem:[%s274 + $0x1f8] sm:%s267]
                  %305 = vst [vmem:[%s275 + $0x38] sm:%s267] %v304
                  %v306 = vld [vmem:[%s274 + $0x21c] sm:%s267]
                  %307 = vst [vmem:[%s275 + $0x3c] sm:%s267] %v306
                $region63: #{_lambda_.8} parent=50 // loop_footer
                  %s273 = sadd.s32 1, %s269
                $region64: #{_lambda_.8} parent=50 // loop_footer_branch
                  %268 = sbr.rel target = $region60
                $region65: #{_lambda_.8} parent=50 // loop_exit
                  _
              $region51: #{_lambda_.8} parent=35 // pred_fallthru
                _
            $region36: #{_lambda_.8} parent=31 // pred_fallthru
              _
            // Predicated region
            $region37: #{_lambda_.8} parent=31 // pred_check
              _
            $region38: #{_lambda_.8} parent=31 // pred_check_branch
              %213 = sbr.rel (0) target = $region40
            $region39: #{_lambda_.8} parent=31 // pred_region
              %s215 = ssub.s32 16, 1
              loop: start=0, step=1, limit=1
              $region41: #{_lambda_.8} parent=39 // loop_pre_header
                _
              $region42: #{_lambda_.8} parent=39 // loop_header
                %s217 = sphi 0, %s221
                %p218 = scmp.ge.s32.totalorder %s217, 1
                %s222 = sphi %s207, %s207
                %s223 = sphi %s202, %s202
              $region43: #{_lambda_.8} parent=39 // loop_header_branch
                %220 = sbr.rel (%p218) target = $region47
              $region44: #{_lambda_.8} parent=39 // loop_body
                %v224 = vld [vmem:[%s222] sm:%s215]
                %225 = vst [vmem:[%s223] sm:%s215] %v224
                %v226 = vld [vmem:[%s222 + $0x24] sm:%s215]
                %227 = vst [vmem:[%s223 + $0x4] sm:%s215] %v226
                %v228 = vld [vmem:[%s222 + $0x48] sm:%s215]
                %229 = vst [vmem:[%s223 + $0x8] sm:%s215] %v228
                %v230 = vld [vmem:[%s222 + $0x6c] sm:%s215]
                %231 = vst [vmem:[%s223 + $0xc] sm:%s215] %v230
                %v232 = vld [vmem:[%s222 + $0x90] sm:%s215]
                %233 = vst [vmem:[%s223 + $0x10] sm:%s215] %v232
                %v234 = vld [vmem:[%s222 + $0xb4] sm:%s215]
                %235 = vst [vmem:[%s223 + $0x14] sm:%s215] %v234
                %v236 = vld [vmem:[%s222 + $0xd8] sm:%s215]
                %237 = vst [vmem:[%s223 + $0x18] sm:%s215] %v236
                %v238 = vld [vmem:[%s222 + $0xfc] sm:%s215]
                %239 = vst [vmem:[%s223 + $0x1c] sm:%s215] %v238
                %v240 = vld [vmem:[%s222 + $0x120] sm:%s215]
                %241 = vst [vmem:[%s223 + $0x20] sm:%s215] %v240
                %v242 = vld [vmem:[%s222 + $0x144] sm:%s215]
                %243 = vst [vmem:[%s223 + $0x24] sm:%s215] %v242
                %v244 = vld [vmem:[%s222 + $0x168] sm:%s215]
                %245 = vst [vmem:[%s223 + $0x28] sm:%s215] %v244
                %v246 = vld [vmem:[%s222 + $0x18c] sm:%s215]
                %247 = vst [vmem:[%s223 + $0x2c] sm:%s215] %v246
                %v248 = vld [vmem:[%s222 + $0x1b0] sm:%s215]
                %249 = vst [vmem:[%s223 + $0x30] sm:%s215] %v248
                %v250 = vld [vmem:[%s222 + $0x1d4] sm:%s215]
                %251 = vst [vmem:[%s223 + $0x34] sm:%s215] %v250
                %v252 = vld [vmem:[%s222 + $0x1f8] sm:%s215]
                %253 = vst [vmem:[%s223 + $0x38] sm:%s215] %v252
                %v254 = vld [vmem:[%s222 + $0x21c] sm:%s215]
                %255 = vst [vmem:[%s223 + $0x3c] sm:%s215] %v254
              $region45: #{_lambda_.8} parent=39 // loop_footer
                %s221 = sadd.s32 1, %s217
              $region46: #{_lambda_.8} parent=39 // loop_footer_branch
                %216 = sbr.rel target = $region42
              $region47: #{_lambda_.8} parent=39 // loop_exit
                _
            $region40: #{_lambda_.8} parent=31 // pred_fallthru
              _
          $region32: #{_lambda_.8} parent=27 // pred_fallthru
            _
          %308 = vnop
        $region28: #{_lambda_.8} parent=23 // pred_fallthru
          _
        // Predicated region
        $region66: #{_lambda_.8} parent=23 // pred_check
          %p309 = pneg %p79
        $region67: #{_lambda_.8} parent=23 // pred_check_branch
          %311 = sbr.rel (%p309) target = $region69
        $region68: #{_lambda_.8} parent=23 // pred_region
          %s312 = smul.u32 16, %s19
          %p313 = scmp.lt.s32.totalorder %s312, 143
          %s314 = scalar_select %p313, %s312, 143
          %p315 = scmp.lt.s32.totalorder %s18, 0
          %s316 = scalar_select %p315, %s18, 0
          %s317 = sadd.s32 %s316, %s314
          %s318 = smul.addr %s317, 4
          %s319 = scalar_lea.vmem %s1, %s318
          %s320 = smul.u32 16, %s19
        $region69: #{_lambda_.8} parent=23 // pred_fallthru
          _
      $region24: #{_lambda_.8} parent=5 // pred_fallthru
        _
      %p321 = scmp.le.s32.totalorder 1, %s10
      %p322 = scmp.lt.s32.totalorder %s10, 10
      %p323 = pnand %p321, %p322
      %p324 = pneg %p323
      // Predicated region
      $region70: #{_lambda_.8} parent=5 // pred_check
        _
      $region71: #{_lambda_.8} parent=5 // pred_check_branch
        %326 = sbr.rel (%p323) target = $region73
      $region72: #{_lambda_.8} parent=5 // pred_region
        %s327 = ssub.s32 %s10, 1
        %s328 = sand.u32 %s44, 1
        %s329 = sand.u32 %s44, 1
        %s330 = smul.addr %s329, 64
        %s331 = scalar_lea.vmem [#allocation3], %s330
        // Predicated region
        $region74: #{_lambda_.8} parent=72 // pred_check
          %p332 = pneg %p57
        $region75: #{_lambda_.8} parent=72 // pred_check_branch
          %334 = sbr.rel (%p332) target = $region77
        $region76: #{_lambda_.8} parent=72 // pred_region
          _
        $region77: #{_lambda_.8} parent=72 // pred_fallthru
          _
        %s335 = sand.u32 %s44, 1
        %s336 = sand.u32 %s44, 1
        %s337 = smul.addr %s336, 64
        %s338 = scalar_lea.vmem [#allocation3], %s337
        %p339 = pneg %p57
        %p340 = pneg %p54
        %s341 = smul.u32 16, %s22
        %p342 = scmp.lt.s32.totalorder %s341, 143
        %s343 = scalar_select %p342, %s341, 143
        %p344 = scmp.lt.s32.totalorder %s21, 0
        %s345 = scalar_select %p344, %s21, 0
        %s346 = sadd.s32 %s345, %s343
        %s347 = smul.addr %s346, 4
        %s348 = scalar_lea.vmem %s1, %s347
        %p349 = pneg %p85
        %p350 = pneg %p82
        %p351 = scmp.lt.s32.totalorder %s21, 0
        %s352 = scalar_select %p351, %s21, 0
        %s353 = scalar_lea.vmem %s2, %s352
        %p354 = pneg %p111
        %p355 = pneg %p108
        %p356 = scmp.lt.s32.totalorder %s21, 0
        %s357 = scalar_select %p356, %s21, 0
        %s358 = scalar_lea.vmem %s3, %s357
        %p359 = pneg %p137
        %p360 = pneg %p134
        %p361 = pneg %p165
        %p362 = pneg %p162
        %s363 = smul.u32 16, %s20
        %p364 = scmp.lt.s32.totalorder %s363, 15
        %s365 = scalar_select %p364, %s363, 15
        %p366 = scmp.lt.s32.totalorder %s21, 0
        %s367 = scalar_select %p366, %s21, 0
        %s368 = sadd.s32 %s367, %s365
        %s369 = smul.addr %s368, 4
        %s370 = scalar_lea.vmem %s4, %s369
        %s371 = smul.u32 16, %s20
        %s372 = smul.u32 16, %s22
        %p373 = scmp.lt.s32.totalorder %s372, 143
        %s374 = scalar_select %p373, %s372, 143
        %p375 = scmp.lt.s32.totalorder %s21, 0
        %s376 = scalar_select %p375, %s21, 0
        %s377 = sadd.s32 %s376, %s374
        %s378 = smul.addr %s377, 4
        %s379 = scalar_lea.vmem %s1, %s378
        %s380 = smul.u32 16, %s22
        %p381 = scmp.lt.s32.totalorder %s21, 0
        %s382 = scalar_select %p381, %s21, 0
        %s383 = scalar_lea.vmem %s2, %s382
        %p384 = scmp.lt.s32.totalorder %s21, 0
        %s385 = scalar_select %p384, %s21, 0
        %s386 = scalar_lea.vmem %s3, %s385
        %s387 = smul.u32 16, %s20
        %p388 = scmp.lt.s32.totalorder %s387, 15
        %s389 = scalar_select %p388, %s387, 15
        %p390 = scmp.lt.s32.totalorder %s21, 0
        %s391 = scalar_select %p390, %s21, 0
        %s392 = sadd.s32 %s391, %s389
        %s393 = smul.addr %s392, 4
        %s394 = scalar_lea.vmem %s4, %s393
        %s395 = smul.u32 16, %s20
        %p396 = scmp.eq.s32.totalorder %s22, 0
        // Predicated region
        $region78: #{_lambda_.8} parent=72 // pred_check
          %p397 = pneg %p396
        $region79: #{_lambda_.8} parent=72 // pred_check_branch
          %399 = sbr.rel (%p397) target = $region81
        $region80: #{_lambda_.8} parent=72 // pred_region
          %400 = vst [vmem:[#allocation2] sm:$0xff] 0.0
          %401 = vst [vmem:[#allocation2 + $0x8] sm:$0xff] 0.0
          %402 = vst [vmem:[#allocation2 + $0x10] sm:$0xff] 0.0
          %403 = vst [vmem:[#allocation2 + $0x18] sm:$0xff] 0.0
          %404 = vst [vmem:[#allocation2 + $0x20] sm:$0xff] 0.0
          %405 = vst [vmem:[#allocation2 + $0x28] sm:$0xff] 0.0
          %406 = vst [vmem:[#allocation2 + $0x30] sm:$0xff] 0.0
          %407 = vst [vmem:[#allocation2 + $0x38] sm:$0xff] 0.0
          %408 = vst [vmem:[#allocation2 + $0x40] sm:$0xff] 0.0
          %409 = vst [vmem:[#allocation2 + $0x48] sm:$0xff] 0.0
          %410 = vst [vmem:[#allocation2 + $0x50] sm:$0xff] 0.0
          %411 = vst [vmem:[#allocation2 + $0x58] sm:$0xff] 0.0
          %412 = vst [vmem:[#allocation2 + $0x60] sm:$0xff] 0.0
          %413 = vst [vmem:[#allocation2 + $0x68] sm:$0xff] 0.0
          %414 = vst [vmem:[#allocation2 + $0x70] sm:$0xff] 0.0
          %415 = vst [vmem:[#allocation2 + $0x78] sm:$0xff] 0.0
        $region81: #{_lambda_.8} parent=72 // pred_fallthru
          _
        %v416 = vld [vmem:[#allocation2] sm:$0xff]
        %v417 = vld [vmem:[#allocation2 + $0x8] sm:$0xff]
        %v418 = vld [vmem:[#allocation2 + $0x10] sm:$0xff]
        %v419 = vld [vmem:[#allocation2 + $0x18] sm:$0xff]
        %v420 = vld [vmem:[#allocation2 + $0x20] sm:$0xff]
        %v421 = vld [vmem:[#allocation2 + $0x28] sm:$0xff]
        %v422 = vld [vmem:[#allocation2 + $0x30] sm:$0xff]
        %v423 = vld [vmem:[#allocation2 + $0x38] sm:$0xff]
        %v424 = vld [vmem:[#allocation2 + $0x40] sm:$0xff]
        %v425 = vld [vmem:[#allocation2 + $0x48] sm:$0xff]
        %v426 = vld [vmem:[#allocation2 + $0x50] sm:$0xff]
        %v427 = vld [vmem:[#allocation2 + $0x58] sm:$0xff]
        %v428 = vld [vmem:[#allocation2 + $0x60] sm:$0xff]
        %v429 = vld [vmem:[#allocation2 + $0x68] sm:$0xff]
        %v430 = vld [vmem:[#allocation2 + $0x70] sm:$0xff]
        %v431 = vld [vmem:[#allocation2 + $0x78] sm:$0xff]
        %v432 = vld [vmem:[%s331] sm:$0xf]
        %v433 = vld [vmem:[%s331 + $0x4] sm:$0xf]
        %v434 = vld [vmem:[%s331 + $0x8] sm:$0xf]
        %v435 = vld [vmem:[%s331 + $0xc] sm:$0xf]
        %v436 = vld [vmem:[%s331 + $0x10] sm:$0xf]
        %v437 = vld [vmem:[%s331 + $0x14] sm:$0xf]
        %v438 = vld [vmem:[%s331 + $0x18] sm:$0xf]
        %v439 = vld [vmem:[%s331 + $0x1c] sm:$0xf]
        %v440 = vld [vmem:[%s331 + $0x20] sm:$0xf]
        %v441 = vld [vmem:[%s331 + $0x24] sm:$0xf]
        %v442 = vld [vmem:[%s331 + $0x28] sm:$0xf]
        %v443 = vld [vmem:[%s331 + $0x2c] sm:$0xf]
        %v444 = vld [vmem:[%s331 + $0x30] sm:$0xf]
        %v445 = vld [vmem:[%s331 + $0x34] sm:$0xf]
        %v446 = vld [vmem:[%s331 + $0x38] sm:$0xf]
        %v447 = vld [vmem:[%s331 + $0x3c] sm:$0xf]
        %v448 = vld [vmem:[%s379] sm:$0xf]
        %v449 = vld [vmem:[%s379 + $0x4] sm:$0xf]
        %v450 = vld [vmem:[%s379 + $0x8] sm:$0xf]
        %v451 = vld [vmem:[%s379 + $0xc] sm:$0xf]
        %v452 = vld [vmem:[%s379 + $0x10] sm:$0xf]
        %v453 = vld [vmem:[%s379 + $0x14] sm:$0xf]
        %v454 = vld [vmem:[%s379 + $0x18] sm:$0xf]
        %v455 = vld [vmem:[%s379 + $0x1c] sm:$0xf]
        %v456 = vld [vmem:[%s379 + $0x20] sm:$0xf]
        %v457 = vld [vmem:[%s379 + $0x24] sm:$0xf]
        %v458 = vld [vmem:[%s379 + $0x28] sm:$0xf]
        %v459 = vld [vmem:[%s379 + $0x2c] sm:$0xf]
        %v460 = vld [vmem:[%s379 + $0x30] sm:$0xf]
        %v461 = vld [vmem:[%s379 + $0x34] sm:$0xf]
        %v462 = vld [vmem:[%s379 + $0x38] sm:$0xf]
        %v463 = vld [vmem:[%s379 + $0x3c] sm:$0xf]
        %v480 = vunpack.c.l.b16 %v432
        %v481 = vunpack.c.l.b16 %v433
        %v482 = vunpack.c.l.b16 %v434
        %v483 = vunpack.c.l.b16 %v435
        %v484 = vunpack.c.l.b16 %v436
        %v485 = vunpack.c.l.b16 %v437
        %v486 = vunpack.c.l.b16 %v438
        %v487 = vunpack.c.l.b16 %v439
        %v488 = vunpack.c.l.b16 %v440
        %v489 = vunpack.c.l.b16 %v441
        %v490 = vunpack.c.l.b16 %v442
        %v491 = vunpack.c.l.b16 %v443
        %v492 = vunpack.c.l.b16 %v444
        %v493 = vunpack.c.l.b16 %v445
        %v494 = vunpack.c.l.b16 %v446
        %v495 = vunpack.c.l.b16 %v447
        %v496 = vpack.c.b16 %v481, %v480
        %v497 = vpack.c.b16 %v483, %v482
        %v498 = vpack.c.b16 %v485, %v484
        %v499 = vpack.c.b16 %v487, %v486
        %v500 = vpack.c.b16 %v489, %v488
        %v501 = vpack.c.b16 %v491, %v490
        %v502 = vpack.c.b16 %v493, %v492
        %v503 = vpack.c.b16 %v495, %v494
        %v528 = vunpack.c.l.b16 %v448
        %v529 = vunpack.c.l.b16 %v449
        %v530 = vunpack.c.l.b16 %v450
        %v531 = vunpack.c.l.b16 %v451
        %v532 = vunpack.c.l.b16 %v452
        %v533 = vunpack.c.l.b16 %v453
        %v534 = vunpack.c.l.b16 %v454
        %v535 = vunpack.c.l.b16 %v455
        %v536 = vunpack.c.l.b16 %v456
        %v537 = vunpack.c.l.b16 %v457
        %v538 = vunpack.c.l.b16 %v458
        %v539 = vunpack.c.l.b16 %v459
        %v540 = vunpack.c.l.b16 %v460
        %v541 = vunpack.c.l.b16 %v461
        %v542 = vunpack.c.l.b16 %v462
        %v543 = vunpack.c.l.b16 %v463
        %v544 = vpack.c.b16 %v529, %v528
        %v545 = vpack.c.b16 %v531, %v530
        %v546 = vpack.c.b16 %v533, %v532
        %v547 = vpack.c.b16 %v535, %v534
        %v548 = vpack.c.b16 %v537, %v536
        %v549 = vpack.c.b16 %v539, %v538
        %v550 = vpack.c.b16 %v541, %v540
        %v551 = vpack.c.b16 %v543, %v542
        %560 = vmatpush.bf16.msra.mxu0 %v551
        %561 = vmatpush.bf16.msra.mxu0 %v550
        %562 = vmatpush.bf16.msra.mxu0 %v549
        %563 = vmatpush.bf16.msra.mxu0 %v548
        %564 = vmatpush.bf16.msra.mxu0 %v547
        %565 = vmatpush.bf16.msra.mxu0 %v546
        %566 = vmatpush.bf16.msra.mxu0 %v545
        %567 = vmatpush.bf16.msra.mxu0 %v544
        %568 = vmatmul.bf16.gmra.mxu0 %v496
        %v569 = vpop.f32.mrf.mxu0
        %v570 = vadd.f32 0.0, %v569
        %v571 = vpop.f32.mrf.mxu0
        %v572 = vadd.f32 0.0, %v571
        %573 = vmatmul.bf16.gmra.mxu0 %v497
        %v574 = vpop.f32.mrf.mxu0
        %v575 = vadd.f32 0.0, %v574
        %v576 = vpop.f32.mrf.mxu0
        %v577 = vadd.f32 0.0, %v576
        %578 = vmatmul.bf16.gmra.mxu0 %v498
        %v579 = vpop.f32.mrf.mxu0
        %v580 = vadd.f32 0.0, %v579
        %v581 = vpop.f32.mrf.mxu0
        %v582 = vadd.f32 0.0, %v581
        %583 = vmatmul.bf16.gmra.mxu0 %v499
        %v584 = vpop.f32.mrf.mxu0
        %v585 = vadd.f32 0.0, %v584
        %v586 = vpop.f32.mrf.mxu0
        %v587 = vadd.f32 0.0, %v586
        %588 = vmatmul.bf16.gmra.mxu0 %v500
        %v589 = vpop.f32.mrf.mxu0
        %v590 = vadd.f32 0.0, %v589
        %v591 = vpop.f32.mrf.mxu0
        %v592 = vadd.f32 0.0, %v591
        %593 = vmatmul.bf16.gmra.mxu0 %v501
        %v594 = vpop.f32.mrf.mxu0
        %v595 = vadd.f32 0.0, %v594
        %v596 = vpop.f32.mrf.mxu0
        %v597 = vadd.f32 0.0, %v596
        %598 = vmatmul.bf16.gmra.mxu0 %v502
        %v599 = vpop.f32.mrf.mxu0
        %v600 = vadd.f32 0.0, %v599
        %v601 = vpop.f32.mrf.mxu0
        %v602 = vadd.f32 0.0, %v601
        %603 = vmatmul.bf16.gmra.mxu0 %v503
        %v604 = vpop.f32.mrf.mxu0
        %v605 = vadd.f32 0.0, %v604
        %v606 = vpop.f32.mrf.mxu0
        %v607 = vadd.f32 0.0, %v606
        %608 = vdwg.mxu0
        %v609 = vadd.f32 %v416, %v570
        %v610 = vadd.f32 %v417, %v572
        %v611 = vadd.f32 %v418, %v575
        %v612 = vadd.f32 %v419, %v577
        %v613 = vadd.f32 %v420, %v580
        %v614 = vadd.f32 %v421, %v582
        %v615 = vadd.f32 %v422, %v585
        %v616 = vadd.f32 %v423, %v587
        %v617 = vadd.f32 %v424, %v590
        %v618 = vadd.f32 %v425, %v592
        %v619 = vadd.f32 %v426, %v595
        %v620 = vadd.f32 %v427, %v597
        %v621 = vadd.f32 %v428, %v600
        %v622 = vadd.f32 %v429, %v602
        %v623 = vadd.f32 %v430, %v605
        %v624 = vadd.f32 %v431, %v607
        %625 = vst [vmem:[#allocation2] sm:$0xff] %v609
        %626 = vst [vmem:[#allocation2 + $0x8] sm:$0xff] %v610
        %627 = vst [vmem:[#allocation2 + $0x10] sm:$0xff] %v611
        %628 = vst [vmem:[#allocation2 + $0x18] sm:$0xff] %v612
        %629 = vst [vmem:[#allocation2 + $0x20] sm:$0xff] %v613
        %630 = vst [vmem:[#allocation2 + $0x28] sm:$0xff] %v614
        %631 = vst [vmem:[#allocation2 + $0x30] sm:$0xff] %v615
        %632 = vst [vmem:[#allocation2 + $0x38] sm:$0xff] %v616
        %633 = vst [vmem:[#allocation2 + $0x40] sm:$0xff] %v617
        %634 = vst [vmem:[#allocation2 + $0x48] sm:$0xff] %v618
        %635 = vst [vmem:[#allocation2 + $0x50] sm:$0xff] %v619
        %636 = vst [vmem:[#allocation2 + $0x58] sm:$0xff] %v620
        %637 = vst [vmem:[#allocation2 + $0x60] sm:$0xff] %v621
        %638 = vst [vmem:[#allocation2 + $0x68] sm:$0xff] %v622
        %639 = vst [vmem:[#allocation2 + $0x70] sm:$0xff] %v623
        %640 = vst [vmem:[#allocation2 + $0x78] sm:$0xff] %v624
        %p641 = scmp.eq.s32.totalorder %s22, 8
        // Predicated region
        $region82: #{_lambda_.8} parent=72 // pred_check
          %p642 = pneg %p641
        $region83: #{_lambda_.8} parent=72 // pred_check_branch
          %644 = sbr.rel (%p642) target = $region85
        $region84: #{_lambda_.8} parent=72 // pred_region
          %v645 = vld [vmem:[#allocation2] sm:$0xff]
          %v646 = vld [vmem:[#allocation2 + $0x8] sm:$0xff]
          %v647 = vld [vmem:[#allocation2 + $0x10] sm:$0xff]
          %v648 = vld [vmem:[#allocation2 + $0x18] sm:$0xff]
          %v649 = vld [vmem:[#allocation2 + $0x20] sm:$0xff]
          %v650 = vld [vmem:[#allocation2 + $0x28] sm:$0xff]
          %v651 = vld [vmem:[#allocation2 + $0x30] sm:$0xff]
          %v652 = vld [vmem:[#allocation2 + $0x38] sm:$0xff]
          %v653 = vld [vmem:[#allocation2 + $0x40] sm:$0xff]
          %v654 = vld [vmem:[#allocation2 + $0x48] sm:$0xff]
          %v655 = vld [vmem:[#allocation2 + $0x50] sm:$0xff]
          %v656 = vld [vmem:[#allocation2 + $0x58] sm:$0xff]
          %v657 = vld [vmem:[#allocation2 + $0x60] sm:$0xff]
          %v658 = vld [vmem:[#allocation2 + $0x68] sm:$0xff]
          %v659 = vld [vmem:[#allocation2 + $0x70] sm:$0xff]
          %v660 = vld [vmem:[#allocation2 + $0x78] sm:$0xff]
          %v661 = vld [vmem:[%s383] sm:$0x1]
          %v663 = vperm.slane %v661, 0
          %v665 = vmul.f32 %v645, %v663
          %v666 = vmul.f32 %v646, %v663
          %v667 = vmul.f32 %v647, %v663
          %v668 = vmul.f32 %v648, %v663
          %v669 = vmul.f32 %v649, %v663
          %v670 = vmul.f32 %v650, %v663
          %v671 = vmul.f32 %v651, %v663
          %v672 = vmul.f32 %v652, %v663
          %v673 = vmul.f32 %v653, %v663
          %v674 = vmul.f32 %v654, %v663
          %v675 = vmul.f32 %v655, %v663
          %v676 = vmul.f32 %v656, %v663
          %v677 = vmul.f32 %v657, %v663
          %v678 = vmul.f32 %v658, %v663
          %v679 = vmul.f32 %v659, %v663
          %v680 = vmul.f32 %v660, %v663
          %v681 = vld [vmem:[%s386] sm:$0x1]
          %v683 = vperm.slane %v681, 0
          %v685 = vadd.f32 %v665, %v683
          %v686 = vadd.f32 %v666, %v683
          %v687 = vadd.f32 %v667, %v683
          %v688 = vadd.f32 %v668, %v683
          %v689 = vadd.f32 %v669, %v683
          %v690 = vadd.f32 %v670, %v683
          %v691 = vadd.f32 %v671, %v683
          %v692 = vadd.f32 %v672, %v683
          %v693 = vadd.f32 %v673, %v683
          %v694 = vadd.f32 %v674, %v683
          %v695 = vadd.f32 %v675, %v683
          %v696 = vadd.f32 %v676, %v683
          %v697 = vadd.f32 %v677, %v683
          %v698 = vadd.f32 %v678, %v683
          %v699 = vadd.f32 %v679, %v683
          %v700 = vadd.f32 %v680, %v683
          %v701 = vmax.f32 %v685, 0.0
          %v702 = vmax.f32 %v686, 0.0
          %v703 = vmax.f32 %v687, 0.0
          %v704 = vmax.f32 %v688, 0.0
          %v705 = vmax.f32 %v689, 0.0
          %v706 = vmax.f32 %v690, 0.0
          %v707 = vmax.f32 %v691, 0.0
          %v708 = vmax.f32 %v692, 0.0
          %v709 = vmax.f32 %v693, 0.0
          %v710 = vmax.f32 %v694, 0.0
          %v711 = vmax.f32 %v695, 0.0
          %v712 = vmax.f32 %v696, 0.0
          %v713 = vmax.f32 %v697, 0.0
          %v714 = vmax.f32 %v698, 0.0
          %v715 = vmax.f32 %v699, 0.0
          %v716 = vmax.f32 %v700, 0.0
          %v717 = vpack.c.bf16 %v701, %v701
          %v718 = vpack.c.bf16 %v702, %v702
          %v719 = vpack.c.bf16 %v703, %v703
          %v720 = vpack.c.bf16 %v704, %v704
          %v721 = vpack.c.bf16 %v705, %v705
          %v722 = vpack.c.bf16 %v706, %v706
          %v723 = vpack.c.bf16 %v707, %v707
          %v724 = vpack.c.bf16 %v708, %v708
          %v725 = vpack.c.bf16 %v709, %v709
          %v726 = vpack.c.bf16 %v710, %v710
          %v727 = vpack.c.bf16 %v711, %v711
          %v728 = vpack.c.bf16 %v712, %v712
          %v729 = vpack.c.bf16 %v713, %v713
          %v730 = vpack.c.bf16 %v714, %v714
          %v731 = vpack.c.bf16 %v715, %v715
          %v732 = vpack.c.bf16 %v716, %v716
          %733 = vst [vmem:[%s394] sm:$0xf] %v717
          %734 = vst [vmem:[%s394 + $0x4] sm:$0xf] %v718
          %735 = vst [vmem:[%s394 + $0x8] sm:$0xf] %v719
          %736 = vst [vmem:[%s394 + $0xc] sm:$0xf] %v720
          %737 = vst [vmem:[%s394 + $0x10] sm:$0xf] %v721
          %738 = vst [vmem:[%s394 + $0x14] sm:$0xf] %v722
          %739 = vst [vmem:[%s394 + $0x18] sm:$0xf] %v723
          %740 = vst [vmem:[%s394 + $0x1c] sm:$0xf] %v724
          %741 = vst [vmem:[%s394 + $0x20] sm:$0xf] %v725
          %742 = vst [vmem:[%s394 + $0x24] sm:$0xf] %v726
          %743 = vst [vmem:[%s394 + $0x28] sm:$0xf] %v727
          %744 = vst [vmem:[%s394 + $0x2c] sm:$0xf] %v728
          %745 = vst [vmem:[%s394 + $0x30] sm:$0xf] %v729
          %746 = vst [vmem:[%s394 + $0x34] sm:$0xf] %v730
          %747 = vst [vmem:[%s394 + $0x38] sm:$0xf] %v731
          %748 = vst [vmem:[%s394 + $0x3c] sm:$0xf] %v732
        $region85: #{_lambda_.8} parent=72 // pred_fallthru
          _
        %s749 = smul.u32 16, %s20
        %p750 = scmp.lt.s32.totalorder %s749, 15
        %s751 = scalar_select %p750, %s749, 15
        %p752 = scmp.lt.s32.totalorder %s21, 0
        %s753 = scalar_select %p752, %s21, 0
        %s754 = sadd.s32 %s753, %s751
        %s755 = smul.addr %s754, 4
        %s756 = scalar_lea.vmem %s4, %s755
        // Predicated region
        $region86: #{_lambda_.8} parent=72 // pred_check
          %p757 = pneg %p162
        $region87: #{_lambda_.8} parent=72 // pred_check_branch
          %759 = sbr.rel (%p757) target = $region89
        $region88: #{_lambda_.8} parent=72 // pred_region
          %s760 = smul.u32 16, %s20
        $region89: #{_lambda_.8} parent=72 // pred_fallthru
          _
        // Predicated region
        $region90: #{_lambda_.8} parent=72 // pred_check
          %p761 = pneg %p162
        $region91: #{_lambda_.8} parent=72 // pred_check_branch
          %763 = sbr.rel (%p761) target = $region93
        $region92: #{_lambda_.8} parent=72 // pred_region
          %s764 = smul.u32 16, %s20
          %p765 = scmp.lt.s32.totalorder %s764, 15
          %s766 = scalar_select %p765, %s764, 15
          %p767 = scmp.lt.s32.totalorder %s21, 0
          %s768 = scalar_select %p767, %s21, 0
          %s769 = sadd.s32 %s768, %s766
          %s770 = smul.addr %s769, 4
          %s771 = scalar_lea.vmem %s4, %s770
        $region93: #{_lambda_.8} parent=72 // pred_fallthru
          _
      $region73: #{_lambda_.8} parent=5 // pred_fallthru
        _
      %p772 = scmp.le.s32.totalorder 2, %s10
      // Predicated region
      $region94: #{_lambda_.8} parent=5 // pred_check
        %p773 = pneg %p772
      $region95: #{_lambda_.8} parent=5 // pred_check_branch
        %775 = sbr.rel (%p773) target = $region97
      $region96: #{_lambda_.8} parent=5 // pred_region
        %s776 = ssub.s32 %s10, 2
      $region97: #{_lambda_.8} parent=5 // pred_fallthru
        _
    $region6: #{_lambda_.8} parent=1 // loop_footer
      %s14 = sadd.s32 1, %s10
    $region7: #{_lambda_.8} parent=1 // loop_footer_branch
      %9 = sbr.rel target = $region3
    $region8: #{_lambda_.8} parent=1 // loop_exit
      _

// kernel: _lambda_.11
$region0: #{_lambda_.11}
  #allocation0 [shape = 'u32[]', space=smem, size = 0x4, offset = 0x4, fixed_abs, tag = 'smem constant byte address 0x4 - core index']
  #allocation1 [shape = 'u32[72,128]{1,0:T(1,128)}', space=vmem, size = 0x9000, scoped, tag = 'internal scratch']
  #allocation2 [shape = 'f32[128,128]{1,0:T(8,128)}', space=vmem, size = 0x10000, scoped, tag = 'scratch operand']
  %s0 = inlined_call_operand.vmem [shape: bf16[128,128], index: 0, kind: input, shape index: {}]
  %s1 = inlined_call_operand.vmem [shape: bf16[128,128], index: 1, kind: input, shape index: {}]
  %s2 = inlined_call_operand.vmem [shape: f32[1,128], index: 2, kind: input, shape index: {}]
  %s3 = inlined_call_operand.vmem [shape: f32[1,128], index: 3, kind: input, shape index: {}]
  %s4 = inlined_call_operand.vmem [shape: bf16[128,128], index: 4, kind: output, shape index: {}]
  %s5 = sld [smem:[#allocation0]]
  $region34: #{_lambda_.11} parent=0
    _
  %s7 = ssub.s32 1, %s5
  %s8 = scalar_select 0, %s7, %s5
  // Predicated region
  $region2: #{_lambda_.11} parent=0 // pred_check
    _
  $region3: #{_lambda_.11} parent=0 // pred_check_branch
    %10 = sbr.rel (0) target = $region5
  $region4: #{_lambda_.11} parent=0 // pred_region
    _
  $region5: #{_lambda_.11} parent=0 // pred_fallthru
    _
  // Predicated region
  $region6: #{_lambda_.11} parent=0 // pred_check
    _
  $region7: #{_lambda_.11} parent=0 // pred_check_branch
    %12 = sbr.rel (0) target = $region9
  $region8: #{_lambda_.11} parent=0 // pred_region
    _
  $region9: #{_lambda_.11} parent=0 // pred_fallthru
    _
  // Predicated region
  $region10: #{_lambda_.11} parent=0 // pred_check
    _
  $region11: #{_lambda_.11} parent=0 // pred_check_branch
    %14 = sbr.rel (0) target = $region13
  $region12: #{_lambda_.11} parent=0 // pred_region
    _
  $region13: #{_lambda_.11} parent=0 // pred_fallthru
    _
  // Predicated region
  $region14: #{_lambda_.11} parent=0 // pred_check
    _
  $region15: #{_lambda_.11} parent=0 // pred_check_branch
    %16 = sbr.rel (0) target = $region17
  $region16: #{_lambda_.11} parent=0 // pred_region
    _
  $region17: #{_lambda_.11} parent=0 // pred_fallthru
    _
  %p17 = scmp.eq.s32.totalorder 0, 0
  // Predicated region
  $region18: #{_lambda_.11} parent=0 // pred_check
    %p18 = pneg %p17
  $region19: #{_lambda_.11} parent=0 // pred_check_branch
    %20 = sbr.rel (%p18) target = $region21
  $region20: #{_lambda_.11} parent=0 // pred_region
    %21 = vst [vmem:[#allocation2] sm:$0xff] 0.0
    %22 = vst [vmem:[#allocation2 + $0x8] sm:$0xff] 0.0
    %23 = vst [vmem:[#allocation2 + $0x10] sm:$0xff] 0.0
    %24 = vst [vmem:[#allocation2 + $0x18] sm:$0xff] 0.0
    %25 = vst [vmem:[#allocation2 + $0x20] sm:$0xff] 0.0
    %26 = vst [vmem:[#allocation2 + $0x28] sm:$0xff] 0.0
    %27 = vst [vmem:[#allocation2 + $0x30] sm:$0xff] 0.0
    %28 = vst [vmem:[#allocation2 + $0x38] sm:$0xff] 0.0
    %29 = vst [vmem:[#allocation2 + $0x40] sm:$0xff] 0.0
    %30 = vst [vmem:[#allocation2 + $0x48] sm:$0xff] 0.0
    %31 = vst [vmem:[#allocation2 + $0x50] sm:$0xff] 0.0
    %32 = vst [vmem:[#allocation2 + $0x58] sm:$0xff] 0.0
    %33 = vst [vmem:[#allocation2 + $0x60] sm:$0xff] 0.0
    %34 = vst [vmem:[#allocation2 + $0x68] sm:$0xff] 0.0
    %35 = vst [vmem:[#allocation2 + $0x70] sm:$0xff] 0.0
    %36 = vst [vmem:[#allocation2 + $0x78] sm:$0xff] 0.0
  $region21: #{_lambda_.11} parent=0 // pred_fallthru
    _
  %v37 = vld [vmem:[#allocation2] sm:$0xff]
  %v38 = vld [vmem:[#allocation2 + $0x8] sm:$0xff]
  %v39 = vld [vmem:[#allocation2 + $0x10] sm:$0xff]
  %v40 = vld [vmem:[#allocation2 + $0x18] sm:$0xff]
  %v41 = vld [vmem:[#allocation2 + $0x20] sm:$0xff]
  %v42 = vld [vmem:[#allocation2 + $0x28] sm:$0xff]
  %v43 = vld [vmem:[#allocation2 + $0x30] sm:$0xff]
  %v44 = vld [vmem:[#allocation2 + $0x38] sm:$0xff]
  %v45 = vld [vmem:[#allocation2 + $0x40] sm:$0xff]
  %v46 = vld [vmem:[#allocation2 + $0x48] sm:$0xff]
  %v47 = vld [vmem:[#allocation2 + $0x50] sm:$0xff]
  %v48 = vld [vmem:[#allocation2 + $0x58] sm:$0xff]
  %v49 = vld [vmem:[#allocation2 + $0x60] sm:$0xff]
  %v50 = vld [vmem:[#allocation2 + $0x68] sm:$0xff]
  %v51 = vld [vmem:[#allocation2 + $0x70] sm:$0xff]
  %v52 = vld [vmem:[#allocation2 + $0x78] sm:$0xff]
  %v53 = vld [vmem:[%s0] sm:$0xf]
  %v54 = vld [vmem:[%s0 + $0x4] sm:$0xf]
  %v55 = vld [vmem:[%s0 + $0x8] sm:$0xf]
  %v56 = vld [vmem:[%s0 + $0xc] sm:$0xf]
  %v57 = vld [vmem:[%s0 + $0x10] sm:$0xf]
  %v58 = vld [vmem:[%s0 + $0x14] sm:$0xf]
  %v59 = vld [vmem:[%s0 + $0x18] sm:$0xf]
  %v60 = vld [vmem:[%s0 + $0x1c] sm:$0xf]
  %v61 = vld [vmem:[%s0 + $0x20] sm:$0xf]
  %v62 = vld [vmem:[%s0 + $0x24] sm:$0xf]
  %v63 = vld [vmem:[%s0 + $0x28] sm:$0xf]
  %v64 = vld [vmem:[%s0 + $0x2c] sm:$0xf]
  %v65 = vld [vmem:[%s0 + $0x30] sm:$0xf]
  %v66 = vld [vmem:[%s0 + $0x34] sm:$0xf]
  %v67 = vld [vmem:[%s0 + $0x38] sm:$0xf]
  %v68 = vld [vmem:[%s0 + $0x3c] sm:$0xf]
  %v69 = vld [vmem:[%s1] sm:$0xf]
  %v70 = vld [vmem:[%s1 + $0x4] sm:$0xf]
  %v71 = vld [vmem:[%s1 + $0x8] sm:$0xf]
  %v72 = vld [vmem:[%s1 + $0xc] sm:$0xf]
  %v73 = vld [vmem:[%s1 + $0x10] sm:$0xf]
  %v74 = vld [vmem:[%s1 + $0x14] sm:$0xf]
  %v75 = vld [vmem:[%s1 + $0x18] sm:$0xf]
  %v76 = vld [vmem:[%s1 + $0x1c] sm:$0xf]
  %v77 = vld [vmem:[%s1 + $0x20] sm:$0xf]
  %v78 = vld [vmem:[%s1 + $0x24] sm:$0xf]
  %v79 = vld [vmem:[%s1 + $0x28] sm:$0xf]
  %v80 = vld [vmem:[%s1 + $0x2c] sm:$0xf]
  %v81 = vld [vmem:[%s1 + $0x30] sm:$0xf]
  %v82 = vld [vmem:[%s1 + $0x34] sm:$0xf]
  %v83 = vld [vmem:[%s1 + $0x38] sm:$0xf]
  %v84 = vld [vmem:[%s1 + $0x3c] sm:$0xf]
  %v101 = vunpack.c.l.b16 %v53
  %v102 = vunpack.c.l.b16 %v54
  %v103 = vunpack.c.l.b16 %v55
  %v104 = vunpack.c.l.b16 %v56
  %v105 = vunpack.c.l.b16 %v57
  %v106 = vunpack.c.l.b16 %v58
  %v107 = vunpack.c.l.b16 %v59
  %v108 = vunpack.c.l.b16 %v60
  %v109 = vunpack.c.l.b16 %v61
  %v110 = vunpack.c.l.b16 %v62
  %v111 = vunpack.c.l.b16 %v63
  %v112 = vunpack.c.l.b16 %v64
  %v113 = vunpack.c.l.b16 %v65
  %v114 = vunpack.c.l.b16 %v66
  %v115 = vunpack.c.l.b16 %v67
  %v116 = vunpack.c.l.b16 %v68
  %v117 = vpack.c.b16 %v102, %v101
  %v118 = vpack.c.b16 %v104, %v103
  %v119 = vpack.c.b16 %v106, %v105
  %v120 = vpack.c.b16 %v108, %v107
  %v121 = vpack.c.b16 %v110, %v109
  %v122 = vpack.c.b16 %v112, %v111
  %v123 = vpack.c.b16 %v114, %v113
  %v124 = vpack.c.b16 %v116, %v115
  %v149 = vunpack.c.l.b16 %v69
  %v150 = vunpack.c.l.b16 %v70
  %v151 = vunpack.c.l.b16 %v71
  %v152 = vunpack.c.l.b16 %v72
  %v153 = vunpack.c.l.b16 %v73
  %v154 = vunpack.c.l.b16 %v74
  %v155 = vunpack.c.l.b16 %v75
  %v156 = vunpack.c.l.b16 %v76
  %v157 = vunpack.c.l.b16 %v77
  %v158 = vunpack.c.l.b16 %v78
  %v159 = vunpack.c.l.b16 %v79
  %v160 = vunpack.c.l.b16 %v80
  %v161 = vunpack.c.l.b16 %v81
  %v162 = vunpack.c.l.b16 %v82
  %v163 = vunpack.c.l.b16 %v83
  %v164 = vunpack.c.l.b16 %v84
  %v165 = vpack.c.b16 %v150, %v149
  %v166 = vpack.c.b16 %v152, %v151
  %v167 = vpack.c.b16 %v154, %v153
  %v168 = vpack.c.b16 %v156, %v155
  %v169 = vpack.c.b16 %v158, %v157
  %v170 = vpack.c.b16 %v160, %v159
  %v171 = vpack.c.b16 %v162, %v161
  %v172 = vpack.c.b16 %v164, %v163
  %181 = vmatpush.bf16.msra.mxu0 %v172
  %182 = vmatpush.bf16.msra.mxu0 %v171
  %183 = vmatpush.bf16.msra.mxu0 %v170
  %184 = vmatpush.bf16.msra.mxu0 %v169
  %185 = vmatpush.bf16.msra.mxu0 %v168
  %186 = vmatpush.bf16.msra.mxu0 %v167
  %187 = vmatpush.bf16.msra.mxu0 %v166
  %188 = vmatpush.bf16.msra.mxu0 %v165
  %189 = vmatmul.bf16.gmra.mxu0 %v117
  %v190 = vpop.f32.mrf.mxu0
  %v191 = vadd.f32 0.0, %v190
  %v192 = vpop.f32.mrf.mxu0
  %v193 = vadd.f32 0.0, %v192
  %194 = vmatmul.bf16.gmra.mxu0 %v118
  %v195 = vpop.f32.mrf.mxu0
  %v196 = vadd.f32 0.0, %v195
  %v197 = vpop.f32.mrf.mxu0
  %v198 = vadd.f32 0.0, %v197
  %199 = vmatmul.bf16.gmra.mxu0 %v119
  %v200 = vpop.f32.mrf.mxu0
  %v201 = vadd.f32 0.0, %v200
  %v202 = vpop.f32.mrf.mxu0
  %v203 = vadd.f32 0.0, %v202
  %204 = vmatmul.bf16.gmra.mxu0 %v120
  %v205 = vpop.f32.mrf.mxu0
  %v206 = vadd.f32 0.0, %v205
  %v207 = vpop.f32.mrf.mxu0
  %v208 = vadd.f32 0.0, %v207
  %209 = vmatmul.bf16.gmra.mxu0 %v121
  %v210 = vpop.f32.mrf.mxu0
  %v211 = vadd.f32 0.0, %v210
  %v212 = vpop.f32.mrf.mxu0
  %v213 = vadd.f32 0.0, %v212
  %214 = vmatmul.bf16.gmra.mxu0 %v122
  %v215 = vpop.f32.mrf.mxu0
  %v216 = vadd.f32 0.0, %v215
  %v217 = vpop.f32.mrf.mxu0
  %v218 = vadd.f32 0.0, %v217
  %219 = vmatmul.bf16.gmra.mxu0 %v123
  %v220 = vpop.f32.mrf.mxu0
  %v221 = vadd.f32 0.0, %v220
  %v222 = vpop.f32.mrf.mxu0
  %v223 = vadd.f32 0.0, %v222
  %224 = vmatmul.bf16.gmra.mxu0 %v124
  %v225 = vpop.f32.mrf.mxu0
  %v226 = vadd.f32 0.0, %v225
  %v227 = vpop.f32.mrf.mxu0
  %v228 = vadd.f32 0.0, %v227
  %229 = vdwg.mxu0
  %v230 = vadd.f32 %v37, %v191
  %v231 = vadd.f32 %v38, %v193
  %v232 = vadd.f32 %v39, %v196
  %v233 = vadd.f32 %v40, %v198
  %v234 = vadd.f32 %v41, %v201
  %v235 = vadd.f32 %v42, %v203
  %v236 = vadd.f32 %v43, %v206
  %v237 = vadd.f32 %v44, %v208
  %v238 = vadd.f32 %v45, %v211
  %v239 = vadd.f32 %v46, %v213
  %v240 = vadd.f32 %v47, %v216
  %v241 = vadd.f32 %v48, %v218
  %v242 = vadd.f32 %v49, %v221
  %v243 = vadd.f32 %v50, %v223
  %v244 = vadd.f32 %v51, %v226
  %v245 = vadd.f32 %v52, %v228
  %246 = vst [vmem:[#allocation2] sm:$0xff] %v230
  %247 = vst [vmem:[#allocation2 + $0x8] sm:$0xff] %v231
  %248 = vst [vmem:[#allocation2 + $0x10] sm:$0xff] %v232
  %249 = vst [vmem:[#allocation2 + $0x18] sm:$0xff] %v233
  %250 = vst [vmem:[#allocation2 + $0x20] sm:$0xff] %v234
  %251 = vst [vmem:[#allocation2 + $0x28] sm:$0xff] %v235
  %252 = vst [vmem:[#allocation2 + $0x30] sm:$0xff] %v236
  %253 = vst [vmem:[#allocation2 + $0x38] sm:$0xff] %v237
  %254 = vst [vmem:[#allocation2 + $0x40] sm:$0xff] %v238
  %255 = vst [vmem:[#allocation2 + $0x48] sm:$0xff] %v239
  %256 = vst [vmem:[#allocation2 + $0x50] sm:$0xff] %v240
  %257 = vst [vmem:[#allocation2 + $0x58] sm:$0xff] %v241
  %258 = vst [vmem:[#allocation2 + $0x60] sm:$0xff] %v242
  %259 = vst [vmem:[#allocation2 + $0x68] sm:$0xff] %v243
  %260 = vst [vmem:[#allocation2 + $0x70] sm:$0xff] %v244
  %261 = vst [vmem:[#allocation2 + $0x78] sm:$0xff] %v245
  // Predicated region
  $region22: #{_lambda_.11} parent=0 // pred_check
    %p262 = pneg %p17
  $region23: #{_lambda_.11} parent=0 // pred_check_branch
    %264 = sbr.rel (%p262) target = $region25
  $region24: #{_lambda_.11} parent=0 // pred_region
    %v265 = vld [vmem:[#allocation2] sm:$0xff]
    %v266 = vld [vmem:[#allocation2 + $0x8] sm:$0xff]
    %v267 = vld [vmem:[#allocation2 + $0x10] sm:$0xff]
    %v268 = vld [vmem:[#allocation2 + $0x18] sm:$0xff]
    %v269 = vld [vmem:[#allocation2 + $0x20] sm:$0xff]
    %v270 = vld [vmem:[#allocation2 + $0x28] sm:$0xff]
    %v271 = vld [vmem:[#allocation2 + $0x30] sm:$0xff]
    %v272 = vld [vmem:[#allocation2 + $0x38] sm:$0xff]
    %v273 = vld [vmem:[#allocation2 + $0x40] sm:$0xff]
    %v274 = vld [vmem:[#allocation2 + $0x48] sm:$0xff]
    %v275 = vld [vmem:[#allocation2 + $0x50] sm:$0xff]
    %v276 = vld [vmem:[#allocation2 + $0x58] sm:$0xff]
    %v277 = vld [vmem:[#allocation2 + $0x60] sm:$0xff]
    %v278 = vld [vmem:[#allocation2 + $0x68] sm:$0xff]
    %v279 = vld [vmem:[#allocation2 + $0x70] sm:$0xff]
    %v280 = vld [vmem:[#allocation2 + $0x78] sm:$0xff]
    %v281 = vld [vmem:[%s2] sm:$0x1]
    %v283 = vperm.slane %v281, 0
    %v285 = vmul.f32 %v265, %v283
    %v286 = vmul.f32 %v266, %v283
    %v287 = vmul.f32 %v267, %v283
    %v288 = vmul.f32 %v268, %v283
    %v289 = vmul.f32 %v269, %v283
    %v290 = vmul.f32 %v270, %v283
    %v291 = vmul.f32 %v271, %v283
    %v292 = vmul.f32 %v272, %v283
    %v293 = vmul.f32 %v273, %v283
    %v294 = vmul.f32 %v274, %v283
    %v295 = vmul.f32 %v275, %v283
    %v296 = vmul.f32 %v276, %v283
    %v297 = vmul.f32 %v277, %v283
    %v298 = vmul.f32 %v278, %v283
    %v299 = vmul.f32 %v279, %v283
    %v300 = vmul.f32 %v280, %v283
    %v301 = vld [vmem:[%s3] sm:$0x1]
    %v303 = vperm.slane %v301, 0
    %v305 = vadd.f32 %v285, %v303
    %v306 = vadd.f32 %v286, %v303
    %v307 = vadd.f32 %v287, %v303
    %v308 = vadd.f32 %v288, %v303
    %v309 = vadd.f32 %v289, %v303
    %v310 = vadd.f32 %v290, %v303
    %v311 = vadd.f32 %v291, %v303
    %v312 = vadd.f32 %v292, %v303
    %v313 = vadd.f32 %v293, %v303
    %v314 = vadd.f32 %v294, %v303
    %v315 = vadd.f32 %v295, %v303
    %v316 = vadd.f32 %v296, %v303
    %v317 = vadd.f32 %v297, %v303
    %v318 = vadd.f32 %v298, %v303
    %v319 = vadd.f32 %v299, %v303
    %v320 = vadd.f32 %v300, %v303
    %v321 = vmax.f32 %v305, 0.0
    %v322 = vmax.f32 %v306, 0.0
    %v323 = vmax.f32 %v307, 0.0
    %v324 = vmax.f32 %v308, 0.0
    %v325 = vmax.f32 %v309, 0.0
    %v326 = vmax.f32 %v310, 0.0
    %v327 = vmax.f32 %v311, 0.0
    %v328 = vmax.f32 %v312, 0.0
    %v329 = vmax.f32 %v313, 0.0
    %v330 = vmax.f32 %v314, 0.0
    %v331 = vmax.f32 %v315, 0.0
    %v332 = vmax.f32 %v316, 0.0
    %v333 = vmax.f32 %v317, 0.0
    %v334 = vmax.f32 %v318, 0.0
    %v335 = vmax.f32 %v319, 0.0
    %v336 = vmax.f32 %v320, 0.0
    %v337 = vpack.c.bf16 %v321, %v321
    %v338 = vpack.c.bf16 %v322, %v322
    %v339 = vpack.c.bf16 %v323, %v323
    %v340 = vpack.c.bf16 %v324, %v324
    %v341 = vpack.c.bf16 %v325, %v325
    %v342 = vpack.c.bf16 %v326, %v326
    %v343 = vpack.c.bf16 %v327, %v327
    %v344 = vpack.c.bf16 %v328, %v328
    %v345 = vpack.c.bf16 %v329, %v329
    %v346 = vpack.c.bf16 %v330, %v330
    %v347 = vpack.c.bf16 %v331, %v331
    %v348 = vpack.c.bf16 %v332, %v332
    %v349 = vpack.c.bf16 %v333, %v333
    %v350 = vpack.c.bf16 %v334, %v334
    %v351 = vpack.c.bf16 %v335, %v335
    %v352 = vpack.c.bf16 %v336, %v336
    %353 = vst [vmem:[%s4] sm:$0xf] %v337
    %354 = vst [vmem:[%s4 + $0x4] sm:$0xf] %v338
    %355 = vst [vmem:[%s4 + $0x8] sm:$0xf] %v339
    %356 = vst [vmem:[%s4 + $0xc] sm:$0xf] %v340
    %357 = vst [vmem:[%s4 + $0x10] sm:$0xf] %v341
    %358 = vst [vmem:[%s4 + $0x14] sm:$0xf] %v342
    %359 = vst [vmem:[%s4 + $0x18] sm:$0xf] %v343
    %360 = vst [vmem:[%s4 + $0x1c] sm:$0xf] %v344
    %361 = vst [vmem:[%s4 + $0x20] sm:$0xf] %v345
    %362 = vst [vmem:[%s4 + $0x24] sm:$0xf] %v346
    %363 = vst [vmem:[%s4 + $0x28] sm:$0xf] %v347
    %364 = vst [vmem:[%s4 + $0x2c] sm:$0xf] %v348
    %365 = vst [vmem:[%s4 + $0x30] sm:$0xf] %v349
    %366 = vst [vmem:[%s4 + $0x34] sm:$0xf] %v350
    %367 = vst [vmem:[%s4 + $0x38] sm:$0xf] %v351
    %368 = vst [vmem:[%s4 + $0x3c] sm:$0xf] %v352
  $region25: #{_lambda_.11} parent=0 // pred_fallthru
    _
  // Predicated region
  $region26: #{_lambda_.11} parent=0 // pred_check
    _
  $region27: #{_lambda_.11} parent=0 // pred_check_branch
    %370 = sbr.rel (0) target = $region29
  $region28: #{_lambda_.11} parent=0 // pred_region
    _
  $region29: #{_lambda_.11} parent=0 // pred_fallthru
    _
  // Predicated region
  $region30: #{_lambda_.11} parent=0 // pred_check
    _
  $region31: #{_lambda_.11} parent=0 // pred_check_branch
    %372 = sbr.rel (0) target = $region33
  $region32: #{_lambda_.11} parent=0 // pred_region
    _
  $region33: #{_lambda_.11} parent=0 // pred_fallthru
    _

// kernel: _lambda_.10
$region0: #{_lambda_.10}
  #allocation0 [shape = 'u32[]', space=smem, size = 0x4, offset = 0x4, fixed_abs, tag = 'smem constant byte address 0x4 - core index']
  #allocation1 [shape = 'u32[72,128]{1,0:T(1,128)}', space=vmem, size = 0x9000, scoped, tag = 'internal scratch']
  #allocation2 [shape = 'f32[128,128]{1,0:T(8,128)}', space=vmem, size = 0x10000, scoped, tag = 'scratch operand']
  %s0 = inlined_call_operand.vmem [shape: bf16[128,128], index: 0, kind: input, shape index: {}]
  %s1 = inlined_call_operand.vmem [shape: bf16[128,128], index: 1, kind: input, shape index: {}]
  %s2 = inlined_call_operand.vmem [shape: f32[1,128], index: 2, kind: input, shape index: {}]
  %s3 = inlined_call_operand.vmem [shape: f32[1,128], index: 3, kind: input, shape index: {}]
  %s4 = inlined_call_operand.vmem [shape: f32[128,128], index: 4, kind: input, shape index: {}]
  %s5 = inlined_call_operand.vmem [shape: f32[128,128], index: 5, kind: output, shape index: {}]
  %s6 = sld [smem:[#allocation0]]
  $region38: #{_lambda_.10} parent=0
    _
  %s8 = ssub.s32 1, %s6
  %s9 = scalar_select 0, %s8, %s6
  // Predicated region
  $region2: #{_lambda_.10} parent=0 // pred_check
    _
  $region3: #{_lambda_.10} parent=0 // pred_check_branch
    %11 = sbr.rel (0) target = $region5
  $region4: #{_lambda_.10} parent=0 // pred_region
    _
  $region5: #{_lambda_.10} parent=0 // pred_fallthru
    _
  // Predicated region
  $region6: #{_lambda_.10} parent=0 // pred_check
    _
  $region7: #{_lambda_.10} parent=0 // pred_check_branch
    %13 = sbr.rel (0) target = $region9
  $region8: #{_lambda_.10} parent=0 // pred_region
    _
  $region9: #{_lambda_.10} parent=0 // pred_fallthru
    _
  // Predicated region
  $region10: #{_lambda_.10} parent=0 // pred_check
    _
  $region11: #{_lambda_.10} parent=0 // pred_check_branch
    %15 = sbr.rel (0) target = $region13
  $region12: #{_lambda_.10} parent=0 // pred_region
    _
  $region13: #{_lambda_.10} parent=0 // pred_fallthru
    _
  // Predicated region
  $region14: #{_lambda_.10} parent=0 // pred_check
    _
  $region15: #{_lambda_.10} parent=0 // pred_check_branch
    %17 = sbr.rel (0) target = $region17
  $region16: #{_lambda_.10} parent=0 // pred_region
    _
  $region17: #{_lambda_.10} parent=0 // pred_fallthru
    _
  // Predicated region
  $region18: #{_lambda_.10} parent=0 // pred_check
    _
  $region19: #{_lambda_.10} parent=0 // pred_check_branch
    %19 = sbr.rel (0) target = $region21
  $region20: #{_lambda_.10} parent=0 // pred_region
    _
  $region21: #{_lambda_.10} parent=0 // pred_fallthru
    _
  %p20 = scmp.eq.s32.totalorder 0, 0
  // Predicated region
  $region22: #{_lambda_.10} parent=0 // pred_check
    %p21 = pneg %p20
  $region23: #{_lambda_.10} parent=0 // pred_check_branch
    %23 = sbr.rel (%p21) target = $region25
  $region24: #{_lambda_.10} parent=0 // pred_region
    %24 = vst [vmem:[#allocation2] sm:$0xff] 0.0
    %25 = vst [vmem:[#allocation2 + $0x8] sm:$0xff] 0.0
    %26 = vst [vmem:[#allocation2 + $0x10] sm:$0xff] 0.0
    %27 = vst [vmem:[#allocation2 + $0x18] sm:$0xff] 0.0
    %28 = vst [vmem:[#allocation2 + $0x20] sm:$0xff] 0.0
    %29 = vst [vmem:[#allocation2 + $0x28] sm:$0xff] 0.0
    %30 = vst [vmem:[#allocation2 + $0x30] sm:$0xff] 0.0
    %31 = vst [vmem:[#allocation2 + $0x38] sm:$0xff] 0.0
    %32 = vst [vmem:[#allocation2 + $0x40] sm:$0xff] 0.0
    %33 = vst [vmem:[#allocation2 + $0x48] sm:$0xff] 0.0
    %34 = vst [vmem:[#allocation2 + $0x50] sm:$0xff] 0.0
    %35 = vst [vmem:[#allocation2 + $0x58] sm:$0xff] 0.0
    %36 = vst [vmem:[#allocation2 + $0x60] sm:$0xff] 0.0
    %37 = vst [vmem:[#allocation2 + $0x68] sm:$0xff] 0.0
    %38 = vst [vmem:[#allocation2 + $0x70] sm:$0xff] 0.0
    %39 = vst [vmem:[#allocation2 + $0x78] sm:$0xff] 0.0
  $region25: #{_lambda_.10} parent=0 // pred_fallthru
    _
  %v40 = vld [vmem:[#allocation2] sm:$0xff]
  %v41 = vld [vmem:[#allocation2 + $0x8] sm:$0xff]
  %v42 = vld [vmem:[#allocation2 + $0x10] sm:$0xff]
  %v43 = vld [vmem:[#allocation2 + $0x18] sm:$0xff]
  %v44 = vld [vmem:[#allocation2 + $0x20] sm:$0xff]
  %v45 = vld [vmem:[#allocation2 + $0x28] sm:$0xff]
  %v46 = vld [vmem:[#allocation2 + $0x30] sm:$0xff]
  %v47 = vld [vmem:[#allocation2 + $0x38] sm:$0xff]
  %v48 = vld [vmem:[#allocation2 + $0x40] sm:$0xff]
  %v49 = vld [vmem:[#allocation2 + $0x48] sm:$0xff]
  %v50 = vld [vmem:[#allocation2 + $0x50] sm:$0xff]
  %v51 = vld [vmem:[#allocation2 + $0x58] sm:$0xff]
  %v52 = vld [vmem:[#allocation2 + $0x60] sm:$0xff]
  %v53 = vld [vmem:[#allocation2 + $0x68] sm:$0xff]
  %v54 = vld [vmem:[#allocation2 + $0x70] sm:$0xff]
  %v55 = vld [vmem:[#allocation2 + $0x78] sm:$0xff]
  %v56 = vld [vmem:[%s0] sm:$0xf]
  %v57 = vld [vmem:[%s0 + $0x4] sm:$0xf]
  %v58 = vld [vmem:[%s0 + $0x8] sm:$0xf]
  %v59 = vld [vmem:[%s0 + $0xc] sm:$0xf]
  %v60 = vld [vmem:[%s0 + $0x10] sm:$0xf]
  %v61 = vld [vmem:[%s0 + $0x14] sm:$0xf]
  %v62 = vld [vmem:[%s0 + $0x18] sm:$0xf]
  %v63 = vld [vmem:[%s0 + $0x1c] sm:$0xf]
  %v64 = vld [vmem:[%s0 + $0x20] sm:$0xf]
  %v65 = vld [vmem:[%s0 + $0x24] sm:$0xf]
  %v66 = vld [vmem:[%s0 + $0x28] sm:$0xf]
  %v67 = vld [vmem:[%s0 + $0x2c] sm:$0xf]
  %v68 = vld [vmem:[%s0 + $0x30] sm:$0xf]
  %v69 = vld [vmem:[%s0 + $0x34] sm:$0xf]
  %v70 = vld [vmem:[%s0 + $0x38] sm:$0xf]
  %v71 = vld [vmem:[%s0 + $0x3c] sm:$0xf]
  %v72 = vld [vmem:[%s1] sm:$0xf]
  %v73 = vld [vmem:[%s1 + $0x4] sm:$0xf]
  %v74 = vld [vmem:[%s1 + $0x8] sm:$0xf]
  %v75 = vld [vmem:[%s1 + $0xc] sm:$0xf]
  %v76 = vld [vmem:[%s1 + $0x10] sm:$0xf]
  %v77 = vld [vmem:[%s1 + $0x14] sm:$0xf]
  %v78 = vld [vmem:[%s1 + $0x18] sm:$0xf]
  %v79 = vld [vmem:[%s1 + $0x1c] sm:$0xf]
  %v80 = vld [vmem:[%s1 + $0x20] sm:$0xf]
  %v81 = vld [vmem:[%s1 + $0x24] sm:$0xf]
  %v82 = vld [vmem:[%s1 + $0x28] sm:$0xf]
  %v83 = vld [vmem:[%s1 + $0x2c] sm:$0xf]
  %v84 = vld [vmem:[%s1 + $0x30] sm:$0xf]
  %v85 = vld [vmem:[%s1 + $0x34] sm:$0xf]
  %v86 = vld [vmem:[%s1 + $0x38] sm:$0xf]
  %v87 = vld [vmem:[%s1 + $0x3c] sm:$0xf]
  %v104 = vunpack.c.l.b16 %v56
  %v105 = vunpack.c.l.b16 %v57
  %v106 = vunpack.c.l.b16 %v58
  %v107 = vunpack.c.l.b16 %v59
  %v108 = vunpack.c.l.b16 %v60
  %v109 = vunpack.c.l.b16 %v61
  %v110 = vunpack.c.l.b16 %v62
  %v111 = vunpack.c.l.b16 %v63
  %v112 = vunpack.c.l.b16 %v64
  %v113 = vunpack.c.l.b16 %v65
  %v114 = vunpack.c.l.b16 %v66
  %v115 = vunpack.c.l.b16 %v67
  %v116 = vunpack.c.l.b16 %v68
  %v117 = vunpack.c.l.b16 %v69
  %v118 = vunpack.c.l.b16 %v70
  %v119 = vunpack.c.l.b16 %v71
  %v120 = vpack.c.b16 %v105, %v104
  %v121 = vpack.c.b16 %v107, %v106
  %v122 = vpack.c.b16 %v109, %v108
  %v123 = vpack.c.b16 %v111, %v110
  %v124 = vpack.c.b16 %v113, %v112
  %v125 = vpack.c.b16 %v115, %v114
  %v126 = vpack.c.b16 %v117, %v116
  %v127 = vpack.c.b16 %v119, %v118
  %v152 = vunpack.c.l.b16 %v72
  %v153 = vunpack.c.l.b16 %v73
  %v154 = vunpack.c.l.b16 %v74
  %v155 = vunpack.c.l.b16 %v75
  %v156 = vunpack.c.l.b16 %v76
  %v157 = vunpack.c.l.b16 %v77
  %v158 = vunpack.c.l.b16 %v78
  %v159 = vunpack.c.l.b16 %v79
  %v160 = vunpack.c.l.b16 %v80
  %v161 = vunpack.c.l.b16 %v81
  %v162 = vunpack.c.l.b16 %v82
  %v163 = vunpack.c.l.b16 %v83
  %v164 = vunpack.c.l.b16 %v84
  %v165 = vunpack.c.l.b16 %v85
  %v166 = vunpack.c.l.b16 %v86
  %v167 = vunpack.c.l.b16 %v87
  %v168 = vpack.c.b16 %v153, %v152
  %v169 = vpack.c.b16 %v155, %v154
  %v170 = vpack.c.b16 %v157, %v156
  %v171 = vpack.c.b16 %v159, %v158
  %v172 = vpack.c.b16 %v161, %v160
  %v173 = vpack.c.b16 %v163, %v162
  %v174 = vpack.c.b16 %v165, %v164
  %v175 = vpack.c.b16 %v167, %v166
  %184 = vmatpush.bf16.msra.mxu0 %v175
  %185 = vmatpush.bf16.msra.mxu0 %v174
  %186 = vmatpush.bf16.msra.mxu0 %v173
  %187 = vmatpush.bf16.msra.mxu0 %v172
  %188 = vmatpush.bf16.msra.mxu0 %v171
  %189 = vmatpush.bf16.msra.mxu0 %v170
  %190 = vmatpush.bf16.msra.mxu0 %v169
  %191 = vmatpush.bf16.msra.mxu0 %v168
  %192 = vmatmul.bf16.gmra.mxu0 %v120
  %v193 = vpop.f32.mrf.mxu0
  %v194 = vadd.f32 0.0, %v193
  %v195 = vpop.f32.mrf.mxu0
  %v196 = vadd.f32 0.0, %v195
  %197 = vmatmul.bf16.gmra.mxu0 %v121
  %v198 = vpop.f32.mrf.mxu0
  %v199 = vadd.f32 0.0, %v198
  %v200 = vpop.f32.mrf.mxu0
  %v201 = vadd.f32 0.0, %v200
  %202 = vmatmul.bf16.gmra.mxu0 %v122
  %v203 = vpop.f32.mrf.mxu0
  %v204 = vadd.f32 0.0, %v203
  %v205 = vpop.f32.mrf.mxu0
  %v206 = vadd.f32 0.0, %v205
  %207 = vmatmul.bf16.gmra.mxu0 %v123
  %v208 = vpop.f32.mrf.mxu0
  %v209 = vadd.f32 0.0, %v208
  %v210 = vpop.f32.mrf.mxu0
  %v211 = vadd.f32 0.0, %v210
  %212 = vmatmul.bf16.gmra.mxu0 %v124
  %v213 = vpop.f32.mrf.mxu0
  %v214 = vadd.f32 0.0, %v213
  %v215 = vpop.f32.mrf.mxu0
  %v216 = vadd.f32 0.0, %v215
  %217 = vmatmul.bf16.gmra.mxu0 %v125
  %v218 = vpop.f32.mrf.mxu0
  %v219 = vadd.f32 0.0, %v218
  %v220 = vpop.f32.mrf.mxu0
  %v221 = vadd.f32 0.0, %v220
  %222 = vmatmul.bf16.gmra.mxu0 %v126
  %v223 = vpop.f32.mrf.mxu0
  %v224 = vadd.f32 0.0, %v223
  %v225 = vpop.f32.mrf.mxu0
  %v226 = vadd.f32 0.0, %v225
  %227 = vmatmul.bf16.gmra.mxu0 %v127
  %v228 = vpop.f32.mrf.mxu0
  %v229 = vadd.f32 0.0, %v228
  %v230 = vpop.f32.mrf.mxu0
  %v231 = vadd.f32 0.0, %v230
  %232 = vdwg.mxu0
  %v233 = vadd.f32 %v40, %v194
  %v234 = vadd.f32 %v41, %v196
  %v235 = vadd.f32 %v42, %v199
  %v236 = vadd.f32 %v43, %v201
  %v237 = vadd.f32 %v44, %v204
  %v238 = vadd.f32 %v45, %v206
  %v239 = vadd.f32 %v46, %v209
  %v240 = vadd.f32 %v47, %v211
  %v241 = vadd.f32 %v48, %v214
  %v242 = vadd.f32 %v49, %v216
  %v243 = vadd.f32 %v50, %v219
  %v244 = vadd.f32 %v51, %v221
  %v245 = vadd.f32 %v52, %v224
  %v246 = vadd.f32 %v53, %v226
  %v247 = vadd.f32 %v54, %v229
  %v248 = vadd.f32 %v55, %v231
  %249 = vst [vmem:[#allocation2] sm:$0xff] %v233
  %250 = vst [vmem:[#allocation2 + $0x8] sm:$0xff] %v234
  %251 = vst [vmem:[#allocation2 + $0x10] sm:$0xff] %v235
  %252 = vst [vmem:[#allocation2 + $0x18] sm:$0xff] %v236
  %253 = vst [vmem:[#allocation2 + $0x20] sm:$0xff] %v237
  %254 = vst [vmem:[#allocation2 + $0x28] sm:$0xff] %v238
  %255 = vst [vmem:[#allocation2 + $0x30] sm:$0xff] %v239
  %256 = vst [vmem:[#allocation2 + $0x38] sm:$0xff] %v240
  %257 = vst [vmem:[#allocation2 + $0x40] sm:$0xff] %v241
  %258 = vst [vmem:[#allocation2 + $0x48] sm:$0xff] %v242
  %259 = vst [vmem:[#allocation2 + $0x50] sm:$0xff] %v243
  %260 = vst [vmem:[#allocation2 + $0x58] sm:$0xff] %v244
  %261 = vst [vmem:[#allocation2 + $0x60] sm:$0xff] %v245
  %262 = vst [vmem:[#allocation2 + $0x68] sm:$0xff] %v246
  %263 = vst [vmem:[#allocation2 + $0x70] sm:$0xff] %v247
  %264 = vst [vmem:[#allocation2 + $0x78] sm:$0xff] %v248
  // Predicated region
  $region26: #{_lambda_.10} parent=0 // pred_check
    %p265 = pneg %p20
  $region27: #{_lambda_.10} parent=0 // pred_check_branch
    %267 = sbr.rel (%p265) target = $region29
  $region28: #{_lambda_.10} parent=0 // pred_region
    %v268 = vld [vmem:[#allocation2] sm:$0xff]
    %v269 = vld [vmem:[#allocation2 + $0x8] sm:$0xff]
    %v270 = vld [vmem:[#allocation2 + $0x10] sm:$0xff]
    %v271 = vld [vmem:[#allocation2 + $0x18] sm:$0xff]
    %v272 = vld [vmem:[#allocation2 + $0x20] sm:$0xff]
    %v273 = vld [vmem:[#allocation2 + $0x28] sm:$0xff]
    %v274 = vld [vmem:[#allocation2 + $0x30] sm:$0xff]
    %v275 = vld [vmem:[#allocation2 + $0x38] sm:$0xff]
    %v276 = vld [vmem:[#allocation2 + $0x40] sm:$0xff]
    %v277 = vld [vmem:[#allocation2 + $0x48] sm:$0xff]
    %v278 = vld [vmem:[#allocation2 + $0x50] sm:$0xff]
    %v279 = vld [vmem:[#allocation2 + $0x58] sm:$0xff]
    %v280 = vld [vmem:[#allocation2 + $0x60] sm:$0xff]
    %v281 = vld [vmem:[#allocation2 + $0x68] sm:$0xff]
    %v282 = vld [vmem:[#allocation2 + $0x70] sm:$0xff]
    %v283 = vld [vmem:[#allocation2 + $0x78] sm:$0xff]
    %v284 = vld [vmem:[%s2] sm:$0x1]
    %v286 = vperm.slane %v284, 0
    %v288 = vmul.f32 %v268, %v286
    %v289 = vmul.f32 %v269, %v286
    %v290 = vmul.f32 %v270, %v286
    %v291 = vmul.f32 %v271, %v286
    %v292 = vmul.f32 %v272, %v286
    %v293 = vmul.f32 %v273, %v286
    %v294 = vmul.f32 %v274, %v286
    %v295 = vmul.f32 %v275, %v286
    %v296 = vmul.f32 %v276, %v286
    %v297 = vmul.f32 %v277, %v286
    %v298 = vmul.f32 %v278, %v286
    %v299 = vmul.f32 %v279, %v286
    %v300 = vmul.f32 %v280, %v286
    %v301 = vmul.f32 %v281, %v286
    %v302 = vmul.f32 %v282, %v286
    %v303 = vmul.f32 %v283, %v286
    %v304 = vld [vmem:[%s3] sm:$0x1]
    %v306 = vperm.slane %v304, 0
    %v308 = vadd.f32 %v288, %v306
    %v309 = vadd.f32 %v289, %v306
    %v310 = vadd.f32 %v290, %v306
    %v311 = vadd.f32 %v291, %v306
    %v312 = vadd.f32 %v292, %v306
    %v313 = vadd.f32 %v293, %v306
    %v314 = vadd.f32 %v294, %v306
    %v315 = vadd.f32 %v295, %v306
    %v316 = vadd.f32 %v296, %v306
    %v317 = vadd.f32 %v297, %v306
    %v318 = vadd.f32 %v298, %v306
    %v319 = vadd.f32 %v299, %v306
    %v320 = vadd.f32 %v300, %v306
    %v321 = vadd.f32 %v301, %v306
    %v322 = vadd.f32 %v302, %v306
    %v323 = vadd.f32 %v303, %v306
    %v324 = vld [vmem:[%s4] sm:$0xff]
    %v325 = vld [vmem:[%s4 + $0x8] sm:$0xff]
    %v326 = vld [vmem:[%s4 + $0x10] sm:$0xff]
    %v327 = vld [vmem:[%s4 + $0x18] sm:$0xff]
    %v328 = vld [vmem:[%s4 + $0x20] sm:$0xff]
    %v329 = vld [vmem:[%s4 + $0x28] sm:$0xff]
    %v330 = vld [vmem:[%s4 + $0x30] sm:$0xff]
    %v331 = vld [vmem:[%s4 + $0x38] sm:$0xff]
    %v332 = vld [vmem:[%s4 + $0x40] sm:$0xff]
    %v333 = vld [vmem:[%s4 + $0x48] sm:$0xff]
    %v334 = vld [vmem:[%s4 + $0x50] sm:$0xff]
    %v335 = vld [vmem:[%s4 + $0x58] sm:$0xff]
    %v336 = vld [vmem:[%s4 + $0x60] sm:$0xff]
    %v337 = vld [vmem:[%s4 + $0x68] sm:$0xff]
    %v338 = vld [vmem:[%s4 + $0x70] sm:$0xff]
    %v339 = vld [vmem:[%s4 + $0x78] sm:$0xff]
    %v340 = vadd.f32 %v308, %v324
    %v341 = vadd.f32 %v309, %v325
    %v342 = vadd.f32 %v310, %v326
    %v343 = vadd.f32 %v311, %v327
    %v344 = vadd.f32 %v312, %v328
    %v345 = vadd.f32 %v313, %v329
    %v346 = vadd.f32 %v314, %v330
    %v347 = vadd.f32 %v315, %v331
    %v348 = vadd.f32 %v316, %v332
    %v349 = vadd.f32 %v317, %v333
    %v350 = vadd.f32 %v318, %v334
    %v351 = vadd.f32 %v319, %v335
    %v352 = vadd.f32 %v320, %v336
    %v353 = vadd.f32 %v321, %v337
    %v354 = vadd.f32 %v322, %v338
    %v355 = vadd.f32 %v323, %v339
    %v356 = vmax.f32 %v340, 0.0
    %v357 = vmax.f32 %v341, 0.0
    %v358 = vmax.f32 %v342, 0.0
    %v359 = vmax.f32 %v343, 0.0
    %v360 = vmax.f32 %v344, 0.0
    %v361 = vmax.f32 %v345, 0.0
    %v362 = vmax.f32 %v346, 0.0
    %v363 = vmax.f32 %v347, 0.0
    %v364 = vmax.f32 %v348, 0.0
    %v365 = vmax.f32 %v349, 0.0
    %v366 = vmax.f32 %v350, 0.0
    %v367 = vmax.f32 %v351, 0.0
    %v368 = vmax.f32 %v352, 0.0
    %v369 = vmax.f32 %v353, 0.0
    %v370 = vmax.f32 %v354, 0.0
    %v371 = vmax.f32 %v355, 0.0
    %372 = vst [vmem:[%s5] sm:$0xff] %v356
    %373 = vst [vmem:[%s5 + $0x8] sm:$0xff] %v357
    %374 = vst [vmem:[%s5 + $0x10] sm:$0xff] %v358
    %375 = vst [vmem:[%s5 + $0x18] sm:$0xff] %v359
    %376 = vst [vmem:[%s5 + $0x20] sm:$0xff] %v360
    %377 = vst [vmem:[%s5 + $0x28] sm:$0xff] %v361
    %378 = vst [vmem:[%s5 + $0x30] sm:$0xff] %v362
    %379 = vst [vmem:[%s5 + $0x38] sm:$0xff] %v363
    %380 = vst [vmem:[%s5 + $0x40] sm:$0xff] %v364
    %381 = vst [vmem:[%s5 + $0x48] sm:$0xff] %v365
    %382 = vst [vmem:[%s5 + $0x50] sm:$0xff] %v366
    %383 = vst [vmem:[%s5 + $0x58] sm:$0xff] %v367
    %384 = vst [vmem:[%s5 + $0x60] sm:$0xff] %v368
    %385 = vst [vmem:[%s5 + $0x68] sm:$0xff] %v369
    %386 = vst [vmem:[%s5 + $0x70] sm:$0xff] %v370
    %387 = vst [vmem:[%s5 + $0x78] sm:$0xff] %v371
  $region29: #{_lambda_.10} parent=0 // pred_fallthru
    _
  // Predicated region
  $region30: #{_lambda_.10} parent=0 // pred_check
    _
  $region31: #{_lambda_.10} parent=0 // pred_check_branch
    %389 = sbr.rel (0) target = $region33
  $region32: #{_lambda_.10} parent=0 // pred_region
    _
  $region33: #{_lambda_.10} parent=0 // pred_fallthru
    _
  // Predicated region
  $region34: #{_lambda_.10} parent=0 // pred_check
    _
  $region35: #{_lambda_.10} parent=0 // pred_check_branch
    %391 = sbr.rel (0) target = $region37
  $region36: #{_lambda_.10} parent=0 // pred_region
    _
  $region37: #{_lambda_.10} parent=0 // pred_fallthru
    _

</llo_original>
